<compile_context>
chip_gen: v7x
topology: tpu7x:2x2x1
jax: 0.10.0
libtpu: 0.0.40
codegen_flags: <defaults>
</compile_context>

<pallas_src>
import numpy as np
import jax
import jax.numpy as jnp
from jax.experimental import pallas as pl
from jax.experimental.pallas import tpu as pltpu

# Sizes implied by the module: fc = Linear(32*16, n_classes) forces T = 64.
NB = 32          # total EEG windows per call
BT = 8           # windows per grid step (batch tile)
C = 8            # n_channels (EEG electrodes) for this instantiation
T = 64           # time samples
TP = 128         # time axis padded to one full lane tile
NCLS = 3         # n_classes
K1 = 64          # conv1 temporal kernel size
K3 = 16          # conv3 temporal kernel size
NF1 = 8          # conv1 output channels
NF2 = 16         # conv2 output channels
EPS = 1e-5       # BatchNorm eps (PyTorch default)

NROW2 = NF2 * BT          # rows of the conv2/conv3 stage, ordered (o, b), o-major
KDIM2 = NF1 * BT * C      # contraction rows of the conv2 matmul

# column layout of the packed per-row constant array `rowc`
COL_W30 = 0               # conv3 taps, even output channels   [0, 16)
COL_W31 = K3              # conv3 taps, odd output channels    [16, 32)
COL_T2 = 2 * K3           # BN2 shift (+conv2 bias)            col 32
COL_T30 = 33              # BN3 shift, even channels
COL_T31 = 34              # BN3 shift, odd channels
COL_BFC = 40              # fc bias (row 0 only)               [40, 43)


def _elu(x):
    # eval-mode ELU (alpha=1); clamp discarded branch so exp never overflows
    return jnp.where(x > 0.0, x, jnp.exp(jnp.minimum(x, 0.0)) - 1.0)


# ---------------------------------------------------------------------------
# Single fused kernel: conv1..softmax for one batch tile of BT windows
# ---------------------------------------------------------------------------
def eegnet_fused_kernel(
    xp_ref,     # (BT*C, 128) bf16   input tile, 'same'-padded time
    m1_ref,     # (128, 512)  bf16   conv1 Toeplitz, 2 channels / lane tile (BN1 folded)
    t1_ref,     # (1, 512)    f32    BN1 shift (+conv1 bias), packed like m1 columns
    w2_ref,     # (128, 512)  bf16   conv2 block-diag-over-window weights (BN2 folded)
    rowc_ref,   # (128, 128)  f32    packed per-row constants (taps/shifts/fc bias)
    wc_ref,     # (NCLS, 128, 256) f32  avgpool+flatten+fc lane maps (a30 | a31)
    out_ref,    # OUT (BT, NCLS)     softmax probabilities
):
    # ---- conv1 (1x64 'same') as one lane-dense bf16 Toeplitz matmul + BN1 + ELU.
    #      rows = (b, c); lane tile j holds channel 2j (lanes 0..63) and 2j+1 (64..127).
    a1 = jnp.dot(xp_ref[...], m1_ref[...],
                 preferred_element_type=jnp.float32)           # (BT*C, 512) f32
    a1 = _elu(a1 + t1_ref[...])

    # ---- regroup conv1 channels into sublanes: per packed tile, the even channel
    #      is the tile itself, the odd one is the tile rolled by 64 lanes; lanes
    #      >= T are don't-care and get masked after conv2.
    blocks = []
    for j in range(NF1 // 2):
        blk = a1[:, j * TP:(j + 1) * TP]                       # (BT*C, 128)
        blocks.append(blk)                                     # channel 2j
        blocks.append(pltpu.roll(blk, TP // 2, 1))             # channel 2j+1
    a1_stk = jnp.concatenate(blocks, axis=0).astype(jnp.bfloat16)   # (KDIM2, 128)

    # ---- conv2 ((C)x1, valid) + BN2 + ELU as one bf16 matmul; output rows (o, b).
    x2 = jnp.dot(w2_ref[...], a1_stk,
                 preferred_element_type=jnp.float32)           # (NROW2, 128)
    x2 = _elu(x2 + rowc_ref[:, COL_T2:COL_T2 + 1])

    # lanes t >= T carry conv-padding garbage; zero them so the circular lane
    # rolls below behave exactly like zero padding of the 'same' conv3.
    lane = jax.lax.broadcasted_iota(jnp.int32, x2.shape, 1)
    x2 = jnp.where(lane < T, x2, 0.0)

    # ---- conv3 (1x16 'same', groups=16 -> depthwise, 2 filters per group):
    #      16 lane rotations (XLU) + per-row FMA (VPU), f32 accumulation.
    w30 = rowc_ref[:, COL_W30:COL_W30 + K3]                    # (NROW2, 16)
    w31 = rowc_ref[:, COL_W31:COL_W31 + K3]
    acc0 = jnp.zeros_like(x2)
    acc1 = jnp.zeros_like(x2)
    for k in range(K3):
        s = (7 - k) % TP                     # y[t] needs x2[t + k - 7]
        xs = x2 if s == 0 else pltpu.roll(x2, s, 1)
        acc0 = acc0 + w30[:, k:k + 1] * xs                     # output channels 2o
        acc1 = acc1 + w31[:, k:k + 1] * xs                     # output channels 2o+1
    a30 = _elu(acc0 + rowc_ref[:, COL_T30:COL_T30 + 1])
    a31 = _elu(acc1 + rowc_ref[:, COL_T31:COL_T31 + 1])

    # ---- AvgPool2d((1,4)) + flatten + fc folded into per-class lane-weight maps
    #      (zero beyond t=T), lane reduce, then a log2 sublane-halving fold over
    #      the 16 conv2 channels (rows are o-major, window-minor) -> one row per
    #      window.  No eye/bsel operands and no MXU matmul in the epilogue.
    logit = []
    for n in range(NCLS):
        wcn = wc_ref[n]                                        # (NROW2, 256)
        v = a30 * wcn[:, :TP] + a31 * wcn[:, TP:]
        r = jnp.sum(v, axis=1, keepdims=True)                  # (NROW2, 1)
        rows = NROW2
        while rows > BT:
            half = rows // 2
            r = r[:half, :] + r[half:, :]                      # fold channel halves
            rows = half
        logit.append(r + rowc_ref[0:1, COL_BFC + n:COL_BFC + n + 1])   # (BT, 1)

    # ---- softmax across the NCLS per-class columns
    m = logit[0]
    for n in range(1, NCLS):
        m = jnp.maximum(m, logit[n])
    e = [jnp.exp(l - m) for l in logit]
    denom = e[0]
    for n in range(1, NCLS):
        denom = denom + e[n]
    for n in range(NCLS):
        out_ref[:, n:n + 1] = e[n] / denom


# ---------------------------------------------------------------------------
# Host-side (once per parameter set): fold BN / biases / avgpool / fc into the
# operands the fused kernel consumes.
# ---------------------------------------------------------------------------
def precompute_operands(params):
    f = lambda a: np.asarray(a, np.float32)
    w1, b1 = f(params["conv1_w"]), f(params["conv1_b"])          # (8,64), (8,)
    g1, be1, rm1, rv1 = map(f, params["bn1"])
    w2, b2 = f(params["conv2_w"]), f(params["conv2_b"])          # (16,8,C), (16,)
    g2, be2, rm2, rv2 = map(f, params["bn2"])
    w3, b3 = f(params["conv3_w"]), f(params["conv3_b"])          # (32,16), (32,)
    g3, be3, rm3, rv3 = map(f, params["bn3"])
    wfc, bfc = f(params["fc_w"]), f(params["fc_b"])              # (NCLS,512), (NCLS,)

    s1 = g1 / np.sqrt(rv1 + EPS); sh1 = (b1 - rm1) * s1 + be1
    s2 = g2 / np.sqrt(rv2 + EPS); sh2 = (b2 - rm2) * s2 + be2
    s3 = g3 / np.sqrt(rv3 + EPS); sh3 = (b3 - rm3) * s3 + be3

    # conv1 Toeplitz: tile j packs channels (2j, 2j+1); BN1 scale folded in.
    m1 = np.zeros((TP, (NF1 // 2) * TP), np.float32)
    t1 = np.zeros((1, (NF1 // 2) * TP), np.float32)
    for j in range(NF1 // 2):
        for t in range(T):
            m1[t:t + K1, j * TP + t] = w1[2 * j] * s1[2 * j]
            m1[t:t + K1, j * TP + T + t] = w1[2 * j + 1] * s1[2 * j + 1]
        t1[0, j * TP:j * TP + T] = sh1[2 * j]
        t1[0, j * TP + T:(j + 1) * TP] = sh1[2 * j + 1]

    # conv2 against rows (i, b, c) of the regrouped conv1 output; block-diag
    # over the window tile, output rows ordered (o, b); BN2 scale folded in.
    w2big = np.zeros((NROW2, KDIM2), np.float32)
    for o in range(NF2):
        for b in range(BT):
            for i in range(NF1):
                for c in range(C):
                    w2big[o * BT + b, i * BT * C + b * C + c] = w2[o, i, c] * s2[o]

    # packed per-row constants: conv3 taps + BN shifts + fc bias.
    rowc = np.zeros((NROW2, TP), np.float32)
    for o in range(NF2):
        for b in range(BT):
            r = o * BT + b
            rowc[r, COL_W30:COL_W30 + K3] = w3[2 * o] * s3[2 * o]
            rowc[r, COL_W31:COL_W31 + K3] = w3[2 * o + 1] * s3[2 * o + 1]
            rowc[r, COL_T2] = sh2[o]
            rowc[r, COL_T30] = sh3[2 * o]
            rowc[r, COL_T31] = sh3[2 * o + 1]
    rowc[0, COL_BFC:COL_BFC + NCLS] = bfc

    # avgpool (1,4) + flatten + fc folded into per-class lane maps:
    # lanes [0,128) weight a30 (even conv3 channels), [128,256) weight a31;
    # zero for t >= T so garbage lanes never contribute.
    P = T // 4
    wc = np.zeros((NCLS, NROW2, 2 * TP), np.float32)
    for n in range(NCLS):
        for o in range(NF2):
            r0 = 0.25 * np.repeat(wfc[n, (2 * o) * P:(2 * o) * P + P], 4)
            r1 = 0.25 * np.repeat(wfc[n, (2 * o + 1) * P:(2 * o + 1) * P + P], 4)
            for b in range(BT):
                wc[n, o * BT + b, :T] = r0
                wc[n, o * BT + b, TP:TP + T] = r1

    return {
        "m1": jnp.asarray(m1, jnp.bfloat16),      # bf16 MXU operand
        "t1": jnp.asarray(t1),
        "w2big": jnp.asarray(w2big, jnp.bfloat16),
        "rowc": jnp.asarray(rowc),
        "wc": jnp.asarray(wc),
    }


@jax.jit
def eegnet_forward(x, ops):
    """x: (NB, C, T) float32 (what PyTorch's forward receives before unsqueeze)."""
    nb = x.shape[0]
    # layout glue: 'same' pad for kernel 64 is (31, 32); one extra trailing zero
    # lane makes the contraction dim a full 128-lane tile.  Cast to bf16 for MXU.
    xpad = jnp.pad(x.astype(jnp.float32), ((0, 0), (0, 0), (31, 32 + 1)))
    xp2d = xpad.reshape(nb * C, TP).astype(jnp.bfloat16)

    return pl.pallas_call(
        eegnet_fused_kernel,
        out_shape=jax.ShapeDtypeStruct((nb, NCLS), jnp.float32),
        grid=(nb // BT,),
        in_specs=[
            # input: tiled over batch-tile grid axis
            pl.BlockSpec((BT * C, TP), lambda i: (i, 0)),
            # folded constants: constant index_map -> DMA'd once, VMEM-resident
            pl.BlockSpec((TP, (NF1 // 2) * TP), lambda i: (0, 0)),
            pl.BlockSpec((1, (NF1 // 2) * TP), lambda i: (0, 0)),
            pl.BlockSpec((NROW2, KDIM2), lambda i: (0, 0)),
            pl.BlockSpec((NROW2, TP), lambda i: (0, 0)),
            pl.BlockSpec((NCLS, NROW2, 2 * TP), lambda i: (0, 0, 0)),
        ],
        out_specs=pl.BlockSpec((BT, NCLS), lambda i: (i, 0)),
        compiler_params=pltpu.CompilerParams(
            dimension_semantics=("parallel",)),    # v7x: split tiles across both TCs
    )(xp2d, ops["m1"], ops["t1"], ops["w2big"], ops["rowc"], ops["wc"])


# ---------------------------------------------------------------------------
# Pure-JAX reference of the PyTorch forward (eval mode), for validation.
# ---------------------------------------------------------------------------
def eegnet_reference(x, params):
    w1, b1 = params["conv1_w"], params["conv1_b"]
    g1, be1, rm1, rv1 = params["bn1"]
    w2, b2 = params["conv2_w"], params["conv2_b"]
    g2, be2, rm2, rv2 = params["bn2"]
    w3, b3 = params["conv3_w"], params["conv3_b"]
    g3, be3, rm3, rv3 = params["bn3"]
    wfc, bfc = params["fc_w"], params["fc_b"]
    nb = x.shape[0]

    def bn(y, g, be, rm, rv):
        sh = (1, -1, 1, 1)
        return ((y - rm.reshape(sh)) / jnp.sqrt(rv.reshape(sh) + EPS)
                * g.reshape(sh) + be.reshape(sh))

    xx = x[:, None, :, :]                                    # (NB,1,C,T) NCHW
    xp = jnp.pad(xx, ((0, 0), (0, 0), (0, 0), (31, 32)))
    wins = jnp.stack([xp[..., k:k + T] for k in range(K1)], axis=-1)
    y1 = jnp.einsum('bzctk,ik->bict', wins, w1) + b1[None, :, None, None]
    y1 = jax.nn.elu(bn(y1, g1, be1, rm1, rv1))

    y2 = jnp.einsum('bict,oic->bot', y1, w2) + b2[None, :, None]
    y2 = y2[:, :, None, :]                                   # (NB,16,1,T)
    y2 = jax.nn.elu(bn(y2, g2, be2, rm2, rv2))

    y2p = jnp.pad(y2, ((0, 0), (0, 0), (0, 0), (7, 8)))
    y2rep = jnp.repeat(y2p, 2, axis=1)                       # channel o -> o//2
    wins3 = jnp.stack([y2rep[..., k:k + T] for k in range(K3)], axis=-1)
    y3 = jnp.einsum('boztk,ok->bozt', wins3, w3) + b3[None, :, None, None]
    y3 = jax.nn.elu(bn(y3, g3, be3, rm3, rv3))

    y3 = y3.reshape(nb, 32, 1, T // 4, 4).mean(-1)           # AvgPool2d((1,4))
    flat = y3.reshape(nb, -1)
    logits = flat @ wfc.T + bfc
    return jax.nn.softmax(logits, axis=1)


def init_params(key):
    ks = jax.random.split(key, 20)
    n = lambda k, s: 0.1 * jax.random.normal(k, s, dtype=jnp.float32)
    bn = lambda ka, kb, kc, kd, c: (
        1.0 + 0.1 * jax.random.normal(ka, (c,), jnp.float32),     # gamma
        0.1 * jax.random.normal(kb, (c,), jnp.float32),           # beta
        0.1 * jax.random.normal(kc, (c,), jnp.float32),           # running_mean
        0.5 + jax.random.uniform(kd, (c,), jnp.float32),          # running_var
    )
    return {
        "conv1_w": n(ks[0], (NF1, K1)),        # torch (8,1,1,64) squeezed
        "conv1_b": n(ks[1], (NF1,)),
        "bn1": bn(ks[2], ks[3], ks[4], ks[5], NF1),
        "conv2_w": n(ks[6], (NF2, NF1, C)),    # torch (16,8,C,1) squeezed
        "conv2_b": n(ks[7], (NF2,)),
        "bn2": bn(ks[8], ks[9], ks[10], ks[11], NF2),
        "conv3_w": n(ks[12], (2 * NF2, K3)),   # torch (32,1,1,16) squeezed
        "conv3_b": n(ks[13], (2 * NF2,)),
        "bn3": bn(ks[14], ks[15], ks[16], ks[17], 2 * NF2),
        "fc_w": n(ks[18], (NCLS, 32 * (T // 4))),
        "fc_b": n(ks[19], (NCLS,)),
    }


if __name__ == "__main__":
    key = jax.random.PRNGKey(0)
    pkey, xkey = jax.random.split(key)
    params = init_params(pkey)
    x = jax.random.normal(xkey, (NB, C, T), dtype=jnp.float32)

    # Heavy constant construction happens once, outside the per-call path.
    ops = precompute_operands(params)

    out = jax.block_until_ready(eegnet_forward(x, ops))

    assert out.shape == (NB, NCLS)
    # softmax rows sum to 1
    assert bool(jnp.all(jnp.abs(jnp.sum(out, axis=1) - 1.0) < 1e-4))
    # match the pure-JAX reference of the PyTorch forward
    # (tolerance loosened from 5e-3 to 1e-2 for the bf16 MXU operands)
    ref = eegnet_reference(x, params)
    err = float(jnp.max(jnp.abs(out - ref)))
    assert err < 1e-2, f"mismatch vs reference: {err}"

    print("KERNEL_OK")
</pallas_src>

<mosaic_0001>
module attributes {stable_mosaic.version = 11 : i64} {
  func.func @eegnet_fused_kernel(%arg0: i32, %arg1: memref<64x128xbf16, #tpu.memory_space<vmem>>, %arg2: memref<128x512xbf16, #tpu.memory_space<vmem>>, %arg3: memref<1x512xf32, #tpu.memory_space<vmem>>, %arg4: memref<128x512xbf16, #tpu.memory_space<vmem>>, %arg5: memref<128x128xf32, #tpu.memory_space<vmem>>, %arg6: memref<3x128x256xf32, #tpu.memory_space<vmem>>, %arg7: memref<8x3xf32, #tpu.memory_space<vmem>>) attributes {dimension_semantics = [#tpu.dimension_semantics<parallel>], iteration_bounds = array<i64: 4>, scalar_prefetch = 0 : i64, scratch_operands = 0 : i64, tpu.core_type = #tpu.core_type<tc>, window_params = [{transform_indices = @transform_0, window_bounds = array<i64: 64, 128>}, {pipeline_mode = #tpu.pipeline_mode<synchronous>, transform_indices = @transform_1, window_bounds = array<i64: 128, 512>}, {pipeline_mode = #tpu.pipeline_mode<synchronous>, transform_indices = @transform_2, window_bounds = array<i64: 1, 512>}, {pipeline_mode = #tpu.pipeline_mode<synchronous>, transform_indices = @transform_3, window_bounds = array<i64: 128, 512>}, {pipeline_mode = #tpu.pipeline_mode<synchronous>, transform_indices = @transform_4, window_bounds = array<i64: 128, 128>}, {pipeline_mode = #tpu.pipeline_mode<synchronous>, transform_indices = @transform_5, window_bounds = array<i64: 3, 128, 256>}, {transform_indices = @transform_6, window_bounds = array<i64: 8, 3>}]} {
    %c0 = arith.constant 0 : index
    %c0_0 = arith.constant 0 : index
    %0 = vector.load %arg1[%c0, %c0_0] : memref<64x128xbf16, #tpu.memory_space<vmem>>, vector<64x128xbf16>
    %c0_1 = arith.constant 0 : index
    %c0_2 = arith.constant 0 : index
    %1 = vector.load %arg2[%c0_1, %c0_2] : memref<128x512xbf16, #tpu.memory_space<vmem>>, vector<128x512xbf16>
    %cst = arith.constant dense<0.000000e+00> : vector<64x512xf32>
    %2 = tpu.matmul %0, %1, %cst {dimension_numbers = #tpu.dot_dimension_numbers<[1], [0], [0], [1], [0, 0, 1, 1], [], []>} : vector<64x128xbf16>, vector<128x512xbf16>, vector<64x512xf32> -> vector<64x512xf32>
    %c0_3 = arith.constant 0 : index
    %c0_4 = arith.constant 0 : index
    %3 = vector.load %arg3[%c0_3, %c0_4] : memref<1x512xf32, #tpu.memory_space<vmem>>, vector<1x512xf32>
    %4 = vector.broadcast %3 : vector<1x512xf32> to vector<64x512xf32>
    %5 = arith.addf %2, %4 : vector<64x512xf32>
    %cst_5 = arith.constant 0.000000e+00 : f32
    %6 = vector.broadcast %cst_5 : f32 to vector<64x512xf32>
    %7 = arith.cmpf ogt, %5, %6 : vector<64x512xf32>
    %cst_6 = arith.constant 0.000000e+00 : f32
    %8 = vector.broadcast %cst_6 : f32 to vector<64x512xf32>
    %9 = arith.minimumf %5, %8 : vector<64x512xf32>
    %10 = math.exp %9 : vector<64x512xf32>
    %cst_7 = arith.constant 1.000000e+00 : f32
    %11 = vector.broadcast %cst_7 : f32 to vector<64x512xf32>
    %12 = arith.subf %10, %11 : vector<64x512xf32>
    %13 = arith.select %7, %5, %12 : vector<64x512xi1>, vector<64x512xf32>
    %14 = vector.extract_strided_slice %13 {offsets = [0, 0], sizes = [64, 128], strides = [1, 1]} : vector<64x512xf32> to vector<64x128xf32>
    %c64_i32 = arith.constant 64 : i32
    %15 = tpu.dynamic_rotate %14 by %c64_i32 dim 1 : vector<64x128xf32>, i32 -> vector<64x128xf32>
    %16 = vector.extract_strided_slice %13 {offsets = [0, 128], sizes = [64, 128], strides = [1, 1]} : vector<64x512xf32> to vector<64x128xf32>
    %c64_i32_8 = arith.constant 64 : i32
    %17 = tpu.dynamic_rotate %16 by %c64_i32_8 dim 1 : vector<64x128xf32>, i32 -> vector<64x128xf32>
    %18 = vector.extract_strided_slice %13 {offsets = [0, 256], sizes = [64, 128], strides = [1, 1]} : vector<64x512xf32> to vector<64x128xf32>
    %c64_i32_9 = arith.constant 64 : i32
    %19 = tpu.dynamic_rotate %18 by %c64_i32_9 dim 1 : vector<64x128xf32>, i32 -> vector<64x128xf32>
    %20 = vector.extract_strided_slice %13 {offsets = [0, 384], sizes = [64, 128], strides = [1, 1]} : vector<64x512xf32> to vector<64x128xf32>
    %c64_i32_10 = arith.constant 64 : i32
    %21 = tpu.dynamic_rotate %20 by %c64_i32_10 dim 1 : vector<64x128xf32>, i32 -> vector<64x128xf32>
    %22 = tpu.concatenate %14, %15, %16, %17, %18, %19, %20, %21 in 0 : vector<64x128xf32>, vector<64x128xf32>, vector<64x128xf32>, vector<64x128xf32>, vector<64x128xf32>, vector<64x128xf32>, vector<64x128xf32>, vector<64x128xf32> -> vector<512x128xf32>
    %23 = arith.truncf %22 : vector<512x128xf32> to vector<512x128xbf16>
    %c0_11 = arith.constant 0 : index
    %c0_12 = arith.constant 0 : index
    %24 = vector.load %arg4[%c0_11, %c0_12] : memref<128x512xbf16, #tpu.memory_space<vmem>>, vector<128x512xbf16>
    %cst_13 = arith.constant dense<0.000000e+00> : vector<128x128xf32>
    %25 = tpu.matmul %24, %23, %cst_13 {dimension_numbers = #tpu.dot_dimension_numbers<[1], [0], [0], [1], [0, 0, 1, 1], [], []>} : vector<128x512xbf16>, vector<512x128xbf16>, vector<128x128xf32> -> vector<128x128xf32>
    %c0_14 = arith.constant 0 : index
    %c32 = arith.constant 32 : index
    %26 = vector.load %arg5[%c0_14, %c32] : memref<128x128xf32, #tpu.memory_space<vmem>>, vector<128x1xf32>
    %27 = vector.broadcast %26 : vector<128x1xf32> to vector<128x128xf32>
    %28 = arith.addf %25, %27 : vector<128x128xf32>
    %cst_15 = arith.constant 0.000000e+00 : f32
    %29 = vector.broadcast %cst_15 : f32 to vector<128x128xf32>
    %30 = arith.cmpf ogt, %28, %29 : vector<128x128xf32>
    %cst_16 = arith.constant 0.000000e+00 : f32
    %31 = vector.broadcast %cst_16 : f32 to vector<128x128xf32>
    %32 = arith.minimumf %28, %31 : vector<128x128xf32>
    %33 = math.exp %32 : vector<128x128xf32>
    %cst_17 = arith.constant 1.000000e+00 : f32
    %34 = vector.broadcast %cst_17 : f32 to vector<128x128xf32>
    %35 = arith.subf %33, %34 : vector<128x128xf32>
    %36 = arith.select %30, %28, %35 : vector<128x128xi1>, vector<128x128xf32>
    %37 = tpu.iota {dimensions = array<i32: 1>} : vector<128x128xi32>
    %c64_i32_18 = arith.constant 64 : i32
    %38 = vector.broadcast %c64_i32_18 : i32 to vector<128x128xi32>
    %39 = arith.cmpi slt, %37, %38 : vector<128x128xi32>
    %cst_19 = arith.constant 0.000000e+00 : f32
    %40 = vector.broadcast %cst_19 : f32 to vector<128x128xf32>
    %41 = arith.select %39, %36, %40 : vector<128x128xi1>, vector<128x128xf32>
    %c0_20 = arith.constant 0 : index
    %c0_21 = arith.constant 0 : index
    %42 = vector.load %arg5[%c0_20, %c0_21] : memref<128x128xf32, #tpu.memory_space<vmem>>, vector<128x16xf32>
    %c0_22 = arith.constant 0 : index
    %c16 = arith.constant 16 : index
    %43 = vector.load %arg5[%c0_22, %c16] : memref<128x128xf32, #tpu.memory_space<vmem>>, vector<128x16xf32>
    %cst_23 = arith.constant 0.000000e+00 : f32
    %44 = vector.broadcast %cst_23 : f32 to vector<128x128xf32>
    %cst_24 = arith.constant 0.000000e+00 : f32
    %45 = vector.broadcast %cst_24 : f32 to vector<128x128xf32>
    %c7_i32 = arith.constant 7 : i32
    %46 = tpu.dynamic_rotate %41 by %c7_i32 dim 1 : vector<128x128xf32>, i32 -> vector<128x128xf32>
    %47 = vector.extract_strided_slice %42 {offsets = [0, 0], sizes = [128, 1], strides = [1, 1]} : vector<128x16xf32> to vector<128x1xf32>
    %48 = vector.broadcast %47 : vector<128x1xf32> to vector<128x128xf32>
    %49 = arith.mulf %48, %46 : vector<128x128xf32>
    %50 = arith.addf %44, %49 : vector<128x128xf32>
    %51 = vector.extract_strided_slice %43 {offsets = [0, 0], sizes = [128, 1], strides = [1, 1]} : vector<128x16xf32> to vector<128x1xf32>
    %52 = vector.broadcast %51 : vector<128x1xf32> to vector<128x128xf32>
    %53 = arith.mulf %52, %46 : vector<128x128xf32>
    %54 = arith.addf %45, %53 : vector<128x128xf32>
    %c6_i32 = arith.constant 6 : i32
    %55 = tpu.dynamic_rotate %41 by %c6_i32 dim 1 : vector<128x128xf32>, i32 -> vector<128x128xf32>
    %56 = vector.extract_strided_slice %42 {offsets = [0, 1], sizes = [128, 1], strides = [1, 1]} : vector<128x16xf32> to vector<128x1xf32>
    %57 = vector.broadcast %56 : vector<128x1xf32> to vector<128x128xf32>
    %58 = arith.mulf %57, %55 : vector<128x128xf32>
    %59 = arith.addf %50, %58 : vector<128x128xf32>
    %60 = vector.extract_strided_slice %43 {offsets = [0, 1], sizes = [128, 1], strides = [1, 1]} : vector<128x16xf32> to vector<128x1xf32>
    %61 = vector.broadcast %60 : vector<128x1xf32> to vector<128x128xf32>
    %62 = arith.mulf %61, %55 : vector<128x128xf32>
    %63 = arith.addf %54, %62 : vector<128x128xf32>
    %c5_i32 = arith.constant 5 : i32
    %64 = tpu.dynamic_rotate %41 by %c5_i32 dim 1 : vector<128x128xf32>, i32 -> vector<128x128xf32>
    %65 = vector.extract_strided_slice %42 {offsets = [0, 2], sizes = [128, 1], strides = [1, 1]} : vector<128x16xf32> to vector<128x1xf32>
    %66 = vector.broadcast %65 : vector<128x1xf32> to vector<128x128xf32>
    %67 = arith.mulf %66, %64 : vector<128x128xf32>
    %68 = arith.addf %59, %67 : vector<128x128xf32>
    %69 = vector.extract_strided_slice %43 {offsets = [0, 2], sizes = [128, 1], strides = [1, 1]} : vector<128x16xf32> to vector<128x1xf32>
    %70 = vector.broadcast %69 : vector<128x1xf32> to vector<128x128xf32>
    %71 = arith.mulf %70, %64 : vector<128x128xf32>
    %72 = arith.addf %63, %71 : vector<128x128xf32>
    %c4_i32 = arith.constant 4 : i32
    %73 = tpu.dynamic_rotate %41 by %c4_i32 dim 1 : vector<128x128xf32>, i32 -> vector<128x128xf32>
    %74 = vector.extract_strided_slice %42 {offsets = [0, 3], sizes = [128, 1], strides = [1, 1]} : vector<128x16xf32> to vector<128x1xf32>
    %75 = vector.broadcast %74 : vector<128x1xf32> to vector<128x128xf32>
    %76 = arith.mulf %75, %73 : vector<128x128xf32>
    %77 = arith.addf %68, %76 : vector<128x128xf32>
    %78 = vector.extract_strided_slice %43 {offsets = [0, 3], sizes = [128, 1], strides = [1, 1]} : vector<128x16xf32> to vector<128x1xf32>
    %79 = vector.broadcast %78 : vector<128x1xf32> to vector<128x128xf32>
    %80 = arith.mulf %79, %73 : vector<128x128xf32>
    %81 = arith.addf %72, %80 : vector<128x128xf32>
    %c3_i32 = arith.constant 3 : i32
    %82 = tpu.dynamic_rotate %41 by %c3_i32 dim 1 : vector<128x128xf32>, i32 -> vector<128x128xf32>
    %83 = vector.extract_strided_slice %42 {offsets = [0, 4], sizes = [128, 1], strides = [1, 1]} : vector<128x16xf32> to vector<128x1xf32>
    %84 = vector.broadcast %83 : vector<128x1xf32> to vector<128x128xf32>
    %85 = arith.mulf %84, %82 : vector<128x128xf32>
    %86 = arith.addf %77, %85 : vector<128x128xf32>
    %87 = vector.extract_strided_slice %43 {offsets = [0, 4], sizes = [128, 1], strides = [1, 1]} : vector<128x16xf32> to vector<128x1xf32>
    %88 = vector.broadcast %87 : vector<128x1xf32> to vector<128x128xf32>
    %89 = arith.mulf %88, %82 : vector<128x128xf32>
    %90 = arith.addf %81, %89 : vector<128x128xf32>
    %c2_i32 = arith.constant 2 : i32
    %91 = tpu.dynamic_rotate %41 by %c2_i32 dim 1 : vector<128x128xf32>, i32 -> vector<128x128xf32>
    %92 = vector.extract_strided_slice %42 {offsets = [0, 5], sizes = [128, 1], strides = [1, 1]} : vector<128x16xf32> to vector<128x1xf32>
    %93 = vector.broadcast %92 : vector<128x1xf32> to vector<128x128xf32>
    %94 = arith.mulf %93, %91 : vector<128x128xf32>
    %95 = arith.addf %86, %94 : vector<128x128xf32>
    %96 = vector.extract_strided_slice %43 {offsets = [0, 5], sizes = [128, 1], strides = [1, 1]} : vector<128x16xf32> to vector<128x1xf32>
    %97 = vector.broadcast %96 : vector<128x1xf32> to vector<128x128xf32>
    %98 = arith.mulf %97, %91 : vector<128x128xf32>
    %99 = arith.addf %90, %98 : vector<128x128xf32>
    %c1_i32 = arith.constant 1 : i32
    %100 = tpu.dynamic_rotate %41 by %c1_i32 dim 1 : vector<128x128xf32>, i32 -> vector<128x128xf32>
    %101 = vector.extract_strided_slice %42 {offsets = [0, 6], sizes = [128, 1], strides = [1, 1]} : vector<128x16xf32> to vector<128x1xf32>
    %102 = vector.broadcast %101 : vector<128x1xf32> to vector<128x128xf32>
    %103 = arith.mulf %102, %100 : vector<128x128xf32>
    %104 = arith.addf %95, %103 : vector<128x128xf32>
    %105 = vector.extract_strided_slice %43 {offsets = [0, 6], sizes = [128, 1], strides = [1, 1]} : vector<128x16xf32> to vector<128x1xf32>
    %106 = vector.broadcast %105 : vector<128x1xf32> to vector<128x128xf32>
    %107 = arith.mulf %106, %100 : vector<128x128xf32>
    %108 = arith.addf %99, %107 : vector<128x128xf32>
    %109 = vector.extract_strided_slice %42 {offsets = [0, 7], sizes = [128, 1], strides = [1, 1]} : vector<128x16xf32> to vector<128x1xf32>
    %110 = vector.broadcast %109 : vector<128x1xf32> to vector<128x128xf32>
    %111 = arith.mulf %110, %41 : vector<128x128xf32>
    %112 = arith.addf %104, %111 : vector<128x128xf32>
    %113 = vector.extract_strided_slice %43 {offsets = [0, 7], sizes = [128, 1], strides = [1, 1]} : vector<128x16xf32> to vector<128x1xf32>
    %114 = vector.broadcast %113 : vector<128x1xf32> to vector<128x128xf32>
    %115 = arith.mulf %114, %41 : vector<128x128xf32>
    %116 = arith.addf %108, %115 : vector<128x128xf32>
    %c127_i32 = arith.constant 127 : i32
    %117 = tpu.dynamic_rotate %41 by %c127_i32 dim 1 : vector<128x128xf32>, i32 -> vector<128x128xf32>
    %118 = vector.extract_strided_slice %42 {offsets = [0, 8], sizes = [128, 1], strides = [1, 1]} : vector<128x16xf32> to vector<128x1xf32>
    %119 = vector.broadcast %118 : vector<128x1xf32> to vector<128x128xf32>
    %120 = arith.mulf %119, %117 : vector<128x128xf32>
    %121 = arith.addf %112, %120 : vector<128x128xf32>
    %122 = vector.extract_strided_slice %43 {offsets = [0, 8], sizes = [128, 1], strides = [1, 1]} : vector<128x16xf32> to vector<128x1xf32>
    %123 = vector.broadcast %122 : vector<128x1xf32> to vector<128x128xf32>
    %124 = arith.mulf %123, %117 : vector<128x128xf32>
    %125 = arith.addf %116, %124 : vector<128x128xf32>
    %c126_i32 = arith.constant 126 : i32
    %126 = tpu.dynamic_rotate %41 by %c126_i32 dim 1 : vector<128x128xf32>, i32 -> vector<128x128xf32>
    %127 = vector.extract_strided_slice %42 {offsets = [0, 9], sizes = [128, 1], strides = [1, 1]} : vector<128x16xf32> to vector<128x1xf32>
    %128 = vector.broadcast %127 : vector<128x1xf32> to vector<128x128xf32>
    %129 = arith.mulf %128, %126 : vector<128x128xf32>
    %130 = arith.addf %121, %129 : vector<128x128xf32>
    %131 = vector.extract_strided_slice %43 {offsets = [0, 9], sizes = [128, 1], strides = [1, 1]} : vector<128x16xf32> to vector<128x1xf32>
    %132 = vector.broadcast %131 : vector<128x1xf32> to vector<128x128xf32>
    %133 = arith.mulf %132, %126 : vector<128x128xf32>
    %134 = arith.addf %125, %133 : vector<128x128xf32>
    %c125_i32 = arith.constant 125 : i32
    %135 = tpu.dynamic_rotate %41 by %c125_i32 dim 1 : vector<128x128xf32>, i32 -> vector<128x128xf32>
    %136 = vector.extract_strided_slice %42 {offsets = [0, 10], sizes = [128, 1], strides = [1, 1]} : vector<128x16xf32> to vector<128x1xf32>
    %137 = vector.broadcast %136 : vector<128x1xf32> to vector<128x128xf32>
    %138 = arith.mulf %137, %135 : vector<128x128xf32>
    %139 = arith.addf %130, %138 : vector<128x128xf32>
    %140 = vector.extract_strided_slice %43 {offsets = [0, 10], sizes = [128, 1], strides = [1, 1]} : vector<128x16xf32> to vector<128x1xf32>
    %141 = vector.broadcast %140 : vector<128x1xf32> to vector<128x128xf32>
    %142 = arith.mulf %141, %135 : vector<128x128xf32>
    %143 = arith.addf %134, %142 : vector<128x128xf32>
    %c124_i32 = arith.constant 124 : i32
    %144 = tpu.dynamic_rotate %41 by %c124_i32 dim 1 : vector<128x128xf32>, i32 -> vector<128x128xf32>
    %145 = vector.extract_strided_slice %42 {offsets = [0, 11], sizes = [128, 1], strides = [1, 1]} : vector<128x16xf32> to vector<128x1xf32>
    %146 = vector.broadcast %145 : vector<128x1xf32> to vector<128x128xf32>
    %147 = arith.mulf %146, %144 : vector<128x128xf32>
    %148 = arith.addf %139, %147 : vector<128x128xf32>
    %149 = vector.extract_strided_slice %43 {offsets = [0, 11], sizes = [128, 1], strides = [1, 1]} : vector<128x16xf32> to vector<128x1xf32>
    %150 = vector.broadcast %149 : vector<128x1xf32> to vector<128x128xf32>
    %151 = arith.mulf %150, %144 : vector<128x128xf32>
    %152 = arith.addf %143, %151 : vector<128x128xf32>
    %c123_i32 = arith.constant 123 : i32
    %153 = tpu.dynamic_rotate %41 by %c123_i32 dim 1 : vector<128x128xf32>, i32 -> vector<128x128xf32>
    %154 = vector.extract_strided_slice %42 {offsets = [0, 12], sizes = [128, 1], strides = [1, 1]} : vector<128x16xf32> to vector<128x1xf32>
    %155 = vector.broadcast %154 : vector<128x1xf32> to vector<128x128xf32>
    %156 = arith.mulf %155, %153 : vector<128x128xf32>
    %157 = arith.addf %148, %156 : vector<128x128xf32>
    %158 = vector.extract_strided_slice %43 {offsets = [0, 12], sizes = [128, 1], strides = [1, 1]} : vector<128x16xf32> to vector<128x1xf32>
    %159 = vector.broadcast %158 : vector<128x1xf32> to vector<128x128xf32>
    %160 = arith.mulf %159, %153 : vector<128x128xf32>
    %161 = arith.addf %152, %160 : vector<128x128xf32>
    %c122_i32 = arith.constant 122 : i32
    %162 = tpu.dynamic_rotate %41 by %c122_i32 dim 1 : vector<128x128xf32>, i32 -> vector<128x128xf32>
    %163 = vector.extract_strided_slice %42 {offsets = [0, 13], sizes = [128, 1], strides = [1, 1]} : vector<128x16xf32> to vector<128x1xf32>
    %164 = vector.broadcast %163 : vector<128x1xf32> to vector<128x128xf32>
    %165 = arith.mulf %164, %162 : vector<128x128xf32>
    %166 = arith.addf %157, %165 : vector<128x128xf32>
    %167 = vector.extract_strided_slice %43 {offsets = [0, 13], sizes = [128, 1], strides = [1, 1]} : vector<128x16xf32> to vector<128x1xf32>
    %168 = vector.broadcast %167 : vector<128x1xf32> to vector<128x128xf32>
    %169 = arith.mulf %168, %162 : vector<128x128xf32>
    %170 = arith.addf %161, %169 : vector<128x128xf32>
    %c121_i32 = arith.constant 121 : i32
    %171 = tpu.dynamic_rotate %41 by %c121_i32 dim 1 : vector<128x128xf32>, i32 -> vector<128x128xf32>
    %172 = vector.extract_strided_slice %42 {offsets = [0, 14], sizes = [128, 1], strides = [1, 1]} : vector<128x16xf32> to vector<128x1xf32>
    %173 = vector.broadcast %172 : vector<128x1xf32> to vector<128x128xf32>
    %174 = arith.mulf %173, %171 : vector<128x128xf32>
    %175 = arith.addf %166, %174 : vector<128x128xf32>
    %176 = vector.extract_strided_slice %43 {offsets = [0, 14], sizes = [128, 1], strides = [1, 1]} : vector<128x16xf32> to vector<128x1xf32>
    %177 = vector.broadcast %176 : vector<128x1xf32> to vector<128x128xf32>
    %178 = arith.mulf %177, %171 : vector<128x128xf32>
    %179 = arith.addf %170, %178 : vector<128x128xf32>
    %c120_i32 = arith.constant 120 : i32
    %180 = tpu.dynamic_rotate %41 by %c120_i32 dim 1 : vector<128x128xf32>, i32 -> vector<128x128xf32>
    %181 = vector.extract_strided_slice %42 {offsets = [0, 15], sizes = [128, 1], strides = [1, 1]} : vector<128x16xf32> to vector<128x1xf32>
    %182 = vector.broadcast %181 : vector<128x1xf32> to vector<128x128xf32>
    %183 = arith.mulf %182, %180 : vector<128x128xf32>
    %184 = arith.addf %175, %183 : vector<128x128xf32>
    %185 = vector.extract_strided_slice %43 {offsets = [0, 15], sizes = [128, 1], strides = [1, 1]} : vector<128x16xf32> to vector<128x1xf32>
    %186 = vector.broadcast %185 : vector<128x1xf32> to vector<128x128xf32>
    %187 = arith.mulf %186, %180 : vector<128x128xf32>
    %188 = arith.addf %179, %187 : vector<128x128xf32>
    %c0_25 = arith.constant 0 : index
    %c33 = arith.constant 33 : index
    %189 = vector.load %arg5[%c0_25, %c33] : memref<128x128xf32, #tpu.memory_space<vmem>>, vector<128x1xf32>
    %190 = vector.broadcast %189 : vector<128x1xf32> to vector<128x128xf32>
    %191 = arith.addf %184, %190 : vector<128x128xf32>
    %cst_26 = arith.constant 0.000000e+00 : f32
    %192 = vector.broadcast %cst_26 : f32 to vector<128x128xf32>
    %193 = arith.cmpf ogt, %191, %192 : vector<128x128xf32>
    %cst_27 = arith.constant 0.000000e+00 : f32
    %194 = vector.broadcast %cst_27 : f32 to vector<128x128xf32>
    %195 = arith.minimumf %191, %194 : vector<128x128xf32>
    %196 = math.exp %195 : vector<128x128xf32>
    %cst_28 = arith.constant 1.000000e+00 : f32
    %197 = vector.broadcast %cst_28 : f32 to vector<128x128xf32>
    %198 = arith.subf %196, %197 : vector<128x128xf32>
    %199 = arith.select %193, %191, %198 : vector<128x128xi1>, vector<128x128xf32>
    %c0_29 = arith.constant 0 : index
    %c34 = arith.constant 34 : index
    %200 = vector.load %arg5[%c0_29, %c34] : memref<128x128xf32, #tpu.memory_space<vmem>>, vector<128x1xf32>
    %201 = vector.broadcast %200 : vector<128x1xf32> to vector<128x128xf32>
    %202 = arith.addf %188, %201 : vector<128x128xf32>
    %cst_30 = arith.constant 0.000000e+00 : f32
    %203 = vector.broadcast %cst_30 : f32 to vector<128x128xf32>
    %204 = arith.cmpf ogt, %202, %203 : vector<128x128xf32>
    %cst_31 = arith.constant 0.000000e+00 : f32
    %205 = vector.broadcast %cst_31 : f32 to vector<128x128xf32>
    %206 = arith.minimumf %202, %205 : vector<128x128xf32>
    %207 = math.exp %206 : vector<128x128xf32>
    %cst_32 = arith.constant 1.000000e+00 : f32
    %208 = vector.broadcast %cst_32 : f32 to vector<128x128xf32>
    %209 = arith.subf %207, %208 : vector<128x128xf32>
    %210 = arith.select %204, %202, %209 : vector<128x128xi1>, vector<128x128xf32>
    %c0_33 = arith.constant 0 : index
    %c0_34 = arith.constant 0 : index
    %c0_35 = arith.constant 0 : index
    %211 = vector.load %arg6[%c0_33, %c0_34, %c0_35] : memref<3x128x256xf32, #tpu.memory_space<vmem>>, vector<1x128x256xf32>
    %212 = vector.shape_cast %211 : vector<1x128x256xf32> to vector<128x256xf32>
    %213 = vector.extract_strided_slice %212 {offsets = [0, 0], sizes = [128, 128], strides = [1, 1]} : vector<128x256xf32> to vector<128x128xf32>
    %214 = arith.mulf %199, %213 : vector<128x128xf32>
    %215 = vector.extract_strided_slice %212 {offsets = [0, 128], sizes = [128, 128], strides = [1, 1]} : vector<128x256xf32> to vector<128x128xf32>
    %216 = arith.mulf %210, %215 : vector<128x128xf32>
    %217 = arith.addf %214, %216 : vector<128x128xf32>
    %cst_36 = arith.constant dense<0.000000e+00> : vector<128xf32>
    %218 = vector.multi_reduction <add>, %217, %cst_36 [1] : vector<128x128xf32> to vector<128xf32>
    %219 = vector.shape_cast %218 : vector<128xf32> to vector<128x1xf32>
    %220 = vector.extract_strided_slice %219 {offsets = [0, 0], sizes = [64, 1], strides = [1, 1]} : vector<128x1xf32> to vector<64x1xf32>
    %221 = vector.extract_strided_slice %219 {offsets = [64, 0], sizes = [64, 1], strides = [1, 1]} : vector<128x1xf32> to vector<64x1xf32>
    %222 = arith.addf %220, %221 : vector<64x1xf32>
    %223 = vector.extract_strided_slice %222 {offsets = [0, 0], sizes = [32, 1], strides = [1, 1]} : vector<64x1xf32> to vector<32x1xf32>
    %224 = vector.extract_strided_slice %222 {offsets = [32, 0], sizes = [32, 1], strides = [1, 1]} : vector<64x1xf32> to vector<32x1xf32>
    %225 = arith.addf %223, %224 : vector<32x1xf32>
    %226 = vector.extract_strided_slice %225 {offsets = [0, 0], sizes = [16, 1], strides = [1, 1]} : vector<32x1xf32> to vector<16x1xf32>
    %227 = vector.extract_strided_slice %225 {offsets = [16, 0], sizes = [16, 1], strides = [1, 1]} : vector<32x1xf32> to vector<16x1xf32>
    %228 = arith.addf %226, %227 : vector<16x1xf32>
    %229 = vector.extract_strided_slice %228 {offsets = [0, 0], sizes = [8, 1], strides = [1, 1]} : vector<16x1xf32> to vector<8x1xf32>
    %230 = vector.extract_strided_slice %228 {offsets = [8, 0], sizes = [8, 1], strides = [1, 1]} : vector<16x1xf32> to vector<8x1xf32>
    %231 = arith.addf %229, %230 : vector<8x1xf32>
    %c0_37 = arith.constant 0 : index
    %c40 = arith.constant 40 : index
    %232 = vector.load %arg5[%c0_37, %c40] : memref<128x128xf32, #tpu.memory_space<vmem>>, vector<1x1xf32>
    %233 = vector.broadcast %232 : vector<1x1xf32> to vector<8x1xf32>
    %234 = arith.addf %231, %233 : vector<8x1xf32>
    %c1 = arith.constant 1 : index
    %c0_38 = arith.constant 0 : index
    %c0_39 = arith.constant 0 : index
    %235 = vector.load %arg6[%c1, %c0_38, %c0_39] : memref<3x128x256xf32, #tpu.memory_space<vmem>>, vector<1x128x256xf32>
    %236 = vector.shape_cast %235 : vector<1x128x256xf32> to vector<128x256xf32>
    %237 = vector.extract_strided_slice %236 {offsets = [0, 0], sizes = [128, 128], strides = [1, 1]} : vector<128x256xf32> to vector<128x128xf32>
    %238 = arith.mulf %199, %237 : vector<128x128xf32>
    %239 = vector.extract_strided_slice %236 {offsets = [0, 128], sizes = [128, 128], strides = [1, 1]} : vector<128x256xf32> to vector<128x128xf32>
    %240 = arith.mulf %210, %239 : vector<128x128xf32>
    %241 = arith.addf %238, %240 : vector<128x128xf32>
    %cst_40 = arith.constant dense<0.000000e+00> : vector<128xf32>
    %242 = vector.multi_reduction <add>, %241, %cst_40 [1] : vector<128x128xf32> to vector<128xf32>
    %243 = vector.shape_cast %242 : vector<128xf32> to vector<128x1xf32>
    %244 = vector.extract_strided_slice %243 {offsets = [0, 0], sizes = [64, 1], strides = [1, 1]} : vector<128x1xf32> to vector<64x1xf32>
    %245 = vector.extract_strided_slice %243 {offsets = [64, 0], sizes = [64, 1], strides = [1, 1]} : vector<128x1xf32> to vector<64x1xf32>
    %246 = arith.addf %244, %245 : vector<64x1xf32>
    %247 = vector.extract_strided_slice %246 {offsets = [0, 0], sizes = [32, 1], strides = [1, 1]} : vector<64x1xf32> to vector<32x1xf32>
    %248 = vector.extract_strided_slice %246 {offsets = [32, 0], sizes = [32, 1], strides = [1, 1]} : vector<64x1xf32> to vector<32x1xf32>
    %249 = arith.addf %247, %248 : vector<32x1xf32>
    %250 = vector.extract_strided_slice %249 {offsets = [0, 0], sizes = [16, 1], strides = [1, 1]} : vector<32x1xf32> to vector<16x1xf32>
    %251 = vector.extract_strided_slice %249 {offsets = [16, 0], sizes = [16, 1], strides = [1, 1]} : vector<32x1xf32> to vector<16x1xf32>
    %252 = arith.addf %250, %251 : vector<16x1xf32>
    %253 = vector.extract_strided_slice %252 {offsets = [0, 0], sizes = [8, 1], strides = [1, 1]} : vector<16x1xf32> to vector<8x1xf32>
    %254 = vector.extract_strided_slice %252 {offsets = [8, 0], sizes = [8, 1], strides = [1, 1]} : vector<16x1xf32> to vector<8x1xf32>
    %255 = arith.addf %253, %254 : vector<8x1xf32>
    %c0_41 = arith.constant 0 : index
    %c41 = arith.constant 41 : index
    %256 = vector.load %arg5[%c0_41, %c41] : memref<128x128xf32, #tpu.memory_space<vmem>>, vector<1x1xf32>
    %257 = vector.broadcast %256 : vector<1x1xf32> to vector<8x1xf32>
    %258 = arith.addf %255, %257 : vector<8x1xf32>
    %c2 = arith.constant 2 : index
    %c0_42 = arith.constant 0 : index
    %c0_43 = arith.constant 0 : index
    %259 = vector.load %arg6[%c2, %c0_42, %c0_43] : memref<3x128x256xf32, #tpu.memory_space<vmem>>, vector<1x128x256xf32>
    %260 = vector.shape_cast %259 : vector<1x128x256xf32> to vector<128x256xf32>
    %261 = vector.extract_strided_slice %260 {offsets = [0, 0], sizes = [128, 128], strides = [1, 1]} : vector<128x256xf32> to vector<128x128xf32>
    %262 = arith.mulf %199, %261 : vector<128x128xf32>
    %263 = vector.extract_strided_slice %260 {offsets = [0, 128], sizes = [128, 128], strides = [1, 1]} : vector<128x256xf32> to vector<128x128xf32>
    %264 = arith.mulf %210, %263 : vector<128x128xf32>
    %265 = arith.addf %262, %264 : vector<128x128xf32>
    %cst_44 = arith.constant dense<0.000000e+00> : vector<128xf32>
    %266 = vector.multi_reduction <add>, %265, %cst_44 [1] : vector<128x128xf32> to vector<128xf32>
    %267 = vector.shape_cast %266 : vector<128xf32> to vector<128x1xf32>
    %268 = vector.extract_strided_slice %267 {offsets = [0, 0], sizes = [64, 1], strides = [1, 1]} : vector<128x1xf32> to vector<64x1xf32>
    %269 = vector.extract_strided_slice %267 {offsets = [64, 0], sizes = [64, 1], strides = [1, 1]} : vector<128x1xf32> to vector<64x1xf32>
    %270 = arith.addf %268, %269 : vector<64x1xf32>
    %271 = vector.extract_strided_slice %270 {offsets = [0, 0], sizes = [32, 1], strides = [1, 1]} : vector<64x1xf32> to vector<32x1xf32>
    %272 = vector.extract_strided_slice %270 {offsets = [32, 0], sizes = [32, 1], strides = [1, 1]} : vector<64x1xf32> to vector<32x1xf32>
    %273 = arith.addf %271, %272 : vector<32x1xf32>
    %274 = vector.extract_strided_slice %273 {offsets = [0, 0], sizes = [16, 1], strides = [1, 1]} : vector<32x1xf32> to vector<16x1xf32>
    %275 = vector.extract_strided_slice %273 {offsets = [16, 0], sizes = [16, 1], strides = [1, 1]} : vector<32x1xf32> to vector<16x1xf32>
    %276 = arith.addf %274, %275 : vector<16x1xf32>
    %277 = vector.extract_strided_slice %276 {offsets = [0, 0], sizes = [8, 1], strides = [1, 1]} : vector<16x1xf32> to vector<8x1xf32>
    %278 = vector.extract_strided_slice %276 {offsets = [8, 0], sizes = [8, 1], strides = [1, 1]} : vector<16x1xf32> to vector<8x1xf32>
    %279 = arith.addf %277, %278 : vector<8x1xf32>
    %c0_45 = arith.constant 0 : index
    %c42 = arith.constant 42 : index
    %280 = vector.load %arg5[%c0_45, %c42] : memref<128x128xf32, #tpu.memory_space<vmem>>, vector<1x1xf32>
    %281 = vector.broadcast %280 : vector<1x1xf32> to vector<8x1xf32>
    %282 = arith.addf %279, %281 : vector<8x1xf32>
    %283 = arith.maximumf %234, %258 : vector<8x1xf32>
    %284 = arith.maximumf %283, %282 : vector<8x1xf32>
    %285 = arith.subf %234, %284 : vector<8x1xf32>
    %286 = math.exp %285 : vector<8x1xf32>
    %287 = arith.subf %258, %284 : vector<8x1xf32>
    %288 = math.exp %287 : vector<8x1xf32>
    %289 = arith.subf %282, %284 : vector<8x1xf32>
    %290 = math.exp %289 : vector<8x1xf32>
    %291 = arith.addf %286, %288 : vector<8x1xf32>
    %292 = arith.addf %291, %290 : vector<8x1xf32>
    %293 = arith.divf %286, %292 : vector<8x1xf32>
    %c0_46 = arith.constant 0 : index
    %c0_47 = arith.constant 0 : index
    %294 = vector.load %arg7[%c0_46, %c0_47] : memref<8x3xf32, #tpu.memory_space<vmem>>, vector<8x1xf32>
    tpu.vector_store %arg7[%c0_46, %c0_47], %293 {strides = array<i32>} : memref<8x3xf32, #tpu.memory_space<vmem>>, vector<8x1xf32>,
    %295 = arith.divf %288, %292 : vector<8x1xf32>
    %c0_48 = arith.constant 0 : index
    %c1_49 = arith.constant 1 : index
    %296 = vector.load %arg7[%c0_48, %c1_49] : memref<8x3xf32, #tpu.memory_space<vmem>>, vector<8x1xf32>
    tpu.vector_store %arg7[%c0_48, %c1_49], %295 {strides = array<i32>} : memref<8x3xf32, #tpu.memory_space<vmem>>, vector<8x1xf32>,
    %297 = arith.divf %290, %292 : vector<8x1xf32>
    %c0_50 = arith.constant 0 : index
    %c2_51 = arith.constant 2 : index
    %298 = vector.load %arg7[%c0_50, %c2_51] : memref<8x3xf32, #tpu.memory_space<vmem>>, vector<8x1xf32>
    tpu.vector_store %arg7[%c0_50, %c2_51], %297 {strides = array<i32>} : memref<8x3xf32, #tpu.memory_space<vmem>>, vector<8x1xf32>,
    return
  }
  func.func @transform_0(%arg0: i32) -> (i32, i32) {
    %c0_i32 = arith.constant 0 : i32
    %c0_i32_0 = arith.constant 0 : i32
    return %arg0, %c0_i32 : i32, i32
  }
  func.func @transform_1(%arg0: i32) -> (i32, i32) {
    %c0_i32 = arith.constant 0 : i32
    %c0_i32_0 = arith.constant 0 : i32
    %c0_i32_1 = arith.constant 0 : i32
    return %c0_i32, %c0_i32_0 : i32, i32
  }
  func.func @transform_2(%arg0: i32) -> (i32, i32) {
    %c0_i32 = arith.constant 0 : i32
    %c0_i32_0 = arith.constant 0 : i32
    %c0_i32_1 = arith.constant 0 : i32
    return %c0_i32, %c0_i32_0 : i32, i32
  }
  func.func @transform_3(%arg0: i32) -> (i32, i32) {
    %c0_i32 = arith.constant 0 : i32
    %c0_i32_0 = arith.constant 0 : i32
    %c0_i32_1 = arith.constant 0 : i32
    return %c0_i32, %c0_i32_0 : i32, i32
  }
  func.func @transform_4(%arg0: i32) -> (i32, i32) {
    %c0_i32 = arith.constant 0 : i32
    %c0_i32_0 = arith.constant 0 : i32
    %c0_i32_1 = arith.constant 0 : i32
    return %c0_i32, %c0_i32_0 : i32, i32
  }
  func.func @transform_5(%arg0: i32) -> (i32, i32, i32) {
    %c0_i32 = arith.constant 0 : i32
    %c0_i32_0 = arith.constant 0 : i32
    %c0_i32_1 = arith.constant 0 : i32
    %c0_i32_2 = arith.constant 0 : i32
    return %c0_i32, %c0_i32_0, %c0_i32_1 : i32, i32, i32
  }
  func.func @transform_6(%arg0: i32) -> (i32, i32) {
    %c0_i32 = arith.constant 0 : i32
    %c0_i32_0 = arith.constant 0 : i32
    return %arg0, %c0_i32 : i32, i32
  }
}

</mosaic_0001>

<llo_original>
// kernel: eegnet_forward.1
$region0: #{eegnet_forward.1}
  #allocation0 [shape = 'u32[]', space=smem, size = 0x4, offset = 0x4, fixed_abs, tag = 'smem constant byte address 0x4 - core index']
  #allocation1 [shape = 'u32[144,128]{1,0:T(1,128)}', space=vmem, size = 0x12000, scoped, tag = 'internal scratch']
  %s0 = inlined_call_operand.vmem [shape: bf16[256,128], index: 0, kind: input, shape index: {}]
  %s1 = inlined_call_operand.vmem [shape: bf16[128,512], index: 1, kind: input, shape index: {}]
  %s2 = inlined_call_operand.vmem [shape: f32[1,512], index: 2, kind: input, shape index: {}]
  %s3 = inlined_call_operand.vmem [shape: bf16[128,512], index: 3, kind: input, shape index: {}]
  %s4 = inlined_call_operand.vmem [shape: f32[128,128], index: 4, kind: input, shape index: {}]
  %s5 = inlined_call_operand.hbm [shape: f32[3,128,256], index: 5, kind: input, shape index: {}]
  %s6 = inlined_call_operand.vmem [shape: f32[32,3], index: 6, kind: output, shape index: {}]
  %s7 = sld [smem:[#allocation0]]
  $region61: #{eegnet_forward.1} parent=0
    _
  %s9 = ssub.s32 1, %s7
  %s10 = scalar_select 0, %s9, %s7
  $region1: #{eegnet_forward.1} parent=0
    #allocation2 [shape = 'u8[393216]{0}', space=vmem, size = 0x60000, scoped, tag = 'input window, operand 5, single buffered']
    #allocation3 [shape = 's32[2]{0}', space=sflag, size = 0x8, scoped, tag = 'scoped memory for eegnet_forward.1']
    %11 = vsyncpa [#allocation3], 0
    loop: start=0, step=1, limit=6
    $region2: #{eegnet_forward.1} parent=1 // loop_pre_header
      _
    $region3: #{eegnet_forward.1} parent=1 // loop_header
      %s13 = sphi 0, %s17
      %p14 = scmp.ge.s32.totalorder %s13, 6
      %s23 = sphi 0, %s25
      %s26 = sphi 0, %s23
      %s27 = sphi 0, %s26
      %s43 = sphi 0, %s27
      %s47 = sphi 0, %s47
      %s49 = sphi 0, %s47
      %s50 = sphi 0, %s49
      %s64 = sphi 0, %s50
      %s68 = sphi 0, %s68
      %s70 = sphi 0, %s68
      %s71 = sphi 0, %s70
      %s85 = sphi 0, %s71
      %s89 = sphi 0, %s89
      %s91 = sphi 0, %s89
      %s92 = sphi 0, %s91
      %s106 = sphi 0, %s92
      %s110 = sphi 0, %s110
      %s112 = sphi 0, %s110
      %s113 = sphi 0, %s112
      %s127 = sphi 0, %s113
      %s131 = sphi 0, %s131
      %s133 = sphi 0, %s131
      %s134 = sphi 0, %s133
      %s148 = sphi 0, %s134
      %s154 = sphi 0, %s156
      %s157 = sphi 0, %s154
      %s158 = sphi 0, %s157
      %s174 = sphi 0, %s158
    $region4: #{eegnet_forward.1} parent=1 // loop_header_branch
      %16 = sbr.rel (%p14) target = $region8
    $region5: #{eegnet_forward.1} parent=1 // loop_body
      %s18 = ssub.s32 %s13, 1
      %s19 = ssub.s32 %s13, 2
      %s20 = sadd.s32 %s13, 1
      %s21 = ssub.s32 %s13, %s20
      %p22 = scmp.eq.s32.totalorder %s21, 0
      %s24 = sadd.s32 %s23, 1
      %s25 = scalar_select %p22, %s23, %s24
      %p28 = pneg %p22
      %p29 = scmp.eq.s32.totalorder %s13, 3
      %p30 = por %p28, %p29
      %p31 = scmp.ne.s32.totalorder %s23, %s26
      %p32 = scmp.eq.s32.totalorder %s13, 0
      %p33 = por %p31, %p32
      %p34 = scmp.ne.s32.totalorder %s23, %s26
      %p35 = scmp.eq.s32.totalorder %s18, 3
      %p36 = por %p34, %p35
      %p37 = scmp.ne.s32.totalorder %s26, %s27
      %p38 = scmp.eq.s32.totalorder %s18, 0
      %p39 = por %p37, %p38
      %p40 = scmp.ne.s32.totalorder %s26, %s27
      %p41 = scmp.eq.s32.totalorder %s19, 3
      %p42 = por %p40, %p41
      %p44 = scmp.ne.s32.totalorder %s27, %s43
      %p45 = scmp.eq.s32.totalorder %s19, 0
      %p46 = por %p44, %p45
      %s48 = sadd.s32 %s47, 1
      %p51 = scmp.eq.s32.totalorder %s13, 3
      %p52 = scmp.ne.s32.totalorder %s47, %s49
      %p53 = scmp.eq.s32.totalorder %s13, 0
      %p54 = por %p52, %p53
      %p55 = scmp.ne.s32.totalorder %s47, %s49
      %p56 = scmp.eq.s32.totalorder %s18, 3
      %p57 = por %p55, %p56
      %p58 = scmp.ne.s32.totalorder %s49, %s50
      %p59 = scmp.eq.s32.totalorder %s18, 0
      %p60 = por %p58, %p59
      %p61 = scmp.ne.s32.totalorder %s49, %s50
      %p62 = scmp.eq.s32.totalorder %s19, 3
      %p63 = por %p61, %p62
      %p65 = scmp.ne.s32.totalorder %s50, %s64
      %p66 = scmp.eq.s32.totalorder %s19, 0
      %p67 = por %p65, %p66
      %s69 = sadd.s32 %s68, 1
      %p72 = scmp.eq.s32.totalorder %s13, 3
      %p73 = scmp.ne.s32.totalorder %s68, %s70
      %p74 = scmp.eq.s32.totalorder %s13, 0
      %p75 = por %p73, %p74
      %p76 = scmp.ne.s32.totalorder %s68, %s70
      %p77 = scmp.eq.s32.totalorder %s18, 3
      %p78 = por %p76, %p77
      %p79 = scmp.ne.s32.totalorder %s70, %s71
      %p80 = scmp.eq.s32.totalorder %s18, 0
      %p81 = por %p79, %p80
      %p82 = scmp.ne.s32.totalorder %s70, %s71
      %p83 = scmp.eq.s32.totalorder %s19, 3
      %p84 = por %p82, %p83
      %p86 = scmp.ne.s32.totalorder %s71, %s85
      %p87 = scmp.eq.s32.totalorder %s19, 0
      %p88 = por %p86, %p87
      %s90 = sadd.s32 %s89, 1
      %p93 = scmp.eq.s32.totalorder %s13, 3
      %p94 = scmp.ne.s32.totalorder %s89, %s91
      %p95 = scmp.eq.s32.totalorder %s13, 0
      %p96 = por %p94, %p95
      %p97 = scmp.ne.s32.totalorder %s89, %s91
      %p98 = scmp.eq.s32.totalorder %s18, 3
      %p99 = por %p97, %p98
      %p100 = scmp.ne.s32.totalorder %s91, %s92
      %p101 = scmp.eq.s32.totalorder %s18, 0
      %p102 = por %p100, %p101
      %p103 = scmp.ne.s32.totalorder %s91, %s92
      %p104 = scmp.eq.s32.totalorder %s19, 3
      %p105 = por %p103, %p104
      %p107 = scmp.ne.s32.totalorder %s92, %s106
      %p108 = scmp.eq.s32.totalorder %s19, 0
      %p109 = por %p107, %p108
      %s111 = sadd.s32 %s110, 1
      %p114 = scmp.eq.s32.totalorder %s13, 3
      %p115 = scmp.ne.s32.totalorder %s110, %s112
      %p116 = scmp.eq.s32.totalorder %s13, 0
      %p117 = por %p115, %p116
      %p118 = scmp.ne.s32.totalorder %s110, %s112
      %p119 = scmp.eq.s32.totalorder %s18, 3
      %p120 = por %p118, %p119
      %p121 = scmp.ne.s32.totalorder %s112, %s113
      %p122 = scmp.eq.s32.totalorder %s18, 0
      %p123 = por %p121, %p122
      %p124 = scmp.ne.s32.totalorder %s112, %s113
      %p125 = scmp.eq.s32.totalorder %s19, 3
      %p126 = por %p124, %p125
      %p128 = scmp.ne.s32.totalorder %s113, %s127
      %p129 = scmp.eq.s32.totalorder %s19, 0
      %p130 = por %p128, %p129
      %s132 = sadd.s32 %s131, 1
      %p135 = scmp.eq.s32.totalorder %s13, 3
      %p136 = scmp.ne.s32.totalorder %s131, %s133
      %p137 = scmp.eq.s32.totalorder %s13, 0
      %p138 = por %p136, %p137
      %p139 = scmp.ne.s32.totalorder %s131, %s133
      %p140 = scmp.eq.s32.totalorder %s18, 3
      %p141 = por %p139, %p140
      %p142 = scmp.ne.s32.totalorder %s133, %s134
      %p143 = scmp.eq.s32.totalorder %s18, 0
      %p144 = por %p142, %p143
      %p145 = scmp.ne.s32.totalorder %s133, %s134
      %p146 = scmp.eq.s32.totalorder %s19, 3
      %p147 = por %p145, %p146
      %p149 = scmp.ne.s32.totalorder %s134, %s148
      %p150 = scmp.eq.s32.totalorder %s19, 0
      %p151 = por %p149, %p150
      %s152 = ssub.s32 %s13, %s20
      %p153 = scmp.eq.s32.totalorder %s152, 0
      %s155 = sadd.s32 %s154, 1
      %s156 = scalar_select %p153, %s154, %s155
      %p159 = pneg %p153
      %p160 = scmp.eq.s32.totalorder %s13, 3
      %p161 = por %p159, %p160
      %p162 = scmp.ne.s32.totalorder %s154, %s157
      %p163 = scmp.eq.s32.totalorder %s13, 0
      %p164 = por %p162, %p163
      %p165 = scmp.ne.s32.totalorder %s154, %s157
      %p166 = scmp.eq.s32.totalorder %s18, 3
      %p167 = por %p165, %p166
      %p168 = scmp.ne.s32.totalorder %s157, %s158
      %p169 = scmp.eq.s32.totalorder %s18, 0
      %p170 = por %p168, %p169
      %p171 = scmp.ne.s32.totalorder %s157, %s158
      %p172 = scmp.eq.s32.totalorder %s19, 3
      %p173 = por %p171, %p172
      %p175 = scmp.ne.s32.totalorder %s158, %s174
      %p176 = scmp.eq.s32.totalorder %s19, 0
      %p177 = por %p175, %p176
      %p178 = scmp.le.s32.totalorder 1, %s13
      %p179 = scmp.lt.s32.totalorder %s13, 5
      %p180 = pnand %p178, %p179
      %p181 = pneg %p180
      // Predicated region
      $region9: #{eegnet_forward.1} parent=5 // pred_check
        _
      $region10: #{eegnet_forward.1} parent=5 // pred_check_branch
        %183 = sbr.rel (%p180) target = $region12
      $region11: #{eegnet_forward.1} parent=5 // pred_region
        %s184 = ssub.s32 %s13, 1
        // Predicated region
        $region13: #{eegnet_forward.1} parent=11 // pred_check
          %p185 = pneg %p60
        $region14: #{eegnet_forward.1} parent=11 // pred_check_branch
          %187 = sbr.rel (%p185) target = $region16
        $region15: #{eegnet_forward.1} parent=11 // pred_region
          _
        $region16: #{eegnet_forward.1} parent=11 // pred_fallthru
          _
        // Predicated region
        $region17: #{eegnet_forward.1} parent=11 // pred_check
          %p188 = pneg %p81
        $region18: #{eegnet_forward.1} parent=11 // pred_check_branch
          %190 = sbr.rel (%p188) target = $region20
        $region19: #{eegnet_forward.1} parent=11 // pred_region
          _
        $region20: #{eegnet_forward.1} parent=11 // pred_fallthru
          _
        // Predicated region
        $region21: #{eegnet_forward.1} parent=11 // pred_check
          %p191 = pneg %p102
        $region22: #{eegnet_forward.1} parent=11 // pred_check_branch
          %193 = sbr.rel (%p191) target = $region24
        $region23: #{eegnet_forward.1} parent=11 // pred_region
          _
        $region24: #{eegnet_forward.1} parent=11 // pred_fallthru
          _
        // Predicated region
        $region25: #{eegnet_forward.1} parent=11 // pred_check
          %p194 = pneg %p123
        $region26: #{eegnet_forward.1} parent=11 // pred_check_branch
          %196 = sbr.rel (%p194) target = $region28
        $region27: #{eegnet_forward.1} parent=11 // pred_region
          _
        $region28: #{eegnet_forward.1} parent=11 // pred_fallthru
          _
        // Predicated region
        $region29: #{eegnet_forward.1} parent=11 // pred_check
          %p197 = pneg %p144
        $region30: #{eegnet_forward.1} parent=11 // pred_check_branch
          %199 = sbr.rel (%p197) target = $region32
        $region31: #{eegnet_forward.1} parent=11 // pred_region
          %s201 = ssub.s32 12288, 12288
          %202 = vsyncadd [#allocation3], %s201
          %s203 = sshll.u32 [#allocation2], 4
          %s204 = int_to_ptr.vmem [resolvable:$true] %s203
          %209 = dma.hbm_to_vmem [thread:$0]  %s5, 12288, %s204, [#allocation3], 256, 256, 16
        $region32: #{eegnet_forward.1} parent=11 // pred_fallthru
          _
      $region12: #{eegnet_forward.1} parent=5 // pred_fallthru
        _
      %p210 = scmp.lt.s32.totalorder %s13, 4
      // Predicated region
      $region33: #{eegnet_forward.1} parent=5 // pred_check
        %p211 = pneg %p210
      $region34: #{eegnet_forward.1} parent=5 // pred_check_branch
        %213 = sbr.rel (%p211) target = $region36
      $region35: #{eegnet_forward.1} parent=5 // pred_region
        // Predicated region
        $region37: #{eegnet_forward.1} parent=35 // pred_check
          %p214 = pneg %p33
        $region38: #{eegnet_forward.1} parent=35 // pred_check_branch
          %216 = sbr.rel (%p214) target = $region40
        $region39: #{eegnet_forward.1} parent=35 // pred_region
          %s217 = smul.u32 8, %s13
          %p218 = scmp.lt.s32.totalorder %s217, 31
          %s219 = scalar_select %p218, %s217, 31
          %s220 = smul.addr %s219, 4
          %s221 = scalar_lea.vmem %s0, %s220
          %s222 = smul.u32 8, %s13
        $region40: #{eegnet_forward.1} parent=35 // pred_fallthru
          _
      $region36: #{eegnet_forward.1} parent=5 // pred_fallthru
        _
      %p223 = scmp.le.s32.totalorder 1, %s13
      %p224 = scmp.lt.s32.totalorder %s13, 5
      %p225 = pnand %p223, %p224
      %p226 = pneg %p225
      // Predicated region
      $region41: #{eegnet_forward.1} parent=5 // pred_check
        _
      $region42: #{eegnet_forward.1} parent=5 // pred_check_branch
        %228 = sbr.rel (%p225) target = $region44
      $region43: #{eegnet_forward.1} parent=5 // pred_region
        %s229 = ssub.s32 %s13, 1
        // Predicated region
        $region45: #{eegnet_forward.1} parent=43 // pred_check
          %p230 = pneg %p144
        $region46: #{eegnet_forward.1} parent=43 // pred_check_branch
          %232 = sbr.rel (%p230) target = $region48
        $region47: #{eegnet_forward.1} parent=43 // pred_region
          %233 = dma.done [#allocation3], 12288
        $region48: #{eegnet_forward.1} parent=43 // pred_fallthru
          _
        %s234 = smul.u32 8, %s18
        %p235 = scmp.lt.s32.totalorder %s234, 31
        %s236 = scalar_select %p235, %s234, 31
        %s237 = smul.addr %s236, 4
        %s238 = scalar_lea.vmem %s0, %s237
        %p239 = pneg %p39
        %p240 = pneg %p36
        %p241 = pneg %p60
        %p242 = pneg %p57
        %p243 = pneg %p81
        %p244 = pneg %p78
        %p245 = pneg %p102
        %p246 = pneg %p99
        %p247 = pneg %p123
        %p248 = pneg %p120
        %p249 = pneg %p144
        %p250 = pneg %p141
        %p251 = pneg %p170
        %p252 = pneg %p167
        %p253 = scmp.lt.s32.totalorder %s18, 3
        %s254 = scalar_select %p253, %s18, 3
        %s255 = smul.addr %s254, 8
        %s256 = scalar_lea.vmem %s6, %s255
        %s257 = smul.u32 8, %s18
        %p258 = scmp.lt.s32.totalorder %s257, 31
        %s259 = scalar_select %p258, %s257, 31
        %s260 = smul.addr %s259, 4
        %s261 = scalar_lea.vmem %s0, %s260
        %s262 = smul.u32 8, %s18
        %p263 = scmp.lt.s32.totalorder %s18, 3
        %s264 = scalar_select %p263, %s18, 3
        %s265 = smul.addr %s264, 8
        %s266 = scalar_lea.vmem %s6, %s265
        %v268 = vld [vmem:[%s261] sm:$0xf]
        %v269 = vld [vmem:[%s261 + $0x4] sm:$0xf]
        %v270 = vld [vmem:[%s261 + $0x8] sm:$0xf]
        %v271 = vld [vmem:[%s261 + $0xc] sm:$0xf]
        %v272 = vld [vmem:[%s261 + $0x10] sm:$0xf]
        %v273 = vld [vmem:[%s261 + $0x14] sm:$0xf]
        %v274 = vld [vmem:[%s261 + $0x18] sm:$0xf]
        %v275 = vld [vmem:[%s261 + $0x1c] sm:$0xf]
        %v276 = vld [vmem:[%s1] sm:$0xff]
        %v277 = vld [vmem:[%s1 + $0x8] sm:$0xff]
        %v278 = vld [vmem:[%s1 + $0x10] sm:$0xff]
        %v279 = vld [vmem:[%s1 + $0x18] sm:$0xff]
        %v280 = vld [vmem:[%s1 + $0x20] sm:$0xff]
        %v281 = vld [vmem:[%s1 + $0x28] sm:$0xff]
        %v282 = vld [vmem:[%s1 + $0x30] sm:$0xff]
        %v283 = vld [vmem:[%s1 + $0x38] sm:$0xff]
        %v284 = vld [vmem:[%s1 + $0x40] sm:$0xff]
        %v285 = vld [vmem:[%s1 + $0x48] sm:$0xff]
        %v286 = vld [vmem:[%s1 + $0x50] sm:$0xff]
        %v287 = vld [vmem:[%s1 + $0x58] sm:$0xff]
        %v288 = vld [vmem:[%s1 + $0x60] sm:$0xff]
        %v289 = vld [vmem:[%s1 + $0x68] sm:$0xff]
        %v290 = vld [vmem:[%s1 + $0x70] sm:$0xff]
        %v291 = vld [vmem:[%s1 + $0x78] sm:$0xff]
        %v292 = vld [vmem:[%s1 + $0x80] sm:$0xff]
        %v293 = vld [vmem:[%s1 + $0x88] sm:$0xff]
        %v294 = vld [vmem:[%s1 + $0x90] sm:$0xff]
        %v295 = vld [vmem:[%s1 + $0x98] sm:$0xff]
        %v296 = vld [vmem:[%s1 + $0xa0] sm:$0xff]
        %v297 = vld [vmem:[%s1 + $0xa8] sm:$0xff]
        %v298 = vld [vmem:[%s1 + $0xb0] sm:$0xff]
        %v299 = vld [vmem:[%s1 + $0xb8] sm:$0xff]
        %v300 = vld [vmem:[%s1 + $0xc0] sm:$0xff]
        %v301 = vld [vmem:[%s1 + $0xc8] sm:$0xff]
        %v302 = vld [vmem:[%s1 + $0xd0] sm:$0xff]
        %v303 = vld [vmem:[%s1 + $0xd8] sm:$0xff]
        %v304 = vld [vmem:[%s1 + $0xe0] sm:$0xff]
        %v305 = vld [vmem:[%s1 + $0xe8] sm:$0xff]
        %v306 = vld [vmem:[%s1 + $0xf0] sm:$0xff]
        %v307 = vld [vmem:[%s1 + $0xf8] sm:$0xff]
        %v308 = vld [vmem:[%s2] sm:$0xf]
        %v310 = vlaneseq
        %v311 = vshrl.u32 %v310, 7
        %v312 = vsub.s32 0, %v311
        %v313 = vrot.slane %v308, %v312
        %v314 = vlaneseq
        %v315 = vshrl.u32 %v314, 7
        %v316 = vsub.s32 1, %v315
        %v317 = vrot.slane %v308, %v316
        %v318 = vlaneseq
        %v319 = vshrl.u32 %v318, 7
        %v320 = vsub.s32 2, %v319
        %v321 = vrot.slane %v308, %v320
        %v322 = vlaneseq
        %v323 = vshrl.u32 %v322, 7
        %v324 = vsub.s32 3, %v323
        %v325 = vrot.slane %v308, %v324
        %v338 = vunpack.c.l.b16 %v268
        %v339 = vunpack.c.l.b16 %v269
        %v340 = vunpack.c.l.b16 %v270
        %v341 = vunpack.c.l.b16 %v271
        %v342 = vunpack.c.l.b16 %v272
        %v343 = vunpack.c.l.b16 %v273
        %v344 = vunpack.c.l.b16 %v274
        %v345 = vunpack.c.l.b16 %v275
        %v346 = vpack.c.b16 %v339, %v338
        %v347 = vpack.c.b16 %v341, %v340
        %v348 = vpack.c.b16 %v343, %v342
        %v349 = vpack.c.b16 %v345, %v344
        %v386 = vunpack.c.l.b16 %v276
        %v387 = vunpack.c.h.b16 %v276
        %v388 = vunpack.c.l.b16 %v277
        %v389 = vunpack.c.h.b16 %v277
        %v390 = vunpack.c.l.b16 %v278
        %v391 = vunpack.c.h.b16 %v278
        %v392 = vunpack.c.l.b16 %v279
        %v393 = vunpack.c.h.b16 %v279
        %v394 = vunpack.c.l.b16 %v280
        %v395 = vunpack.c.h.b16 %v280
        %v396 = vunpack.c.l.b16 %v281
        %v397 = vunpack.c.h.b16 %v281
        %v398 = vunpack.c.l.b16 %v282
        %v399 = vunpack.c.h.b16 %v282
        %v400 = vunpack.c.l.b16 %v283
        %v401 = vunpack.c.h.b16 %v283
        %v402 = vunpack.c.l.b16 %v284
        %v403 = vunpack.c.h.b16 %v284
        %v404 = vunpack.c.l.b16 %v285
        %v405 = vunpack.c.h.b16 %v285
        %v406 = vunpack.c.l.b16 %v286
        %v407 = vunpack.c.h.b16 %v286
        %v408 = vunpack.c.l.b16 %v287
        %v409 = vunpack.c.h.b16 %v287
        %v410 = vunpack.c.l.b16 %v288
        %v411 = vunpack.c.h.b16 %v288
        %v412 = vunpack.c.l.b16 %v289
        %v413 = vunpack.c.h.b16 %v289
        %v414 = vunpack.c.l.b16 %v290
        %v415 = vunpack.c.h.b16 %v290
        %v416 = vunpack.c.l.b16 %v291
        %v417 = vunpack.c.h.b16 %v291
        %v418 = vunpack.c.l.b16 %v292
        %v419 = vunpack.c.h.b16 %v292
        %v420 = vunpack.c.l.b16 %v293
        %v421 = vunpack.c.h.b16 %v293
        %v422 = vunpack.c.l.b16 %v294
        %v423 = vunpack.c.h.b16 %v294
        %v424 = vunpack.c.l.b16 %v295
        %v425 = vunpack.c.h.b16 %v295
        %v426 = vunpack.c.l.b16 %v296
        %v427 = vunpack.c.h.b16 %v296
        %v428 = vunpack.c.l.b16 %v297
        %v429 = vunpack.c.h.b16 %v297
        %v430 = vunpack.c.l.b16 %v298
        %v431 = vunpack.c.h.b16 %v298
        %v432 = vunpack.c.l.b16 %v299
        %v433 = vunpack.c.h.b16 %v299
        %v434 = vunpack.c.l.b16 %v300
        %v435 = vunpack.c.h.b16 %v300
        %v436 = vunpack.c.l.b16 %v301
        %v437 = vunpack.c.h.b16 %v301
        %v438 = vunpack.c.l.b16 %v302
        %v439 = vunpack.c.h.b16 %v302
        %v440 = vunpack.c.l.b16 %v303
        %v441 = vunpack.c.h.b16 %v303
        %v442 = vunpack.c.l.b16 %v304
        %v443 = vunpack.c.h.b16 %v304
        %v444 = vunpack.c.l.b16 %v305
        %v445 = vunpack.c.h.b16 %v305
        %v446 = vunpack.c.l.b16 %v306
        %v447 = vunpack.c.h.b16 %v306
        %v448 = vunpack.c.l.b16 %v307
        %v449 = vunpack.c.h.b16 %v307
        %v450 = vpack.c.b16 %v390, %v386
        %v451 = vpack.c.b16 %v391, %v387
        %v452 = vpack.c.b16 %v392, %v388
        %v453 = vpack.c.b16 %v393, %v389
        %v454 = vpack.c.b16 %v398, %v394
        %v455 = vpack.c.b16 %v399, %v395
        %v456 = vpack.c.b16 %v400, %v396
        %v457 = vpack.c.b16 %v401, %v397
        %v458 = vpack.c.b16 %v406, %v402
        %v459 = vpack.c.b16 %v407, %v403
        %v460 = vpack.c.b16 %v408, %v404
        %v461 = vpack.c.b16 %v409, %v405
        %v462 = vpack.c.b16 %v414, %v410
        %v463 = vpack.c.b16 %v415, %v411
        %v464 = vpack.c.b16 %v416, %v412
        %v465 = vpack.c.b16 %v417, %v413
        %v466 = vpack.c.b16 %v422, %v418
        %v467 = vpack.c.b16 %v423, %v419
        %v468 = vpack.c.b16 %v424, %v420
        %v469 = vpack.c.b16 %v425, %v421
        %v470 = vpack.c.b16 %v430, %v426
        %v471 = vpack.c.b16 %v431, %v427
        %v472 = vpack.c.b16 %v432, %v428
        %v473 = vpack.c.b16 %v433, %v429
        %v474 = vpack.c.b16 %v438, %v434
        %v475 = vpack.c.b16 %v439, %v435
        %v476 = vpack.c.b16 %v440, %v436
        %v477 = vpack.c.b16 %v441, %v437
        %v478 = vpack.c.b16 %v446, %v442
        %v479 = vpack.c.b16 %v447, %v443
        %v480 = vpack.c.b16 %v448, %v444
        %v481 = vpack.c.b16 %v449, %v445
        %514 = vmatprep.subr.bf16.mxu0 %v451
        %515 = vmatpush1.bf16.msra.mxu0 %v450
        %516 = vmatprep.subr.bf16.mxu0 %v455
        %517 = vmatpush1.bf16.msra.mxu0 %v454
        %518 = vmatprep.subr.bf16.mxu0 %v459
        %519 = vmatpush1.bf16.msra.mxu0 %v458
        %520 = vmatprep.subr.bf16.mxu0 %v463
        %521 = vmatpush1.bf16.msra.mxu0 %v462
        %522 = vmatprep.subr.bf16.mxu0 %v467
        %523 = vmatpush1.bf16.msra.mxu0 %v466
        %524 = vmatprep.subr.bf16.mxu0 %v471
        %525 = vmatpush1.bf16.msra.mxu0 %v470
        %526 = vmatprep.subr.bf16.mxu0 %v475
        %527 = vmatpush1.bf16.msra.mxu0 %v474
        %528 = vmatprep.subr.bf16.mxu0 %v479
        %529 = vmatpush1.bf16.msra.mxu0 %v478
        %530 = vmatprep.subr.bf16.mxu0 0
        %531 = vmatpush1.bf16.msra.mxu0 0
        %532 = vmatprep.subr.bf16.mxu0 0
        %533 = vmatpush1.bf16.msra.mxu0 0
        %534 = vmatprep.subr.bf16.mxu0 0
        %535 = vmatpush1.bf16.msra.mxu0 0
        %536 = vmatprep.subr.bf16.mxu0 0
        %537 = vmatpush1.bf16.msra.mxu0 0
        %538 = vmatprep.subr.bf16.mxu0 0
        %539 = vmatpush1.bf16.msra.mxu0 0
        %540 = vmatprep.subr.bf16.mxu0 0
        %541 = vmatpush1.bf16.msra.mxu0 0
        %542 = vmatprep.subr.bf16.mxu0 0
        %543 = vmatpush1.bf16.msra.mxu0 0
        %544 = vmatprep.subr.bf16.mxu0 0
        %545 = vmatpush1.bf16.msra.mxu0 0
        %546 = vmatprep.mubr.bf16.mxu0 0
        %547 = vmatmul.mubr.bf16.gmra.mrb[0].mxu0 %v346
        %v548 = vpop.f32.mrb[0].mxu0
        %v549 = vadd.f32 %v313, %v548
        %v550 = vpop.f32.mrb[0].mxu0
        %v551 = vadd.f32 %v317, %v550
        %v552 = vpop.f32.mrb[0].mxu0
        %v553 = vadd.f32 %v313, %v552
        %v554 = vpop.f32.mrb[0].mxu0
        %v555 = vadd.f32 %v317, %v554
        %556 = vmatprep.mubr.bf16.mxu0 0
        %557 = vmatmul.mubr.bf16.gmra.mrb[0].mxu0 %v347
        %v558 = vpop.f32.mrb[0].mxu0
        %v559 = vadd.f32 %v313, %v558
        %v560 = vpop.f32.mrb[0].mxu0
        %v561 = vadd.f32 %v317, %v560
        %v562 = vpop.f32.mrb[0].mxu0
        %v563 = vadd.f32 %v313, %v562
        %v564 = vpop.f32.mrb[0].mxu0
        %v565 = vadd.f32 %v317, %v564
        %566 = vmatprep.mubr.bf16.mxu0 0
        %567 = vmatmul.mubr.bf16.gmra.mrb[0].mxu0 %v348
        %v568 = vpop.f32.mrb[0].mxu0
        %v569 = vadd.f32 %v313, %v568
        %v570 = vpop.f32.mrb[0].mxu0
        %v571 = vadd.f32 %v317, %v570
        %v572 = vpop.f32.mrb[0].mxu0
        %v573 = vadd.f32 %v313, %v572
        %v574 = vpop.f32.mrb[0].mxu0
        %v575 = vadd.f32 %v317, %v574
        %576 = vmatprep.mubr.bf16.mxu0 0
        %577 = vmatmul.mubr.bf16.gmra.mrb[0].mxu0 %v349
        %v578 = vpop.f32.mrb[0].mxu0
        %v579 = vadd.f32 %v313, %v578
        %v580 = vpop.f32.mrb[0].mxu0
        %v581 = vadd.f32 %v317, %v580
        %v582 = vpop.f32.mrb[0].mxu0
        %v583 = vadd.f32 %v313, %v582
        %v584 = vpop.f32.mrb[0].mxu0
        %v585 = vadd.f32 %v317, %v584
        %586 = vdwg.mxu0
        %587 = vmatprep.subr.bf16.mxu0 %v453
        %588 = vmatpush1.bf16.msra.mxu0 %v452
        %589 = vmatprep.subr.bf16.mxu0 %v457
        %590 = vmatpush1.bf16.msra.mxu0 %v456
        %591 = vmatprep.subr.bf16.mxu0 %v461
        %592 = vmatpush1.bf16.msra.mxu0 %v460
        %593 = vmatprep.subr.bf16.mxu0 %v465
        %594 = vmatpush1.bf16.msra.mxu0 %v464
        %595 = vmatprep.subr.bf16.mxu0 %v469
        %596 = vmatpush1.bf16.msra.mxu0 %v468
        %597 = vmatprep.subr.bf16.mxu0 %v473
        %598 = vmatpush1.bf16.msra.mxu0 %v472
        %599 = vmatprep.subr.bf16.mxu0 %v477
        %600 = vmatpush1.bf16.msra.mxu0 %v476
        %601 = vmatprep.subr.bf16.mxu0 %v481
        %602 = vmatpush1.bf16.msra.mxu0 %v480
        %603 = vmatprep.subr.bf16.mxu0 0
        %604 = vmatpush1.bf16.msra.mxu0 0
        %605 = vmatprep.subr.bf16.mxu0 0
        %606 = vmatpush1.bf16.msra.mxu0 0
        %607 = vmatprep.subr.bf16.mxu0 0
        %608 = vmatpush1.bf16.msra.mxu0 0
        %609 = vmatprep.subr.bf16.mxu0 0
        %610 = vmatpush1.bf16.msra.mxu0 0
        %611 = vmatprep.subr.bf16.mxu0 0
        %612 = vmatpush1.bf16.msra.mxu0 0
        %613 = vmatprep.subr.bf16.mxu0 0
        %614 = vmatpush1.bf16.msra.mxu0 0
        %615 = vmatprep.subr.bf16.mxu0 0
        %616 = vmatpush1.bf16.msra.mxu0 0
        %617 = vmatprep.subr.bf16.mxu0 0
        %618 = vmatpush1.bf16.msra.mxu0 0
        %619 = vmatprep.mubr.bf16.mxu0 0
        %620 = vmatmul.mubr.bf16.gmra.mrb[0].mxu0 %v346
        %v621 = vpop.f32.mrb[0].mxu0
        %v622 = vadd.f32 %v321, %v621
        %v623 = vpop.f32.mrb[0].mxu0
        %v624 = vadd.f32 %v325, %v623
        %v625 = vpop.f32.mrb[0].mxu0
        %v626 = vadd.f32 %v321, %v625
        %v627 = vpop.f32.mrb[0].mxu0
        %v628 = vadd.f32 %v325, %v627
        %629 = vmatprep.mubr.bf16.mxu0 0
        %630 = vmatmul.mubr.bf16.gmra.mrb[0].mxu0 %v347
        %v631 = vpop.f32.mrb[0].mxu0
        %v632 = vadd.f32 %v321, %v631
        %v633 = vpop.f32.mrb[0].mxu0
        %v634 = vadd.f32 %v325, %v633
        %v635 = vpop.f32.mrb[0].mxu0
        %v636 = vadd.f32 %v321, %v635
        %v637 = vpop.f32.mrb[0].mxu0
        %v638 = vadd.f32 %v325, %v637
        %639 = vmatprep.mubr.bf16.mxu0 0
        %640 = vmatmul.mubr.bf16.gmra.mrb[0].mxu0 %v348
        %v641 = vpop.f32.mrb[0].mxu0
        %v642 = vadd.f32 %v321, %v641
        %v643 = vpop.f32.mrb[0].mxu0
        %v644 = vadd.f32 %v325, %v643
        %v645 = vpop.f32.mrb[0].mxu0
        %v646 = vadd.f32 %v321, %v645
        %v647 = vpop.f32.mrb[0].mxu0
        %v648 = vadd.f32 %v325, %v647
        %649 = vmatprep.mubr.bf16.mxu0 0
        %650 = vmatmul.mubr.bf16.gmra.mrb[0].mxu0 %v349
        %v651 = vpop.f32.mrb[0].mxu0
        %v652 = vadd.f32 %v321, %v651
        %v653 = vpop.f32.mrb[0].mxu0
        %v654 = vadd.f32 %v325, %v653
        %v655 = vpop.f32.mrb[0].mxu0
        %v656 = vadd.f32 %v321, %v655
        %v657 = vpop.f32.mrb[0].mxu0
        %v658 = vadd.f32 %v325, %v657
        %659 = vdwg.mxu0
        %vm660 = vcmp.gt.f32.partialorder %v549, 0.0
        %vm661 = vcmp.gt.f32.partialorder %v551, 0.0
        %vm662 = vcmp.gt.f32.partialorder %v622, 0.0
        %vm663 = vcmp.gt.f32.partialorder %v624, 0.0
        %vm664 = vcmp.gt.f32.partialorder %v553, 0.0
        %vm665 = vcmp.gt.f32.partialorder %v555, 0.0
        %vm666 = vcmp.gt.f32.partialorder %v626, 0.0
        %vm667 = vcmp.gt.f32.partialorder %v628, 0.0
        %vm668 = vcmp.gt.f32.partialorder %v559, 0.0
        %vm669 = vcmp.gt.f32.partialorder %v561, 0.0
        %vm670 = vcmp.gt.f32.partialorder %v632, 0.0
        %vm671 = vcmp.gt.f32.partialorder %v634, 0.0
        %vm672 = vcmp.gt.f32.partialorder %v563, 0.0
        %vm673 = vcmp.gt.f32.partialorder %v565, 0.0
        %vm674 = vcmp.gt.f32.partialorder %v636, 0.0
        %vm675 = vcmp.gt.f32.partialorder %v638, 0.0
        %vm676 = vcmp.gt.f32.partialorder %v569, 0.0
        %vm677 = vcmp.gt.f32.partialorder %v571, 0.0
        %vm678 = vcmp.gt.f32.partialorder %v642, 0.0
        %vm679 = vcmp.gt.f32.partialorder %v644, 0.0
        %vm680 = vcmp.gt.f32.partialorder %v573, 0.0
        %vm681 = vcmp.gt.f32.partialorder %v575, 0.0
        %vm682 = vcmp.gt.f32.partialorder %v646, 0.0
        %vm683 = vcmp.gt.f32.partialorder %v648, 0.0
        %vm684 = vcmp.gt.f32.partialorder %v579, 0.0
        %vm685 = vcmp.gt.f32.partialorder %v581, 0.0
        %vm686 = vcmp.gt.f32.partialorder %v652, 0.0
        %vm687 = vcmp.gt.f32.partialorder %v654, 0.0
        %vm688 = vcmp.gt.f32.partialorder %v583, 0.0
        %vm689 = vcmp.gt.f32.partialorder %v585, 0.0
        %vm690 = vcmp.gt.f32.partialorder %v656, 0.0
        %vm691 = vcmp.gt.f32.partialorder %v658, 0.0
        %v692 = vmin.f32 %v549, 0.0
        %v693 = vmin.f32 %v551, 0.0
        %v694 = vmin.f32 %v622, 0.0
        %v695 = vmin.f32 %v624, 0.0
        %v696 = vmin.f32 %v553, 0.0
        %v697 = vmin.f32 %v555, 0.0
        %v698 = vmin.f32 %v626, 0.0
        %v699 = vmin.f32 %v628, 0.0
        %v700 = vmin.f32 %v559, 0.0
        %v701 = vmin.f32 %v561, 0.0
        %v702 = vmin.f32 %v632, 0.0
        %v703 = vmin.f32 %v634, 0.0
        %v704 = vmin.f32 %v563, 0.0
        %v705 = vmin.f32 %v565, 0.0
        %v706 = vmin.f32 %v636, 0.0
        %v707 = vmin.f32 %v638, 0.0
        %v708 = vmin.f32 %v569, 0.0
        %v709 = vmin.f32 %v571, 0.0
        %v710 = vmin.f32 %v642, 0.0
        %v711 = vmin.f32 %v644, 0.0
        %v712 = vmin.f32 %v573, 0.0
        %v713 = vmin.f32 %v575, 0.0
        %v714 = vmin.f32 %v646, 0.0
        %v715 = vmin.f32 %v648, 0.0
        %v716 = vmin.f32 %v579, 0.0
        %v717 = vmin.f32 %v581, 0.0
        %v718 = vmin.f32 %v652, 0.0
        %v719 = vmin.f32 %v654, 0.0
        %v720 = vmin.f32 %v583, 0.0
        %v721 = vmin.f32 %v585, 0.0
        %v722 = vmin.f32 %v656, 0.0
        %v723 = vmin.f32 %v658, 0.0
        %v724 = vmul.f32 %v692, 1.442695
        %v725 = vpow.pop %v724
        %v726 = vmul.f32 %v693, 1.442695
        %v727 = vpow.pop %v726
        %v728 = vmul.f32 %v694, 1.442695
        %v729 = vpow.pop %v728
        %v730 = vmul.f32 %v695, 1.442695
        %v731 = vpow.pop %v730
        %v732 = vmul.f32 %v696, 1.442695
        %v733 = vpow.pop %v732
        %v734 = vmul.f32 %v697, 1.442695
        %v735 = vpow.pop %v734
        %v736 = vmul.f32 %v698, 1.442695
        %v737 = vpow.pop %v736
        %v738 = vmul.f32 %v699, 1.442695
        %v739 = vpow.pop %v738
        %v740 = vmul.f32 %v700, 1.442695
        %v741 = vpow.pop %v740
        %v742 = vmul.f32 %v701, 1.442695
        %v743 = vpow.pop %v742
        %v744 = vmul.f32 %v702, 1.442695
        %v745 = vpow.pop %v744
        %v746 = vmul.f32 %v703, 1.442695
        %v747 = vpow.pop %v746
        %v748 = vmul.f32 %v704, 1.442695
        %v749 = vpow.pop %v748
        %v750 = vmul.f32 %v705, 1.442695
        %v751 = vpow.pop %v750
        %v752 = vmul.f32 %v706, 1.442695
        %v753 = vpow.pop %v752
        %v754 = vmul.f32 %v707, 1.442695
        %v755 = vpow.pop %v754
        %v756 = vmul.f32 %v708, 1.442695
        %v757 = vpow.pop %v756
        %v758 = vmul.f32 %v709, 1.442695
        %v759 = vpow.pop %v758
        %v760 = vmul.f32 %v710, 1.442695
        %v761 = vpow.pop %v760
        %v762 = vmul.f32 %v711, 1.442695
        %v763 = vpow.pop %v762
        %v764 = vmul.f32 %v712, 1.442695
        %v765 = vpow.pop %v764
        %v766 = vmul.f32 %v713, 1.442695
        %v767 = vpow.pop %v766
        %v768 = vmul.f32 %v714, 1.442695
        %v769 = vpow.pop %v768
        %v770 = vmul.f32 %v715, 1.442695
        %v771 = vpow.pop %v770
        %v772 = vmul.f32 %v716, 1.442695
        %v773 = vpow.pop %v772
        %v774 = vmul.f32 %v717, 1.442695
        %v775 = vpow.pop %v774
        %v776 = vmul.f32 %v718, 1.442695
        %v777 = vpow.pop %v776
        %v778 = vmul.f32 %v719, 1.442695
        %v779 = vpow.pop %v778
        %v780 = vmul.f32 %v720, 1.442695
        %v781 = vpow.pop %v780
        %v782 = vmul.f32 %v721, 1.442695
        %v783 = vpow.pop %v782
        %v784 = vmul.f32 %v722, 1.442695
        %v785 = vpow.pop %v784
        %v786 = vmul.f32 %v723, 1.442695
        %v787 = vpow.pop %v786
        %v788 = vsub.f32 %v725, 1.0
        %v789 = vsub.f32 %v727, 1.0
        %v790 = vsub.f32 %v729, 1.0
        %v791 = vsub.f32 %v731, 1.0
        %v792 = vsub.f32 %v733, 1.0
        %v793 = vsub.f32 %v735, 1.0
        %v794 = vsub.f32 %v737, 1.0
        %v795 = vsub.f32 %v739, 1.0
        %v796 = vsub.f32 %v741, 1.0
        %v797 = vsub.f32 %v743, 1.0
        %v798 = vsub.f32 %v745, 1.0
        %v799 = vsub.f32 %v747, 1.0
        %v800 = vsub.f32 %v749, 1.0
        %v801 = vsub.f32 %v751, 1.0
        %v802 = vsub.f32 %v753, 1.0
        %v803 = vsub.f32 %v755, 1.0
        %v804 = vsub.f32 %v757, 1.0
        %v805 = vsub.f32 %v759, 1.0
        %v806 = vsub.f32 %v761, 1.0
        %v807 = vsub.f32 %v763, 1.0
        %v808 = vsub.f32 %v765, 1.0
        %v809 = vsub.f32 %v767, 1.0
        %v810 = vsub.f32 %v769, 1.0
        %v811 = vsub.f32 %v771, 1.0
        %v812 = vsub.f32 %v773, 1.0
        %v813 = vsub.f32 %v775, 1.0
        %v814 = vsub.f32 %v777, 1.0
        %v815 = vsub.f32 %v779, 1.0
        %v816 = vsub.f32 %v781, 1.0
        %v817 = vsub.f32 %v783, 1.0
        %v818 = vsub.f32 %v785, 1.0
        %v819 = vsub.f32 %v787, 1.0
        %v820 = vsel %vm660, %v549, %v788
        %v821 = vsel %vm661, %v551, %v789
        %v822 = vsel %vm662, %v622, %v790
        %v823 = vsel %vm663, %v624, %v791
        %v824 = vsel %vm664, %v553, %v792
        %v825 = vsel %vm665, %v555, %v793
        %v826 = vsel %vm666, %v626, %v794
        %v827 = vsel %vm667, %v628, %v795
        %v828 = vsel %vm668, %v559, %v796
        %v829 = vsel %vm669, %v561, %v797
        %v830 = vsel %vm670, %v632, %v798
        %v831 = vsel %vm671, %v634, %v799
        %v832 = vsel %vm672, %v563, %v800
        %v833 = vsel %vm673, %v565, %v801
        %v834 = vsel %vm674, %v636, %v802
        %v835 = vsel %vm675, %v638, %v803
        %v836 = vsel %vm676, %v569, %v804
        %v837 = vsel %vm677, %v571, %v805
        %v838 = vsel %vm678, %v642, %v806
        %v839 = vsel %vm679, %v644, %v807
        %v840 = vsel %vm680, %v573, %v808
        %v841 = vsel %vm681, %v575, %v809
        %v842 = vsel %vm682, %v646, %v810
        %v843 = vsel %vm683, %v648, %v811
        %v844 = vsel %vm684, %v579, %v812
        %v845 = vsel %vm685, %v581, %v813
        %v846 = vsel %vm686, %v652, %v814
        %v847 = vsel %vm687, %v654, %v815
        %v848 = vsel %vm688, %v583, %v816
        %v849 = vsel %vm689, %v585, %v817
        %v850 = vsel %vm690, %v656, %v818
        %v851 = vsel %vm691, %v658, %v819
        %852 = vrot.lane.b32.xlu0 %v820, 64
        %v853 = vpop.permute.xlu0 %852
        %854 = vrot.lane.b32.xlu0 %v824, 64
        %v855 = vpop.permute.xlu0 %854
        %856 = vrot.lane.b32.xlu0 %v828, 64
        %v857 = vpop.permute.xlu0 %856
        %858 = vrot.lane.b32.xlu0 %v832, 64
        %v859 = vpop.permute.xlu0 %858
        %860 = vrot.lane.b32.xlu0 %v836, 64
        %v861 = vpop.permute.xlu0 %860
        %862 = vrot.lane.b32.xlu0 %v840, 64
        %v863 = vpop.permute.xlu0 %862
        %864 = vrot.lane.b32.xlu0 %v844, 64
        %v865 = vpop.permute.xlu0 %864
        %866 = vrot.lane.b32.xlu0 %v848, 64
        %v867 = vpop.permute.xlu0 %866
        %868 = vrot.lane.b32.xlu0 %v821, 64
        %v869 = vpop.permute.xlu0 %868
        %870 = vrot.lane.b32.xlu0 %v825, 64
        %v871 = vpop.permute.xlu0 %870
        %872 = vrot.lane.b32.xlu0 %v829, 64
        %v873 = vpop.permute.xlu0 %872
        %874 = vrot.lane.b32.xlu0 %v833, 64
        %v875 = vpop.permute.xlu0 %874
        %876 = vrot.lane.b32.xlu0 %v837, 64
        %v877 = vpop.permute.xlu0 %876
        %878 = vrot.lane.b32.xlu0 %v841, 64
        %v879 = vpop.permute.xlu0 %878
        %880 = vrot.lane.b32.xlu0 %v845, 64
        %v881 = vpop.permute.xlu0 %880
        %882 = vrot.lane.b32.xlu0 %v849, 64
        %v883 = vpop.permute.xlu0 %882
        %884 = vrot.lane.b32.xlu0 %v822, 64
        %v885 = vpop.permute.xlu0 %884
        %886 = vrot.lane.b32.xlu0 %v826, 64
        %v887 = vpop.permute.xlu0 %886
        %888 = vrot.lane.b32.xlu0 %v830, 64
        %v889 = vpop.permute.xlu0 %888
        %890 = vrot.lane.b32.xlu0 %v834, 64
        %v891 = vpop.permute.xlu0 %890
        %892 = vrot.lane.b32.xlu0 %v838, 64
        %v893 = vpop.permute.xlu0 %892
        %894 = vrot.lane.b32.xlu0 %v842, 64
        %v895 = vpop.permute.xlu0 %894
        %896 = vrot.lane.b32.xlu0 %v846, 64
        %v897 = vpop.permute.xlu0 %896
        %898 = vrot.lane.b32.xlu0 %v850, 64
        %v899 = vpop.permute.xlu0 %898
        %900 = vrot.lane.b32.xlu0 %v823, 64
        %v901 = vpop.permute.xlu0 %900
        %902 = vrot.lane.b32.xlu0 %v827, 64
        %v903 = vpop.permute.xlu0 %902
        %904 = vrot.lane.b32.xlu0 %v831, 64
        %v905 = vpop.permute.xlu0 %904
        %906 = vrot.lane.b32.xlu0 %v835, 64
        %v907 = vpop.permute.xlu0 %906
        %908 = vrot.lane.b32.xlu0 %v839, 64
        %v909 = vpop.permute.xlu0 %908
        %910 = vrot.lane.b32.xlu0 %v843, 64
        %v911 = vpop.permute.xlu0 %910
        %912 = vrot.lane.b32.xlu0 %v847, 64
        %v913 = vpop.permute.xlu0 %912
        %914 = vrot.lane.b32.xlu0 %v851, 64
        %v915 = vpop.permute.xlu0 %914
        %v916 = vpack.c.bf16 %v824, %v820
        %v917 = vpack.c.bf16 %v832, %v828
        %v918 = vpack.c.bf16 %v840, %v836
        %v919 = vpack.c.bf16 %v848, %v844
        %v920 = vpack.c.bf16 %v855, %v853
        %v921 = vpack.c.bf16 %v859, %v857
        %v922 = vpack.c.bf16 %v863, %v861
        %v923 = vpack.c.bf16 %v867, %v865
        %v924 = vpack.c.bf16 %v825, %v821
        %v925 = vpack.c.bf16 %v833, %v829
        %v926 = vpack.c.bf16 %v841, %v837
        %v927 = vpack.c.bf16 %v849, %v845
        %v928 = vpack.c.bf16 %v871, %v869
        %v929 = vpack.c.bf16 %v875, %v873
        %v930 = vpack.c.bf16 %v879, %v877
        %v931 = vpack.c.bf16 %v883, %v881
        %v932 = vpack.c.bf16 %v826, %v822
        %v933 = vpack.c.bf16 %v834, %v830
        %v934 = vpack.c.bf16 %v842, %v838
        %v935 = vpack.c.bf16 %v850, %v846
        %v936 = vpack.c.bf16 %v887, %v885
        %v937 = vpack.c.bf16 %v891, %v889
        %v938 = vpack.c.bf16 %v895, %v893
        %v939 = vpack.c.bf16 %v899, %v897
        %v940 = vpack.c.bf16 %v827, %v823
        %v941 = vpack.c.bf16 %v835, %v831
        %v942 = vpack.c.bf16 %v843, %v839
        %v943 = vpack.c.bf16 %v851, %v847
        %v944 = vpack.c.bf16 %v903, %v901
        %v945 = vpack.c.bf16 %v907, %v905
        %v946 = vpack.c.bf16 %v911, %v909
        %v947 = vpack.c.bf16 %v915, %v913
        %v948 = vld [vmem:[%s3] sm:$0xff]
        %v949 = vld [vmem:[%s3 + $0x8] sm:$0xff]
        %v950 = vld [vmem:[%s3 + $0x10] sm:$0xff]
        %v951 = vld [vmem:[%s3 + $0x18] sm:$0xff]
        %v952 = vld [vmem:[%s3 + $0x20] sm:$0xff]
        %v953 = vld [vmem:[%s3 + $0x28] sm:$0xff]
        %v954 = vld [vmem:[%s3 + $0x30] sm:$0xff]
        %v955 = vld [vmem:[%s3 + $0x38] sm:$0xff]
        %v956 = vld [vmem:[%s3 + $0x40] sm:$0xff]
        %v957 = vld [vmem:[%s3 + $0x48] sm:$0xff]
        %v958 = vld [vmem:[%s3 + $0x50] sm:$0xff]
        %v959 = vld [vmem:[%s3 + $0x58] sm:$0xff]
        %v960 = vld [vmem:[%s3 + $0x60] sm:$0xff]
        %v961 = vld [vmem:[%s3 + $0x68] sm:$0xff]
        %v962 = vld [vmem:[%s3 + $0x70] sm:$0xff]
        %v963 = vld [vmem:[%s3 + $0x78] sm:$0xff]
        %v964 = vld [vmem:[%s3 + $0x80] sm:$0xff]
        %v965 = vld [vmem:[%s3 + $0x88] sm:$0xff]
        %v966 = vld [vmem:[%s3 + $0x90] sm:$0xff]
        %v967 = vld [vmem:[%s3 + $0x98] sm:$0xff]
        %v968 = vld [vmem:[%s3 + $0xa0] sm:$0xff]
        %v969 = vld [vmem:[%s3 + $0xa8] sm:$0xff]
        %v970 = vld [vmem:[%s3 + $0xb0] sm:$0xff]
        %v971 = vld [vmem:[%s3 + $0xb8] sm:$0xff]
        %v972 = vld [vmem:[%s3 + $0xc0] sm:$0xff]
        %v973 = vld [vmem:[%s3 + $0xc8] sm:$0xff]
        %v974 = vld [vmem:[%s3 + $0xd0] sm:$0xff]
        %v975 = vld [vmem:[%s3 + $0xd8] sm:$0xff]
        %v976 = vld [vmem:[%s3 + $0xe0] sm:$0xff]
        %v977 = vld [vmem:[%s3 + $0xe8] sm:$0xff]
        %v978 = vld [vmem:[%s3 + $0xf0] sm:$0xff]
        %v979 = vld [vmem:[%s3 + $0xf8] sm:$0xff]
        %v980 = vld [vmem:[%s4] sm:$0xff]
        %v981 = vld [vmem:[%s4 + $0x8] sm:$0xff]
        %v982 = vld [vmem:[%s4 + $0x10] sm:$0xff]
        %v983 = vld [vmem:[%s4 + $0x18] sm:$0xff]
        %v984 = vld [vmem:[%s4 + $0x20] sm:$0xff]
        %v985 = vld [vmem:[%s4 + $0x28] sm:$0xff]
        %v986 = vld [vmem:[%s4 + $0x30] sm:$0xff]
        %v987 = vld [vmem:[%s4 + $0x38] sm:$0xff]
        %v988 = vld [vmem:[%s4 + $0x40] sm:$0xff]
        %v989 = vld [vmem:[%s4 + $0x48] sm:$0xff]
        %v990 = vld [vmem:[%s4 + $0x50] sm:$0xff]
        %v991 = vld [vmem:[%s4 + $0x58] sm:$0xff]
        %v992 = vld [vmem:[%s4 + $0x60] sm:$0xff]
        %v993 = vld [vmem:[%s4 + $0x68] sm:$0xff]
        %v994 = vld [vmem:[%s4 + $0x70] sm:$0xff]
        %v995 = vld [vmem:[%s4 + $0x78] sm:$0xff]
        %997 = vset.pattern.permute.xlu0 32
        %998 = vperm.xlu0 %997, %v980
        %v999 = vpop.permute.xlu0 %998
        %1002 = vset.pattern.permute.xlu0 32
        %1003 = vperm.xlu0 %1002, %v981
        %v1004 = vpop.permute.xlu0 %1003
        %1007 = vset.pattern.permute.xlu0 32
        %1008 = vperm.xlu0 %1007, %v982
        %v1009 = vpop.permute.xlu0 %1008
        %1012 = vset.pattern.permute.xlu0 32
        %1013 = vperm.xlu0 %1012, %v983
        %v1014 = vpop.permute.xlu0 %1013
        %1017 = vset.pattern.permute.xlu0 32
        %1018 = vperm.xlu0 %1017, %v984
        %v1019 = vpop.permute.xlu0 %1018
        %1022 = vset.pattern.permute.xlu0 32
        %1023 = vperm.xlu0 %1022, %v985
        %v1024 = vpop.permute.xlu0 %1023
        %1027 = vset.pattern.permute.xlu0 32
        %1028 = vperm.xlu0 %1027, %v986
        %v1029 = vpop.permute.xlu0 %1028
        %1032 = vset.pattern.permute.xlu0 32
        %1033 = vperm.xlu0 %1032, %v987
        %v1034 = vpop.permute.xlu0 %1033
        %1037 = vset.pattern.permute.xlu0 32
        %1038 = vperm.xlu0 %1037, %v988
        %v1039 = vpop.permute.xlu0 %1038
        %1042 = vset.pattern.permute.xlu0 32
        %1043 = vperm.xlu0 %1042, %v989
        %v1044 = vpop.permute.xlu0 %1043
        %1047 = vset.pattern.permute.xlu0 32
        %1048 = vperm.xlu0 %1047, %v990
        %v1049 = vpop.permute.xlu0 %1048
        %1052 = vset.pattern.permute.xlu0 32
        %1053 = vperm.xlu0 %1052, %v991
        %v1054 = vpop.permute.xlu0 %1053
        %1057 = vset.pattern.permute.xlu0 32
        %1058 = vperm.xlu0 %1057, %v992
        %v1059 = vpop.permute.xlu0 %1058
        %1062 = vset.pattern.permute.xlu0 32
        %1063 = vperm.xlu0 %1062, %v993
        %v1064 = vpop.permute.xlu0 %1063
        %1067 = vset.pattern.permute.xlu0 32
        %1068 = vperm.xlu0 %1067, %v994
        %v1069 = vpop.permute.xlu0 %1068
        %1072 = vset.pattern.permute.xlu0 32
        %1073 = vperm.xlu0 %1072, %v995
        %v1074 = vpop.permute.xlu0 %1073
        %v1108 = vunpack.c.l.b16 %v948
        %v1109 = vunpack.c.h.b16 %v948
        %v1110 = vunpack.c.l.b16 %v949
        %v1111 = vunpack.c.h.b16 %v949
        %v1112 = vunpack.c.l.b16 %v950
        %v1113 = vunpack.c.h.b16 %v950
        %v1114 = vunpack.c.l.b16 %v951
        %v1115 = vunpack.c.h.b16 %v951
        %v1116 = vunpack.c.l.b16 %v952
        %v1117 = vunpack.c.h.b16 %v952
        %v1118 = vunpack.c.l.b16 %v953
        %v1119 = vunpack.c.h.b16 %v953
        %v1120 = vunpack.c.l.b16 %v954
        %v1121 = vunpack.c.h.b16 %v954
        %v1122 = vunpack.c.l.b16 %v955
        %v1123 = vunpack.c.h.b16 %v955
        %v1124 = vunpack.c.l.b16 %v956
        %v1125 = vunpack.c.h.b16 %v956
        %v1126 = vunpack.c.l.b16 %v957
        %v1127 = vunpack.c.h.b16 %v957
        %v1128 = vunpack.c.l.b16 %v958
        %v1129 = vunpack.c.h.b16 %v958
        %v1130 = vunpack.c.l.b16 %v959
        %v1131 = vunpack.c.h.b16 %v959
        %v1132 = vunpack.c.l.b16 %v960
        %v1133 = vunpack.c.h.b16 %v960
        %v1134 = vunpack.c.l.b16 %v961
        %v1135 = vunpack.c.h.b16 %v961
        %v1136 = vunpack.c.l.b16 %v962
        %v1137 = vunpack.c.h.b16 %v962
        %v1138 = vunpack.c.l.b16 %v963
        %v1139 = vunpack.c.h.b16 %v963
        %v1140 = vunpack.c.l.b16 %v964
        %v1141 = vunpack.c.h.b16 %v964
        %v1142 = vunpack.c.l.b16 %v965
        %v1143 = vunpack.c.h.b16 %v965
        %v1144 = vunpack.c.l.b16 %v966
        %v1145 = vunpack.c.h.b16 %v966
        %v1146 = vunpack.c.l.b16 %v967
        %v1147 = vunpack.c.h.b16 %v967
        %v1148 = vunpack.c.l.b16 %v968
        %v1149 = vunpack.c.h.b16 %v968
        %v1150 = vunpack.c.l.b16 %v969
        %v1151 = vunpack.c.h.b16 %v969
        %v1152 = vunpack.c.l.b16 %v970
        %v1153 = vunpack.c.h.b16 %v970
        %v1154 = vunpack.c.l.b16 %v971
        %v1155 = vunpack.c.h.b16 %v971
        %v1156 = vunpack.c.l.b16 %v972
        %v1157 = vunpack.c.h.b16 %v972
        %v1158 = vunpack.c.l.b16 %v973
        %v1159 = vunpack.c.h.b16 %v973
        %v1160 = vunpack.c.l.b16 %v974
        %v1161 = vunpack.c.h.b16 %v974
        %v1162 = vunpack.c.l.b16 %v975
        %v1163 = vunpack.c.h.b16 %v975
        %v1164 = vunpack.c.l.b16 %v976
        %v1165 = vunpack.c.h.b16 %v976
        %v1166 = vunpack.c.l.b16 %v977
        %v1167 = vunpack.c.h.b16 %v977
        %v1168 = vunpack.c.l.b16 %v978
        %v1169 = vunpack.c.h.b16 %v978
        %v1170 = vunpack.c.l.b16 %v979
        %v1171 = vunpack.c.h.b16 %v979
        %v1172 = vpack.c.b16 %v1112, %v1108
        %v1173 = vpack.c.b16 %v1113, %v1109
        %v1174 = vpack.c.b16 %v1114, %v1110
        %v1175 = vpack.c.b16 %v1115, %v1111
        %v1176 = vpack.c.b16 %v1120, %v1116
        %v1177 = vpack.c.b16 %v1121, %v1117
        %v1178 = vpack.c.b16 %v1122, %v1118
        %v1179 = vpack.c.b16 %v1123, %v1119
        %v1180 = vpack.c.b16 %v1128, %v1124
        %v1181 = vpack.c.b16 %v1129, %v1125
        %v1182 = vpack.c.b16 %v1130, %v1126
        %v1183 = vpack.c.b16 %v1131, %v1127
        %v1184 = vpack.c.b16 %v1136, %v1132
        %v1185 = vpack.c.b16 %v1137, %v1133
        %v1186 = vpack.c.b16 %v1138, %v1134
        %v1187 = vpack.c.b16 %v1139, %v1135
        %v1188 = vpack.c.b16 %v1144, %v1140
        %v1189 = vpack.c.b16 %v1145, %v1141
        %v1190 = vpack.c.b16 %v1146, %v1142
        %v1191 = vpack.c.b16 %v1147, %v1143
        %v1192 = vpack.c.b16 %v1152, %v1148
        %v1193 = vpack.c.b16 %v1153, %v1149
        %v1194 = vpack.c.b16 %v1154, %v1150
        %v1195 = vpack.c.b16 %v1155, %v1151
        %v1196 = vpack.c.b16 %v1160, %v1156
        %v1197 = vpack.c.b16 %v1161, %v1157
        %v1198 = vpack.c.b16 %v1162, %v1158
        %v1199 = vpack.c.b16 %v1163, %v1159
        %v1200 = vpack.c.b16 %v1168, %v1164
        %v1201 = vpack.c.b16 %v1169, %v1165
        %v1202 = vpack.c.b16 %v1170, %v1166
        %v1203 = vpack.c.b16 %v1171, %v1167
        %1236 = vmatprep.subr.bf16.mxu0 0
        %1237 = vmatpush1.bf16.msra.mxu0 %v916
        %1238 = vmatprep.subr.bf16.mxu0 0
        %1239 = vmatpush1.bf16.msra.mxu0 %v917
        %1240 = vmatprep.subr.bf16.mxu0 0
        %1241 = vmatpush1.bf16.msra.mxu0 %v918
        %1242 = vmatprep.subr.bf16.mxu0 0
        %1243 = vmatpush1.bf16.msra.mxu0 %v919
        %1244 = vmatprep.subr.bf16.mxu0 0
        %1245 = vmatpush1.bf16.msra.mxu0 %v920
        %1246 = vmatprep.subr.bf16.mxu0 0
        %1247 = vmatpush1.bf16.msra.mxu0 %v921
        %1248 = vmatprep.subr.bf16.mxu0 0
        %1249 = vmatpush1.bf16.msra.mxu0 %v922
        %1250 = vmatprep.subr.bf16.mxu0 0
        %1251 = vmatpush1.bf16.msra.mxu0 %v923
        %1252 = vmatprep.subr.bf16.mxu0 0
        %1253 = vmatpush1.bf16.msra.mxu0 %v924
        %1254 = vmatprep.subr.bf16.mxu0 0
        %1255 = vmatpush1.bf16.msra.mxu0 %v925
        %1256 = vmatprep.subr.bf16.mxu0 0
        %1257 = vmatpush1.bf16.msra.mxu0 %v926
        %1258 = vmatprep.subr.bf16.mxu0 0
        %1259 = vmatpush1.bf16.msra.mxu0 %v927
        %1260 = vmatprep.subr.bf16.mxu0 0
        %1261 = vmatpush1.bf16.msra.mxu0 %v928
        %1262 = vmatprep.subr.bf16.mxu0 0
        %1263 = vmatpush1.bf16.msra.mxu0 %v929
        %1264 = vmatprep.subr.bf16.mxu0 0
        %1265 = vmatpush1.bf16.msra.mxu0 %v930
        %1266 = vmatprep.subr.bf16.mxu0 0
        %1267 = vmatpush1.bf16.msra.mxu0 %v931
        %1268 = vmatprep.mubr.bf16.mxu0 %v1173
        %1269 = vmatmul.mubr.bf16.gmra.mrb[0].mxu0 %v1172
        %v1270 = vpop.f32.mrb[0].mxu0
        %v1271 = vadd.f32 %v999, %v1270
        %v1272 = vpop.f32.mrb[0].mxu0
        %v1273 = vpop.f32.mrb[0].mxu0
        %v1274 = vadd.f32 %v1004, %v1273
        %v1275 = vpop.f32.mrb[0].mxu0
        %1276 = vmatprep.mubr.bf16.mxu0 %v1177
        %1277 = vmatmul.mubr.bf16.gmra.mrb[0].mxu0 %v1176
        %v1278 = vpop.f32.mrb[0].mxu0
        %v1279 = vadd.f32 %v1009, %v1278
        %v1280 = vpop.f32.mrb[0].mxu0
        %v1281 = vpop.f32.mrb[0].mxu0
        %v1282 = vadd.f32 %v1014, %v1281
        %v1283 = vpop.f32.mrb[0].mxu0
        %1284 = vmatprep.mubr.bf16.mxu0 %v1181
        %1285 = vmatmul.mubr.bf16.gmra.mrb[0].mxu0 %v1180
        %v1286 = vpop.f32.mrb[0].mxu0
        %v1287 = vadd.f32 %v1019, %v1286
        %v1288 = vpop.f32.mrb[0].mxu0
        %v1289 = vpop.f32.mrb[0].mxu0
        %v1290 = vadd.f32 %v1024, %v1289
        %v1291 = vpop.f32.mrb[0].mxu0
        %1292 = vmatprep.mubr.bf16.mxu0 %v1185
        %1293 = vmatmul.mubr.bf16.gmra.mrb[0].mxu0 %v1184
        %v1294 = vpop.f32.mrb[0].mxu0
        %v1295 = vadd.f32 %v1029, %v1294
        %v1296 = vpop.f32.mrb[0].mxu0
        %v1297 = vpop.f32.mrb[0].mxu0
        %v1298 = vadd.f32 %v1034, %v1297
        %v1299 = vpop.f32.mrb[0].mxu0
        %1300 = vmatprep.mubr.bf16.mxu0 %v1189
        %1301 = vmatmul.mubr.bf16.gmra.mrb[0].mxu0 %v1188
        %v1302 = vpop.f32.mrb[0].mxu0
        %v1303 = vadd.f32 %v1039, %v1302
        %v1304 = vpop.f32.mrb[0].mxu0
        %v1305 = vpop.f32.mrb[0].mxu0
        %v1306 = vadd.f32 %v1044, %v1305
        %v1307 = vpop.f32.mrb[0].mxu0
        %1308 = vmatprep.mubr.bf16.mxu0 %v1193
        %1309 = vmatmul.mubr.bf16.gmra.mrb[0].mxu0 %v1192
        %v1310 = vpop.f32.mrb[0].mxu0
        %v1311 = vadd.f32 %v1049, %v1310
        %v1312 = vpop.f32.mrb[0].mxu0
        %v1313 = vpop.f32.mrb[0].mxu0
        %v1314 = vadd.f32 %v1054, %v1313
        %v1315 = vpop.f32.mrb[0].mxu0
        %1316 = vmatprep.mubr.bf16.mxu0 %v1197
        %1317 = vmatmul.mubr.bf16.gmra.mrb[0].mxu0 %v1196
        %v1318 = vpop.f32.mrb[0].mxu0
        %v1319 = vadd.f32 %v1059, %v1318
        %v1320 = vpop.f32.mrb[0].mxu0
        %v1321 = vpop.f32.mrb[0].mxu0
        %v1322 = vadd.f32 %v1064, %v1321
        %v1323 = vpop.f32.mrb[0].mxu0
        %1324 = vmatprep.mubr.bf16.mxu0 %v1201
        %1325 = vmatmul.mubr.bf16.gmra.mrb[0].mxu0 %v1200
        %v1326 = vpop.f32.mrb[0].mxu0
        %v1327 = vadd.f32 %v1069, %v1326
        %v1328 = vpop.f32.mrb[0].mxu0
        %v1329 = vpop.f32.mrb[0].mxu0
        %v1330 = vadd.f32 %v1074, %v1329
        %v1331 = vpop.f32.mrb[0].mxu0
        %1332 = vdwg.mxu0
        %1333 = vmatprep.subr.bf16.mxu0 0
        %1334 = vmatpush1.bf16.msra.mxu0 %v932
        %1335 = vmatprep.subr.bf16.mxu0 0
        %1336 = vmatpush1.bf16.msra.mxu0 %v933
        %1337 = vmatprep.subr.bf16.mxu0 0
        %1338 = vmatpush1.bf16.msra.mxu0 %v934
        %1339 = vmatprep.subr.bf16.mxu0 0
        %1340 = vmatpush1.bf16.msra.mxu0 %v935
        %1341 = vmatprep.subr.bf16.mxu0 0
        %1342 = vmatpush1.bf16.msra.mxu0 %v936
        %1343 = vmatprep.subr.bf16.mxu0 0
        %1344 = vmatpush1.bf16.msra.mxu0 %v937
        %1345 = vmatprep.subr.bf16.mxu0 0
        %1346 = vmatpush1.bf16.msra.mxu0 %v938
        %1347 = vmatprep.subr.bf16.mxu0 0
        %1348 = vmatpush1.bf16.msra.mxu0 %v939
        %1349 = vmatprep.subr.bf16.mxu0 0
        %1350 = vmatpush1.bf16.msra.mxu0 %v940
        %1351 = vmatprep.subr.bf16.mxu0 0
        %1352 = vmatpush1.bf16.msra.mxu0 %v941
        %1353 = vmatprep.subr.bf16.mxu0 0
        %1354 = vmatpush1.bf16.msra.mxu0 %v942
        %1355 = vmatprep.subr.bf16.mxu0 0
        %1356 = vmatpush1.bf16.msra.mxu0 %v943
        %1357 = vmatprep.subr.bf16.mxu0 0
        %1358 = vmatpush1.bf16.msra.mxu0 %v944
        %1359 = vmatprep.subr.bf16.mxu0 0
        %1360 = vmatpush1.bf16.msra.mxu0 %v945
        %1361 = vmatprep.subr.bf16.mxu0 0
        %1362 = vmatpush1.bf16.msra.mxu0 %v946
        %1363 = vmatprep.subr.bf16.mxu0 0
        %1364 = vmatpush1.bf16.msra.mxu0 %v947
        %1365 = vmatprep.mubr.bf16.mxu0 %v1175
        %1366 = vmatmul.mubr.bf16.gmra.mrb[0].mxu0 %v1174
        %v1367 = vpop.f32.mrb[0].mxu0
        %v1368 = vadd.f32 %v1271, %v1367
        %v1369 = vpop.f32.mrb[0].mxu0
        %v1370 = vpop.f32.mrb[0].mxu0
        %v1371 = vadd.f32 %v1274, %v1370
        %v1372 = vpop.f32.mrb[0].mxu0
        %1373 = vmatprep.mubr.bf16.mxu0 %v1179
        %1374 = vmatmul.mubr.bf16.gmra.mrb[0].mxu0 %v1178
        %v1375 = vpop.f32.mrb[0].mxu0
        %v1376 = vadd.f32 %v1279, %v1375
        %v1377 = vpop.f32.mrb[0].mxu0
        %v1378 = vpop.f32.mrb[0].mxu0
        %v1379 = vadd.f32 %v1282, %v1378
        %v1380 = vpop.f32.mrb[0].mxu0
        %1381 = vmatprep.mubr.bf16.mxu0 %v1183
        %1382 = vmatmul.mubr.bf16.gmra.mrb[0].mxu0 %v1182
        %v1383 = vpop.f32.mrb[0].mxu0
        %v1384 = vadd.f32 %v1287, %v1383
        %v1385 = vpop.f32.mrb[0].mxu0
        %v1386 = vpop.f32.mrb[0].mxu0
        %v1387 = vadd.f32 %v1290, %v1386
        %v1388 = vpop.f32.mrb[0].mxu0
        %1389 = vmatprep.mubr.bf16.mxu0 %v1187
        %1390 = vmatmul.mubr.bf16.gmra.mrb[0].mxu0 %v1186
        %v1391 = vpop.f32.mrb[0].mxu0
        %v1392 = vadd.f32 %v1295, %v1391
        %v1393 = vpop.f32.mrb[0].mxu0
        %v1394 = vpop.f32.mrb[0].mxu0
        %v1395 = vadd.f32 %v1298, %v1394
        %v1396 = vpop.f32.mrb[0].mxu0
        %1397 = vmatprep.mubr.bf16.mxu0 %v1191
        %1398 = vmatmul.mubr.bf16.gmra.mrb[0].mxu0 %v1190
        %v1399 = vpop.f32.mrb[0].mxu0
        %v1400 = vadd.f32 %v1303, %v1399
        %v1401 = vpop.f32.mrb[0].mxu0
        %v1402 = vpop.f32.mrb[0].mxu0
        %v1403 = vadd.f32 %v1306, %v1402
        %v1404 = vpop.f32.mrb[0].mxu0
        %1405 = vmatprep.mubr.bf16.mxu0 %v1195
        %1406 = vmatmul.mubr.bf16.gmra.mrb[0].mxu0 %v1194
        %v1407 = vpop.f32.mrb[0].mxu0
        %v1408 = vadd.f32 %v1311, %v1407
        %v1409 = vpop.f32.mrb[0].mxu0
        %v1410 = vpop.f32.mrb[0].mxu0
        %v1411 = vadd.f32 %v1314, %v1410
        %v1412 = vpop.f32.mrb[0].mxu0
        %1413 = vmatprep.mubr.bf16.mxu0 %v1199
        %1414 = vmatmul.mubr.bf16.gmra.mrb[0].mxu0 %v1198
        %v1415 = vpop.f32.mrb[0].mxu0
        %v1416 = vadd.f32 %v1319, %v1415
        %v1417 = vpop.f32.mrb[0].mxu0
        %v1418 = vpop.f32.mrb[0].mxu0
        %v1419 = vadd.f32 %v1322, %v1418
        %v1420 = vpop.f32.mrb[0].mxu0
        %1421 = vmatprep.mubr.bf16.mxu0 %v1203
        %1422 = vmatmul.mubr.bf16.gmra.mrb[0].mxu0 %v1202
        %v1423 = vpop.f32.mrb[0].mxu0
        %v1424 = vadd.f32 %v1327, %v1423
        %v1425 = vpop.f32.mrb[0].mxu0
        %v1426 = vpop.f32.mrb[0].mxu0
        %v1427 = vadd.f32 %v1330, %v1426
        %v1428 = vpop.f32.mrb[0].mxu0
        %1429 = vdwg.mxu0
        %vm1430 = vcmp.gt.f32.partialorder %v1368, 0.0
        %vm1431 = vcmp.gt.f32.partialorder %v1371, 0.0
        %vm1432 = vcmp.gt.f32.partialorder %v1376, 0.0
        %vm1433 = vcmp.gt.f32.partialorder %v1379, 0.0
        %vm1434 = vcmp.gt.f32.partialorder %v1384, 0.0
        %vm1435 = vcmp.gt.f32.partialorder %v1387, 0.0
        %vm1436 = vcmp.gt.f32.partialorder %v1392, 0.0
        %vm1437 = vcmp.gt.f32.partialorder %v1395, 0.0
        %vm1438 = vcmp.gt.f32.partialorder %v1400, 0.0
        %vm1439 = vcmp.gt.f32.partialorder %v1403, 0.0
        %vm1440 = vcmp.gt.f32.partialorder %v1408, 0.0
        %vm1441 = vcmp.gt.f32.partialorder %v1411, 0.0
        %vm1442 = vcmp.gt.f32.partialorder %v1416, 0.0
        %vm1443 = vcmp.gt.f32.partialorder %v1419, 0.0
        %vm1444 = vcmp.gt.f32.partialorder %v1424, 0.0
        %vm1445 = vcmp.gt.f32.partialorder %v1427, 0.0
        %v1446 = vmin.f32 %v1368, 0.0
        %v1447 = vmin.f32 %v1371, 0.0
        %v1448 = vmin.f32 %v1376, 0.0
        %v1449 = vmin.f32 %v1379, 0.0
        %v1450 = vmin.f32 %v1384, 0.0
        %v1451 = vmin.f32 %v1387, 0.0
        %v1452 = vmin.f32 %v1392, 0.0
        %v1453 = vmin.f32 %v1395, 0.0
        %v1454 = vmin.f32 %v1400, 0.0
        %v1455 = vmin.f32 %v1403, 0.0
        %v1456 = vmin.f32 %v1408, 0.0
        %v1457 = vmin.f32 %v1411, 0.0
        %v1458 = vmin.f32 %v1416, 0.0
        %v1459 = vmin.f32 %v1419, 0.0
        %v1460 = vmin.f32 %v1424, 0.0
        %v1461 = vmin.f32 %v1427, 0.0
        %v1462 = vmul.f32 %v1446, 1.442695
        %v1463 = vpow.pop %v1462
        %v1464 = vmul.f32 %v1447, 1.442695
        %v1465 = vpow.pop %v1464
        %v1466 = vmul.f32 %v1448, 1.442695
        %v1467 = vpow.pop %v1466
        %v1468 = vmul.f32 %v1449, 1.442695
        %v1469 = vpow.pop %v1468
        %v1470 = vmul.f32 %v1450, 1.442695
        %v1471 = vpow.pop %v1470
        %v1472 = vmul.f32 %v1451, 1.442695
        %v1473 = vpow.pop %v1472
        %v1474 = vmul.f32 %v1452, 1.442695
        %v1475 = vpow.pop %v1474
        %v1476 = vmul.f32 %v1453, 1.442695
        %v1477 = vpow.pop %v1476
        %v1478 = vmul.f32 %v1454, 1.442695
        %v1479 = vpow.pop %v1478
        %v1480 = vmul.f32 %v1455, 1.442695
        %v1481 = vpow.pop %v1480
        %v1482 = vmul.f32 %v1456, 1.442695
        %v1483 = vpow.pop %v1482
        %v1484 = vmul.f32 %v1457, 1.442695
        %v1485 = vpow.pop %v1484
        %v1486 = vmul.f32 %v1458, 1.442695
        %v1487 = vpow.pop %v1486
        %v1488 = vmul.f32 %v1459, 1.442695
        %v1489 = vpow.pop %v1488
        %v1490 = vmul.f32 %v1460, 1.442695
        %v1491 = vpow.pop %v1490
        %v1492 = vmul.f32 %v1461, 1.442695
        %v1493 = vpow.pop %v1492
        %v1494 = vsub.f32 %v1463, 1.0
        %v1495 = vsub.f32 %v1465, 1.0
        %v1496 = vsub.f32 %v1467, 1.0
        %v1497 = vsub.f32 %v1469, 1.0
        %v1498 = vsub.f32 %v1471, 1.0
        %v1499 = vsub.f32 %v1473, 1.0
        %v1500 = vsub.f32 %v1475, 1.0
        %v1501 = vsub.f32 %v1477, 1.0
        %v1502 = vsub.f32 %v1479, 1.0
        %v1503 = vsub.f32 %v1481, 1.0
        %v1504 = vsub.f32 %v1483, 1.0
        %v1505 = vsub.f32 %v1485, 1.0
        %v1506 = vsub.f32 %v1487, 1.0
        %v1507 = vsub.f32 %v1489, 1.0
        %v1508 = vsub.f32 %v1491, 1.0
        %v1509 = vsub.f32 %v1493, 1.0
        %v1510 = vsel %vm1430, %v1368, %v1494
        %v1511 = vsel %vm1431, %v1371, %v1495
        %v1512 = vsel %vm1432, %v1376, %v1496
        %v1513 = vsel %vm1433, %v1379, %v1497
        %v1514 = vsel %vm1434, %v1384, %v1498
        %v1515 = vsel %vm1435, %v1387, %v1499
        %v1516 = vsel %vm1436, %v1392, %v1500
        %v1517 = vsel %vm1437, %v1395, %v1501
        %v1518 = vsel %vm1438, %v1400, %v1502
        %v1519 = vsel %vm1439, %v1403, %v1503
        %v1520 = vsel %vm1440, %v1408, %v1504
        %v1521 = vsel %vm1441, %v1411, %v1505
        %v1522 = vsel %vm1442, %v1416, %v1506
        %v1523 = vsel %vm1443, %v1419, %v1507
        %v1524 = vsel %vm1444, %v1424, %v1508
        %v1525 = vsel %vm1445, %v1427, %v1509
        %v1526 = vlaneseq
        %v1527 = vand.u32 %v1526, 127
        %vm1528 = vcmp.lt.s32.totalorder %v1527, 64
        %v1529 = vsel %vm1528, %v1510, 0.0
        %v1530 = vsel %vm1528, %v1511, 0.0
        %v1531 = vsel %vm1528, %v1512, 0.0
        %v1532 = vsel %vm1528, %v1513, 0.0
        %v1533 = vsel %vm1528, %v1514, 0.0
        %v1534 = vsel %vm1528, %v1515, 0.0
        %v1535 = vsel %vm1528, %v1516, 0.0
        %v1536 = vsel %vm1528, %v1517, 0.0
        %v1537 = vsel %vm1528, %v1518, 0.0
        %v1538 = vsel %vm1528, %v1519, 0.0
        %v1539 = vsel %vm1528, %v1520, 0.0
        %v1540 = vsel %vm1528, %v1521, 0.0
        %v1541 = vsel %vm1528, %v1522, 0.0
        %v1542 = vsel %vm1528, %v1523, 0.0
        %v1543 = vsel %vm1528, %v1524, 0.0
        %v1544 = vsel %vm1528, %v1525, 0.0
        %1545 = vrot.lane.b32.xlu0 %v1529, 7
        %v1546 = vpop.permute.xlu0 %1545
        %1547 = vrot.lane.b32.xlu0 %v1530, 7
        %v1548 = vpop.permute.xlu0 %1547
        %1549 = vrot.lane.b32.xlu0 %v1531, 7
        %v1550 = vpop.permute.xlu0 %1549
        %1551 = vrot.lane.b32.xlu0 %v1532, 7
        %v1552 = vpop.permute.xlu0 %1551
        %1553 = vrot.lane.b32.xlu0 %v1533, 7
        %v1554 = vpop.permute.xlu0 %1553
        %1555 = vrot.lane.b32.xlu0 %v1534, 7
        %v1556 = vpop.permute.xlu0 %1555
        %1557 = vrot.lane.b32.xlu0 %v1535, 7
        %v1558 = vpop.permute.xlu0 %1557
        %1559 = vrot.lane.b32.xlu0 %v1536, 7
        %v1560 = vpop.permute.xlu0 %1559
        %1561 = vrot.lane.b32.xlu0 %v1537, 7
        %v1562 = vpop.permute.xlu0 %1561
        %1563 = vrot.lane.b32.xlu0 %v1538, 7
        %v1564 = vpop.permute.xlu0 %1563
        %1565 = vrot.lane.b32.xlu0 %v1539, 7
        %v1566 = vpop.permute.xlu0 %1565
        %1567 = vrot.lane.b32.xlu0 %v1540, 7
        %v1568 = vpop.permute.xlu0 %1567
        %1569 = vrot.lane.b32.xlu0 %v1541, 7
        %v1570 = vpop.permute.xlu0 %1569
        %1571 = vrot.lane.b32.xlu0 %v1542, 7
        %v1572 = vpop.permute.xlu0 %1571
        %1573 = vrot.lane.b32.xlu0 %v1543, 7
        %v1574 = vpop.permute.xlu0 %1573
        %1575 = vrot.lane.b32.xlu0 %v1544, 7
        %v1576 = vpop.permute.xlu0 %1575
        %1577 = vset.pattern.permute.xlu0 0
        %1578 = vperm.xlu0 %1577, %v980
        %v1579 = vpop.permute.xlu0 %1578
        %1581 = vset.pattern.permute.xlu0 0
        %1582 = vperm.xlu0 %1581, %v981
        %v1583 = vpop.permute.xlu0 %1582
        %1585 = vset.pattern.permute.xlu0 0
        %1586 = vperm.xlu0 %1585, %v982
        %v1587 = vpop.permute.xlu0 %1586
        %1589 = vset.pattern.permute.xlu0 0
        %1590 = vperm.xlu0 %1589, %v983
        %v1591 = vpop.permute.xlu0 %1590
        %1593 = vset.pattern.permute.xlu0 0
        %1594 = vperm.xlu0 %1593, %v984
        %v1595 = vpop.permute.xlu0 %1594
        %1597 = vset.pattern.permute.xlu0 0
        %1598 = vperm.xlu0 %1597, %v985
        %v1599 = vpop.permute.xlu0 %1598
        %1601 = vset.pattern.permute.xlu0 0
        %1602 = vperm.xlu0 %1601, %v986
        %v1603 = vpop.permute.xlu0 %1602
        %1605 = vset.pattern.permute.xlu0 0
        %1606 = vperm.xlu0 %1605, %v987
        %v1607 = vpop.permute.xlu0 %1606
        %1609 = vset.pattern.permute.xlu0 0
        %1610 = vperm.xlu0 %1609, %v988
        %v1611 = vpop.permute.xlu0 %1610
        %1613 = vset.pattern.permute.xlu0 0
        %1614 = vperm.xlu0 %1613, %v989
        %v1615 = vpop.permute.xlu0 %1614
        %1617 = vset.pattern.permute.xlu0 0
        %1618 = vperm.xlu0 %1617, %v990
        %v1619 = vpop.permute.xlu0 %1618
        %1621 = vset.pattern.permute.xlu0 0
        %1622 = vperm.xlu0 %1621, %v991
        %v1623 = vpop.permute.xlu0 %1622
        %1625 = vset.pattern.permute.xlu0 0
        %1626 = vperm.xlu0 %1625, %v992
        %v1627 = vpop.permute.xlu0 %1626
        %1629 = vset.pattern.permute.xlu0 0
        %1630 = vperm.xlu0 %1629, %v993
        %v1631 = vpop.permute.xlu0 %1630
        %1633 = vset.pattern.permute.xlu0 0
        %1634 = vperm.xlu0 %1633, %v994
        %v1635 = vpop.permute.xlu0 %1634
        %1637 = vset.pattern.permute.xlu0 0
        %1638 = vperm.xlu0 %1637, %v995
        %v1639 = vpop.permute.xlu0 %1638
        %v1641 = vmul.f32 %v1579, %v1546
        %v1642 = vmul.f32 %v1583, %v1548
        %v1643 = vmul.f32 %v1587, %v1550
        %v1644 = vmul.f32 %v1591, %v1552
        %v1645 = vmul.f32 %v1595, %v1554
        %v1646 = vmul.f32 %v1599, %v1556
        %v1647 = vmul.f32 %v1603, %v1558
        %v1648 = vmul.f32 %v1607, %v1560
        %v1649 = vmul.f32 %v1611, %v1562
        %v1650 = vmul.f32 %v1615, %v1564
        %v1651 = vmul.f32 %v1619, %v1566
        %v1652 = vmul.f32 %v1623, %v1568
        %v1653 = vmul.f32 %v1627, %v1570
        %v1654 = vmul.f32 %v1631, %v1572
        %v1655 = vmul.f32 %v1635, %v1574
        %v1656 = vmul.f32 %v1639, %v1576
        %v1657 = vadd.f32 %v1641, 0.0
        %v1658 = vadd.f32 %v1642, 0.0
        %v1659 = vadd.f32 %v1643, 0.0
        %v1660 = vadd.f32 %v1644, 0.0
        %v1661 = vadd.f32 %v1645, 0.0
        %v1662 = vadd.f32 %v1646, 0.0
        %v1663 = vadd.f32 %v1647, 0.0
        %v1664 = vadd.f32 %v1648, 0.0
        %v1665 = vadd.f32 %v1649, 0.0
        %v1666 = vadd.f32 %v1650, 0.0
        %v1667 = vadd.f32 %v1651, 0.0
        %v1668 = vadd.f32 %v1652, 0.0
        %v1669 = vadd.f32 %v1653, 0.0
        %v1670 = vadd.f32 %v1654, 0.0
        %v1671 = vadd.f32 %v1655, 0.0
        %v1672 = vadd.f32 %v1656, 0.0
        %1673 = vset.pattern.permute.xlu0 16
        %1674 = vperm.xlu0 %1673, %v980
        %v1675 = vpop.permute.xlu0 %1674
        %1677 = vset.pattern.permute.xlu0 16
        %1678 = vperm.xlu0 %1677, %v981
        %v1679 = vpop.permute.xlu0 %1678
        %1681 = vset.pattern.permute.xlu0 16
        %1682 = vperm.xlu0 %1681, %v982
        %v1683 = vpop.permute.xlu0 %1682
        %1685 = vset.pattern.permute.xlu0 16
        %1686 = vperm.xlu0 %1685, %v983
        %v1687 = vpop.permute.xlu0 %1686
        %1689 = vset.pattern.permute.xlu0 16
        %1690 = vperm.xlu0 %1689, %v984
        %v1691 = vpop.permute.xlu0 %1690
        %1693 = vset.pattern.permute.xlu0 16
        %1694 = vperm.xlu0 %1693, %v985
        %v1695 = vpop.permute.xlu0 %1694
        %1697 = vset.pattern.permute.xlu0 16
        %1698 = vperm.xlu0 %1697, %v986
        %v1699 = vpop.permute.xlu0 %1698
        %1701 = vset.pattern.permute.xlu0 16
        %1702 = vperm.xlu0 %1701, %v987
        %v1703 = vpop.permute.xlu0 %1702
        %1705 = vset.pattern.permute.xlu0 16
        %1706 = vperm.xlu0 %1705, %v988
        %v1707 = vpop.permute.xlu0 %1706
        %1709 = vset.pattern.permute.xlu0 16
        %1710 = vperm.xlu0 %1709, %v989
        %v1711 = vpop.permute.xlu0 %1710
        %1713 = vset.pattern.permute.xlu0 16
        %1714 = vperm.xlu0 %1713, %v990
        %v1715 = vpop.permute.xlu0 %1714
        %1717 = vset.pattern.permute.xlu0 16
        %1718 = vperm.xlu0 %1717, %v991
        %v1719 = vpop.permute.xlu0 %1718
        %1721 = vset.pattern.permute.xlu0 16
        %1722 = vperm.xlu0 %1721, %v992
        %v1723 = vpop.permute.xlu0 %1722
        %1725 = vset.pattern.permute.xlu0 16
        %1726 = vperm.xlu0 %1725, %v993
        %v1727 = vpop.permute.xlu0 %1726
        %1729 = vset.pattern.permute.xlu0 16
        %1730 = vperm.xlu0 %1729, %v994
        %v1731 = vpop.permute.xlu0 %1730
        %1733 = vset.pattern.permute.xlu0 16
        %1734 = vperm.xlu0 %1733, %v995
        %v1735 = vpop.permute.xlu0 %1734
        %v1737 = vmul.f32 %v1675, %v1546
        %v1738 = vmul.f32 %v1679, %v1548
        %v1739 = vmul.f32 %v1683, %v1550
        %v1740 = vmul.f32 %v1687, %v1552
        %v1741 = vmul.f32 %v1691, %v1554
        %v1742 = vmul.f32 %v1695, %v1556
        %v1743 = vmul.f32 %v1699, %v1558
        %v1744 = vmul.f32 %v1703, %v1560
        %v1745 = vmul.f32 %v1707, %v1562
        %v1746 = vmul.f32 %v1711, %v1564
        %v1747 = vmul.f32 %v1715, %v1566
        %v1748 = vmul.f32 %v1719, %v1568
        %v1749 = vmul.f32 %v1723, %v1570
        %v1750 = vmul.f32 %v1727, %v1572
        %v1751 = vmul.f32 %v1731, %v1574
        %v1752 = vmul.f32 %v1735, %v1576
        %v1753 = vadd.f32 %v1737, 0.0
        %v1754 = vadd.f32 %v1738, 0.0
        %v1755 = vadd.f32 %v1739, 0.0
        %v1756 = vadd.f32 %v1740, 0.0
        %v1757 = vadd.f32 %v1741, 0.0
        %v1758 = vadd.f32 %v1742, 0.0
        %v1759 = vadd.f32 %v1743, 0.0
        %v1760 = vadd.f32 %v1744, 0.0
        %v1761 = vadd.f32 %v1745, 0.0
        %v1762 = vadd.f32 %v1746, 0.0
        %v1763 = vadd.f32 %v1747, 0.0
        %v1764 = vadd.f32 %v1748, 0.0
        %v1765 = vadd.f32 %v1749, 0.0
        %v1766 = vadd.f32 %v1750, 0.0
        %v1767 = vadd.f32 %v1751, 0.0
        %v1768 = vadd.f32 %v1752, 0.0
        %1769 = vrot.lane.b32.xlu0 %v1529, 6
        %v1770 = vpop.permute.xlu0 %1769
        %1771 = vrot.lane.b32.xlu0 %v1530, 6
        %v1772 = vpop.permute.xlu0 %1771
        %1773 = vrot.lane.b32.xlu0 %v1531, 6
        %v1774 = vpop.permute.xlu0 %1773
        %1775 = vrot.lane.b32.xlu0 %v1532, 6
        %v1776 = vpop.permute.xlu0 %1775
        %1777 = vrot.lane.b32.xlu0 %v1533, 6
        %v1778 = vpop.permute.xlu0 %1777
        %1779 = vrot.lane.b32.xlu0 %v1534, 6
        %v1780 = vpop.permute.xlu0 %1779
        %1781 = vrot.lane.b32.xlu0 %v1535, 6
        %v1782 = vpop.permute.xlu0 %1781
        %1783 = vrot.lane.b32.xlu0 %v1536, 6
        %v1784 = vpop.permute.xlu0 %1783
        %1785 = vrot.lane.b32.xlu0 %v1537, 6
        %v1786 = vpop.permute.xlu0 %1785
        %1787 = vrot.lane.b32.xlu0 %v1538, 6
        %v1788 = vpop.permute.xlu0 %1787
        %1789 = vrot.lane.b32.xlu0 %v1539, 6
        %v1790 = vpop.permute.xlu0 %1789
        %1791 = vrot.lane.b32.xlu0 %v1540, 6
        %v1792 = vpop.permute.xlu0 %1791
        %1793 = vrot.lane.b32.xlu0 %v1541, 6
        %v1794 = vpop.permute.xlu0 %1793
        %1795 = vrot.lane.b32.xlu0 %v1542, 6
        %v1796 = vpop.permute.xlu0 %1795
        %1797 = vrot.lane.b32.xlu0 %v1543, 6
        %v1798 = vpop.permute.xlu0 %1797
        %1799 = vrot.lane.b32.xlu0 %v1544, 6
        %v1800 = vpop.permute.xlu0 %1799
        %1801 = vset.pattern.permute.xlu0 1
        %1802 = vperm.xlu0 %1801, %v980
        %v1803 = vpop.permute.xlu0 %1802
        %1805 = vset.pattern.permute.xlu0 1
        %1806 = vperm.xlu0 %1805, %v981
        %v1807 = vpop.permute.xlu0 %1806
        %1809 = vset.pattern.permute.xlu0 1
        %1810 = vperm.xlu0 %1809, %v982
        %v1811 = vpop.permute.xlu0 %1810
        %1813 = vset.pattern.permute.xlu0 1
        %1814 = vperm.xlu0 %1813, %v983
        %v1815 = vpop.permute.xlu0 %1814
        %1817 = vset.pattern.permute.xlu0 1
        %1818 = vperm.xlu0 %1817, %v984
        %v1819 = vpop.permute.xlu0 %1818
        %1821 = vset.pattern.permute.xlu0 1
        %1822 = vperm.xlu0 %1821, %v985
        %v1823 = vpop.permute.xlu0 %1822
        %1825 = vset.pattern.permute.xlu0 1
        %1826 = vperm.xlu0 %1825, %v986
        %v1827 = vpop.permute.xlu0 %1826
        %1829 = vset.pattern.permute.xlu0 1
        %1830 = vperm.xlu0 %1829, %v987
        %v1831 = vpop.permute.xlu0 %1830
        %1833 = vset.pattern.permute.xlu0 1
        %1834 = vperm.xlu0 %1833, %v988
        %v1835 = vpop.permute.xlu0 %1834
        %1837 = vset.pattern.permute.xlu0 1
        %1838 = vperm.xlu0 %1837, %v989
        %v1839 = vpop.permute.xlu0 %1838
        %1841 = vset.pattern.permute.xlu0 1
        %1842 = vperm.xlu0 %1841, %v990
        %v1843 = vpop.permute.xlu0 %1842
        %1845 = vset.pattern.permute.xlu0 1
        %1846 = vperm.xlu0 %1845, %v991
        %v1847 = vpop.permute.xlu0 %1846
        %1849 = vset.pattern.permute.xlu0 1
        %1850 = vperm.xlu0 %1849, %v992
        %v1851 = vpop.permute.xlu0 %1850
        %1853 = vset.pattern.permute.xlu0 1
        %1854 = vperm.xlu0 %1853, %v993
        %v1855 = vpop.permute.xlu0 %1854
        %1857 = vset.pattern.permute.xlu0 1
        %1858 = vperm.xlu0 %1857, %v994
        %v1859 = vpop.permute.xlu0 %1858
        %1861 = vset.pattern.permute.xlu0 1
        %1862 = vperm.xlu0 %1861, %v995
        %v1863 = vpop.permute.xlu0 %1862
        %v1865 = vmul.f32 %v1803, %v1770
        %v1866 = vmul.f32 %v1807, %v1772
        %v1867 = vmul.f32 %v1811, %v1774
        %v1868 = vmul.f32 %v1815, %v1776
        %v1869 = vmul.f32 %v1819, %v1778
        %v1870 = vmul.f32 %v1823, %v1780
        %v1871 = vmul.f32 %v1827, %v1782
        %v1872 = vmul.f32 %v1831, %v1784
        %v1873 = vmul.f32 %v1835, %v1786
        %v1874 = vmul.f32 %v1839, %v1788
        %v1875 = vmul.f32 %v1843, %v1790
        %v1876 = vmul.f32 %v1847, %v1792
        %v1877 = vmul.f32 %v1851, %v1794
        %v1878 = vmul.f32 %v1855, %v1796
        %v1879 = vmul.f32 %v1859, %v1798
        %v1880 = vmul.f32 %v1863, %v1800
        %v1881 = vadd.f32 %v1657, %v1865
        %v1882 = vadd.f32 %v1658, %v1866
        %v1883 = vadd.f32 %v1659, %v1867
        %v1884 = vadd.f32 %v1660, %v1868
        %v1885 = vadd.f32 %v1661, %v1869
        %v1886 = vadd.f32 %v1662, %v1870
        %v1887 = vadd.f32 %v1663, %v1871
        %v1888 = vadd.f32 %v1664, %v1872
        %v1889 = vadd.f32 %v1665, %v1873
        %v1890 = vadd.f32 %v1666, %v1874
        %v1891 = vadd.f32 %v1667, %v1875
        %v1892 = vadd.f32 %v1668, %v1876
        %v1893 = vadd.f32 %v1669, %v1877
        %v1894 = vadd.f32 %v1670, %v1878
        %v1895 = vadd.f32 %v1671, %v1879
        %v1896 = vadd.f32 %v1672, %v1880
        %1897 = vset.pattern.permute.xlu0 17
        %1898 = vperm.xlu0 %1897, %v980
        %v1899 = vpop.permute.xlu0 %1898
        %1901 = vset.pattern.permute.xlu0 17
        %1902 = vperm.xlu0 %1901, %v981
        %v1903 = vpop.permute.xlu0 %1902
        %1905 = vset.pattern.permute.xlu0 17
        %1906 = vperm.xlu0 %1905, %v982
        %v1907 = vpop.permute.xlu0 %1906
        %1909 = vset.pattern.permute.xlu0 17
        %1910 = vperm.xlu0 %1909, %v983
        %v1911 = vpop.permute.xlu0 %1910
        %1913 = vset.pattern.permute.xlu0 17
        %1914 = vperm.xlu0 %1913, %v984
        %v1915 = vpop.permute.xlu0 %1914
        %1917 = vset.pattern.permute.xlu0 17
        %1918 = vperm.xlu0 %1917, %v985
        %v1919 = vpop.permute.xlu0 %1918
        %1921 = vset.pattern.permute.xlu0 17
        %1922 = vperm.xlu0 %1921, %v986
        %v1923 = vpop.permute.xlu0 %1922
        %1925 = vset.pattern.permute.xlu0 17
        %1926 = vperm.xlu0 %1925, %v987
        %v1927 = vpop.permute.xlu0 %1926
        %1929 = vset.pattern.permute.xlu0 17
        %1930 = vperm.xlu0 %1929, %v988
        %v1931 = vpop.permute.xlu0 %1930
        %1933 = vset.pattern.permute.xlu0 17
        %1934 = vperm.xlu0 %1933, %v989
        %v1935 = vpop.permute.xlu0 %1934
        %1937 = vset.pattern.permute.xlu0 17
        %1938 = vperm.xlu0 %1937, %v990
        %v1939 = vpop.permute.xlu0 %1938
        %1941 = vset.pattern.permute.xlu0 17
        %1942 = vperm.xlu0 %1941, %v991
        %v1943 = vpop.permute.xlu0 %1942
        %1945 = vset.pattern.permute.xlu0 17
        %1946 = vperm.xlu0 %1945, %v992
        %v1947 = vpop.permute.xlu0 %1946
        %1949 = vset.pattern.permute.xlu0 17
        %1950 = vperm.xlu0 %1949, %v993
        %v1951 = vpop.permute.xlu0 %1950
        %1953 = vset.pattern.permute.xlu0 17
        %1954 = vperm.xlu0 %1953, %v994
        %v1955 = vpop.permute.xlu0 %1954
        %1957 = vset.pattern.permute.xlu0 17
        %1958 = vperm.xlu0 %1957, %v995
        %v1959 = vpop.permute.xlu0 %1958
        %v1961 = vmul.f32 %v1899, %v1770
        %v1962 = vmul.f32 %v1903, %v1772
        %v1963 = vmul.f32 %v1907, %v1774
        %v1964 = vmul.f32 %v1911, %v1776
        %v1965 = vmul.f32 %v1915, %v1778
        %v1966 = vmul.f32 %v1919, %v1780
        %v1967 = vmul.f32 %v1923, %v1782
        %v1968 = vmul.f32 %v1927, %v1784
        %v1969 = vmul.f32 %v1931, %v1786
        %v1970 = vmul.f32 %v1935, %v1788
        %v1971 = vmul.f32 %v1939, %v1790
        %v1972 = vmul.f32 %v1943, %v1792
        %v1973 = vmul.f32 %v1947, %v1794
        %v1974 = vmul.f32 %v1951, %v1796
        %v1975 = vmul.f32 %v1955, %v1798
        %v1976 = vmul.f32 %v1959, %v1800
        %v1977 = vadd.f32 %v1753, %v1961
        %v1978 = vadd.f32 %v1754, %v1962
        %v1979 = vadd.f32 %v1755, %v1963
        %v1980 = vadd.f32 %v1756, %v1964
        %v1981 = vadd.f32 %v1757, %v1965
        %v1982 = vadd.f32 %v1758, %v1966
        %v1983 = vadd.f32 %v1759, %v1967
        %v1984 = vadd.f32 %v1760, %v1968
        %v1985 = vadd.f32 %v1761, %v1969
        %v1986 = vadd.f32 %v1762, %v1970
        %v1987 = vadd.f32 %v1763, %v1971
        %v1988 = vadd.f32 %v1764, %v1972
        %v1989 = vadd.f32 %v1765, %v1973
        %v1990 = vadd.f32 %v1766, %v1974
        %v1991 = vadd.f32 %v1767, %v1975
        %v1992 = vadd.f32 %v1768, %v1976
        %1993 = vrot.lane.b32.xlu0 %v1529, 5
        %v1994 = vpop.permute.xlu0 %1993
        %1995 = vrot.lane.b32.xlu0 %v1530, 5
        %v1996 = vpop.permute.xlu0 %1995
        %1997 = vrot.lane.b32.xlu0 %v1531, 5
        %v1998 = vpop.permute.xlu0 %1997
        %1999 = vrot.lane.b32.xlu0 %v1532, 5
        %v2000 = vpop.permute.xlu0 %1999
        %2001 = vrot.lane.b32.xlu0 %v1533, 5
        %v2002 = vpop.permute.xlu0 %2001
        %2003 = vrot.lane.b32.xlu0 %v1534, 5
        %v2004 = vpop.permute.xlu0 %2003
        %2005 = vrot.lane.b32.xlu0 %v1535, 5
        %v2006 = vpop.permute.xlu0 %2005
        %2007 = vrot.lane.b32.xlu0 %v1536, 5
        %v2008 = vpop.permute.xlu0 %2007
        %2009 = vrot.lane.b32.xlu0 %v1537, 5
        %v2010 = vpop.permute.xlu0 %2009
        %2011 = vrot.lane.b32.xlu0 %v1538, 5
        %v2012 = vpop.permute.xlu0 %2011
        %2013 = vrot.lane.b32.xlu0 %v1539, 5
        %v2014 = vpop.permute.xlu0 %2013
        %2015 = vrot.lane.b32.xlu0 %v1540, 5
        %v2016 = vpop.permute.xlu0 %2015
        %2017 = vrot.lane.b32.xlu0 %v1541, 5
        %v2018 = vpop.permute.xlu0 %2017
        %2019 = vrot.lane.b32.xlu0 %v1542, 5
        %v2020 = vpop.permute.xlu0 %2019
        %2021 = vrot.lane.b32.xlu0 %v1543, 5
        %v2022 = vpop.permute.xlu0 %2021
        %2023 = vrot.lane.b32.xlu0 %v1544, 5
        %v2024 = vpop.permute.xlu0 %2023
        %2025 = vset.pattern.permute.xlu0 2
        %2026 = vperm.xlu0 %2025, %v980
        %v2027 = vpop.permute.xlu0 %2026
        %2029 = vset.pattern.permute.xlu0 2
        %2030 = vperm.xlu0 %2029, %v981
        %v2031 = vpop.permute.xlu0 %2030
        %2033 = vset.pattern.permute.xlu0 2
        %2034 = vperm.xlu0 %2033, %v982
        %v2035 = vpop.permute.xlu0 %2034
        %2037 = vset.pattern.permute.xlu0 2
        %2038 = vperm.xlu0 %2037, %v983
        %v2039 = vpop.permute.xlu0 %2038
        %2041 = vset.pattern.permute.xlu0 2
        %2042 = vperm.xlu0 %2041, %v984
        %v2043 = vpop.permute.xlu0 %2042
        %2045 = vset.pattern.permute.xlu0 2
        %2046 = vperm.xlu0 %2045, %v985
        %v2047 = vpop.permute.xlu0 %2046
        %2049 = vset.pattern.permute.xlu0 2
        %2050 = vperm.xlu0 %2049, %v986
        %v2051 = vpop.permute.xlu0 %2050
        %2053 = vset.pattern.permute.xlu0 2
        %2054 = vperm.xlu0 %2053, %v987
        %v2055 = vpop.permute.xlu0 %2054
        %2057 = vset.pattern.permute.xlu0 2
        %2058 = vperm.xlu0 %2057, %v988
        %v2059 = vpop.permute.xlu0 %2058
        %2061 = vset.pattern.permute.xlu0 2
        %2062 = vperm.xlu0 %2061, %v989
        %v2063 = vpop.permute.xlu0 %2062
        %2065 = vset.pattern.permute.xlu0 2
        %2066 = vperm.xlu0 %2065, %v990
        %v2067 = vpop.permute.xlu0 %2066
        %2069 = vset.pattern.permute.xlu0 2
        %2070 = vperm.xlu0 %2069, %v991
        %v2071 = vpop.permute.xlu0 %2070
        %2073 = vset.pattern.permute.xlu0 2
        %2074 = vperm.xlu0 %2073, %v992
        %v2075 = vpop.permute.xlu0 %2074
        %2077 = vset.pattern.permute.xlu0 2
        %2078 = vperm.xlu0 %2077, %v993
        %v2079 = vpop.permute.xlu0 %2078
        %2081 = vset.pattern.permute.xlu0 2
        %2082 = vperm.xlu0 %2081, %v994
        %v2083 = vpop.permute.xlu0 %2082
        %2085 = vset.pattern.permute.xlu0 2
        %2086 = vperm.xlu0 %2085, %v995
        %v2087 = vpop.permute.xlu0 %2086
        %v2089 = vmul.f32 %v2027, %v1994
        %v2090 = vmul.f32 %v2031, %v1996
        %v2091 = vmul.f32 %v2035, %v1998
        %v2092 = vmul.f32 %v2039, %v2000
        %v2093 = vmul.f32 %v2043, %v2002
        %v2094 = vmul.f32 %v2047, %v2004
        %v2095 = vmul.f32 %v2051, %v2006
        %v2096 = vmul.f32 %v2055, %v2008
        %v2097 = vmul.f32 %v2059, %v2010
        %v2098 = vmul.f32 %v2063, %v2012
        %v2099 = vmul.f32 %v2067, %v2014
        %v2100 = vmul.f32 %v2071, %v2016
        %v2101 = vmul.f32 %v2075, %v2018
        %v2102 = vmul.f32 %v2079, %v2020
        %v2103 = vmul.f32 %v2083, %v2022
        %v2104 = vmul.f32 %v2087, %v2024
        %v2105 = vadd.f32 %v1881, %v2089
        %v2106 = vadd.f32 %v1882, %v2090
        %v2107 = vadd.f32 %v1883, %v2091
        %v2108 = vadd.f32 %v1884, %v2092
        %v2109 = vadd.f32 %v1885, %v2093
        %v2110 = vadd.f32 %v1886, %v2094
        %v2111 = vadd.f32 %v1887, %v2095
        %v2112 = vadd.f32 %v1888, %v2096
        %v2113 = vadd.f32 %v1889, %v2097
        %v2114 = vadd.f32 %v1890, %v2098
        %v2115 = vadd.f32 %v1891, %v2099
        %v2116 = vadd.f32 %v1892, %v2100
        %v2117 = vadd.f32 %v1893, %v2101
        %v2118 = vadd.f32 %v1894, %v2102
        %v2119 = vadd.f32 %v1895, %v2103
        %v2120 = vadd.f32 %v1896, %v2104
        %2121 = vset.pattern.permute.xlu0 18
        %2122 = vperm.xlu0 %2121, %v980
        %v2123 = vpop.permute.xlu0 %2122
        %2125 = vset.pattern.permute.xlu0 18
        %2126 = vperm.xlu0 %2125, %v981
        %v2127 = vpop.permute.xlu0 %2126
        %2129 = vset.pattern.permute.xlu0 18
        %2130 = vperm.xlu0 %2129, %v982
        %v2131 = vpop.permute.xlu0 %2130
        %2133 = vset.pattern.permute.xlu0 18
        %2134 = vperm.xlu0 %2133, %v983
        %v2135 = vpop.permute.xlu0 %2134
        %2137 = vset.pattern.permute.xlu0 18
        %2138 = vperm.xlu0 %2137, %v984
        %v2139 = vpop.permute.xlu0 %2138
        %2141 = vset.pattern.permute.xlu0 18
        %2142 = vperm.xlu0 %2141, %v985
        %v2143 = vpop.permute.xlu0 %2142
        %2145 = vset.pattern.permute.xlu0 18
        %2146 = vperm.xlu0 %2145, %v986
        %v2147 = vpop.permute.xlu0 %2146
        %2149 = vset.pattern.permute.xlu0 18
        %2150 = vperm.xlu0 %2149, %v987
        %v2151 = vpop.permute.xlu0 %2150
        %2153 = vset.pattern.permute.xlu0 18
        %2154 = vperm.xlu0 %2153, %v988
        %v2155 = vpop.permute.xlu0 %2154
        %2157 = vset.pattern.permute.xlu0 18
        %2158 = vperm.xlu0 %2157, %v989
        %v2159 = vpop.permute.xlu0 %2158
        %2161 = vset.pattern.permute.xlu0 18
        %2162 = vperm.xlu0 %2161, %v990
        %v2163 = vpop.permute.xlu0 %2162
        %2165 = vset.pattern.permute.xlu0 18
        %2166 = vperm.xlu0 %2165, %v991
        %v2167 = vpop.permute.xlu0 %2166
        %2169 = vset.pattern.permute.xlu0 18
        %2170 = vperm.xlu0 %2169, %v992
        %v2171 = vpop.permute.xlu0 %2170
        %2173 = vset.pattern.permute.xlu0 18
        %2174 = vperm.xlu0 %2173, %v993
        %v2175 = vpop.permute.xlu0 %2174
        %2177 = vset.pattern.permute.xlu0 18
        %2178 = vperm.xlu0 %2177, %v994
        %v2179 = vpop.permute.xlu0 %2178
        %2181 = vset.pattern.permute.xlu0 18
        %2182 = vperm.xlu0 %2181, %v995
        %v2183 = vpop.permute.xlu0 %2182
        %v2185 = vmul.f32 %v2123, %v1994
        %v2186 = vmul.f32 %v2127, %v1996
        %v2187 = vmul.f32 %v2131, %v1998
        %v2188 = vmul.f32 %v2135, %v2000
        %v2189 = vmul.f32 %v2139, %v2002
        %v2190 = vmul.f32 %v2143, %v2004
        %v2191 = vmul.f32 %v2147, %v2006
        %v2192 = vmul.f32 %v2151, %v2008
        %v2193 = vmul.f32 %v2155, %v2010
        %v2194 = vmul.f32 %v2159, %v2012
        %v2195 = vmul.f32 %v2163, %v2014
        %v2196 = vmul.f32 %v2167, %v2016
        %v2197 = vmul.f32 %v2171, %v2018
        %v2198 = vmul.f32 %v2175, %v2020
        %v2199 = vmul.f32 %v2179, %v2022
        %v2200 = vmul.f32 %v2183, %v2024
        %v2201 = vadd.f32 %v1977, %v2185
        %v2202 = vadd.f32 %v1978, %v2186
        %v2203 = vadd.f32 %v1979, %v2187
        %v2204 = vadd.f32 %v1980, %v2188
        %v2205 = vadd.f32 %v1981, %v2189
        %v2206 = vadd.f32 %v1982, %v2190
        %v2207 = vadd.f32 %v1983, %v2191
        %v2208 = vadd.f32 %v1984, %v2192
        %v2209 = vadd.f32 %v1985, %v2193
        %v2210 = vadd.f32 %v1986, %v2194
        %v2211 = vadd.f32 %v1987, %v2195
        %v2212 = vadd.f32 %v1988, %v2196
        %v2213 = vadd.f32 %v1989, %v2197
        %v2214 = vadd.f32 %v1990, %v2198
        %v2215 = vadd.f32 %v1991, %v2199
        %v2216 = vadd.f32 %v1992, %v2200
        %2217 = vrot.lane.b32.xlu0 %v1529, 4
        %v2218 = vpop.permute.xlu0 %2217
        %2219 = vrot.lane.b32.xlu0 %v1530, 4
        %v2220 = vpop.permute.xlu0 %2219
        %2221 = vrot.lane.b32.xlu0 %v1531, 4
        %v2222 = vpop.permute.xlu0 %2221
        %2223 = vrot.lane.b32.xlu0 %v1532, 4
        %v2224 = vpop.permute.xlu0 %2223
        %2225 = vrot.lane.b32.xlu0 %v1533, 4
        %v2226 = vpop.permute.xlu0 %2225
        %2227 = vrot.lane.b32.xlu0 %v1534, 4
        %v2228 = vpop.permute.xlu0 %2227
        %2229 = vrot.lane.b32.xlu0 %v1535, 4
        %v2230 = vpop.permute.xlu0 %2229
        %2231 = vrot.lane.b32.xlu0 %v1536, 4
        %v2232 = vpop.permute.xlu0 %2231
        %2233 = vrot.lane.b32.xlu0 %v1537, 4
        %v2234 = vpop.permute.xlu0 %2233
        %2235 = vrot.lane.b32.xlu0 %v1538, 4
        %v2236 = vpop.permute.xlu0 %2235
        %2237 = vrot.lane.b32.xlu0 %v1539, 4
        %v2238 = vpop.permute.xlu0 %2237
        %2239 = vrot.lane.b32.xlu0 %v1540, 4
        %v2240 = vpop.permute.xlu0 %2239
        %2241 = vrot.lane.b32.xlu0 %v1541, 4
        %v2242 = vpop.permute.xlu0 %2241
        %2243 = vrot.lane.b32.xlu0 %v1542, 4
        %v2244 = vpop.permute.xlu0 %2243
        %2245 = vrot.lane.b32.xlu0 %v1543, 4
        %v2246 = vpop.permute.xlu0 %2245
        %2247 = vrot.lane.b32.xlu0 %v1544, 4
        %v2248 = vpop.permute.xlu0 %2247
        %2249 = vset.pattern.permute.xlu0 3
        %2250 = vperm.xlu0 %2249, %v980
        %v2251 = vpop.permute.xlu0 %2250
        %2253 = vset.pattern.permute.xlu0 3
        %2254 = vperm.xlu0 %2253, %v981
        %v2255 = vpop.permute.xlu0 %2254
        %2257 = vset.pattern.permute.xlu0 3
        %2258 = vperm.xlu0 %2257, %v982
        %v2259 = vpop.permute.xlu0 %2258
        %2261 = vset.pattern.permute.xlu0 3
        %2262 = vperm.xlu0 %2261, %v983
        %v2263 = vpop.permute.xlu0 %2262
        %2265 = vset.pattern.permute.xlu0 3
        %2266 = vperm.xlu0 %2265, %v984
        %v2267 = vpop.permute.xlu0 %2266
        %2269 = vset.pattern.permute.xlu0 3
        %2270 = vperm.xlu0 %2269, %v985
        %v2271 = vpop.permute.xlu0 %2270
        %2273 = vset.pattern.permute.xlu0 3
        %2274 = vperm.xlu0 %2273, %v986
        %v2275 = vpop.permute.xlu0 %2274
        %2277 = vset.pattern.permute.xlu0 3
        %2278 = vperm.xlu0 %2277, %v987
        %v2279 = vpop.permute.xlu0 %2278
        %2281 = vset.pattern.permute.xlu0 3
        %2282 = vperm.xlu0 %2281, %v988
        %v2283 = vpop.permute.xlu0 %2282
        %2285 = vset.pattern.permute.xlu0 3
        %2286 = vperm.xlu0 %2285, %v989
        %v2287 = vpop.permute.xlu0 %2286
        %2289 = vset.pattern.permute.xlu0 3
        %2290 = vperm.xlu0 %2289, %v990
        %v2291 = vpop.permute.xlu0 %2290
        %2293 = vset.pattern.permute.xlu0 3
        %2294 = vperm.xlu0 %2293, %v991
        %v2295 = vpop.permute.xlu0 %2294
        %2297 = vset.pattern.permute.xlu0 3
        %2298 = vperm.xlu0 %2297, %v992
        %v2299 = vpop.permute.xlu0 %2298
        %2301 = vset.pattern.permute.xlu0 3
        %2302 = vperm.xlu0 %2301, %v993
        %v2303 = vpop.permute.xlu0 %2302
        %2305 = vset.pattern.permute.xlu0 3
        %2306 = vperm.xlu0 %2305, %v994
        %v2307 = vpop.permute.xlu0 %2306
        %2309 = vset.pattern.permute.xlu0 3
        %2310 = vperm.xlu0 %2309, %v995
        %v2311 = vpop.permute.xlu0 %2310
        %v2313 = vmul.f32 %v2251, %v2218
        %v2314 = vmul.f32 %v2255, %v2220
        %v2315 = vmul.f32 %v2259, %v2222
        %v2316 = vmul.f32 %v2263, %v2224
        %v2317 = vmul.f32 %v2267, %v2226
        %v2318 = vmul.f32 %v2271, %v2228
        %v2319 = vmul.f32 %v2275, %v2230
        %v2320 = vmul.f32 %v2279, %v2232
        %v2321 = vmul.f32 %v2283, %v2234
        %v2322 = vmul.f32 %v2287, %v2236
        %v2323 = vmul.f32 %v2291, %v2238
        %v2324 = vmul.f32 %v2295, %v2240
        %v2325 = vmul.f32 %v2299, %v2242
        %v2326 = vmul.f32 %v2303, %v2244
        %v2327 = vmul.f32 %v2307, %v2246
        %v2328 = vmul.f32 %v2311, %v2248
        %v2329 = vadd.f32 %v2105, %v2313
        %v2330 = vadd.f32 %v2106, %v2314
        %v2331 = vadd.f32 %v2107, %v2315
        %v2332 = vadd.f32 %v2108, %v2316
        %v2333 = vadd.f32 %v2109, %v2317
        %v2334 = vadd.f32 %v2110, %v2318
        %v2335 = vadd.f32 %v2111, %v2319
        %v2336 = vadd.f32 %v2112, %v2320
        %v2337 = vadd.f32 %v2113, %v2321
        %v2338 = vadd.f32 %v2114, %v2322
        %v2339 = vadd.f32 %v2115, %v2323
        %v2340 = vadd.f32 %v2116, %v2324
        %v2341 = vadd.f32 %v2117, %v2325
        %v2342 = vadd.f32 %v2118, %v2326
        %v2343 = vadd.f32 %v2119, %v2327
        %v2344 = vadd.f32 %v2120, %v2328
        %2345 = vset.pattern.permute.xlu0 19
        %2346 = vperm.xlu0 %2345, %v980
        %v2347 = vpop.permute.xlu0 %2346
        %2349 = vset.pattern.permute.xlu0 19
        %2350 = vperm.xlu0 %2349, %v981
        %v2351 = vpop.permute.xlu0 %2350
        %2353 = vset.pattern.permute.xlu0 19
        %2354 = vperm.xlu0 %2353, %v982
        %v2355 = vpop.permute.xlu0 %2354
        %2357 = vset.pattern.permute.xlu0 19
        %2358 = vperm.xlu0 %2357, %v983
        %v2359 = vpop.permute.xlu0 %2358
        %2361 = vset.pattern.permute.xlu0 19
        %2362 = vperm.xlu0 %2361, %v984
        %v2363 = vpop.permute.xlu0 %2362
        %2365 = vset.pattern.permute.xlu0 19
        %2366 = vperm.xlu0 %2365, %v985
        %v2367 = vpop.permute.xlu0 %2366
        %2369 = vset.pattern.permute.xlu0 19
        %2370 = vperm.xlu0 %2369, %v986
        %v2371 = vpop.permute.xlu0 %2370
        %2373 = vset.pattern.permute.xlu0 19
        %2374 = vperm.xlu0 %2373, %v987
        %v2375 = vpop.permute.xlu0 %2374
        %2377 = vset.pattern.permute.xlu0 19
        %2378 = vperm.xlu0 %2377, %v988
        %v2379 = vpop.permute.xlu0 %2378
        %2381 = vset.pattern.permute.xlu0 19
        %2382 = vperm.xlu0 %2381, %v989
        %v2383 = vpop.permute.xlu0 %2382
        %2385 = vset.pattern.permute.xlu0 19
        %2386 = vperm.xlu0 %2385, %v990
        %v2387 = vpop.permute.xlu0 %2386
        %2389 = vset.pattern.permute.xlu0 19
        %2390 = vperm.xlu0 %2389, %v991
        %v2391 = vpop.permute.xlu0 %2390
        %2393 = vset.pattern.permute.xlu0 19
        %2394 = vperm.xlu0 %2393, %v992
        %v2395 = vpop.permute.xlu0 %2394
        %2397 = vset.pattern.permute.xlu0 19
        %2398 = vperm.xlu0 %2397, %v993
        %v2399 = vpop.permute.xlu0 %2398
        %2401 = vset.pattern.permute.xlu0 19
        %2402 = vperm.xlu0 %2401, %v994
        %v2403 = vpop.permute.xlu0 %2402
        %2405 = vset.pattern.permute.xlu0 19
        %2406 = vperm.xlu0 %2405, %v995
        %v2407 = vpop.permute.xlu0 %2406
        %v2409 = vmul.f32 %v2347, %v2218
        %v2410 = vmul.f32 %v2351, %v2220
        %v2411 = vmul.f32 %v2355, %v2222
        %v2412 = vmul.f32 %v2359, %v2224
        %v2413 = vmul.f32 %v2363, %v2226
        %v2414 = vmul.f32 %v2367, %v2228
        %v2415 = vmul.f32 %v2371, %v2230
        %v2416 = vmul.f32 %v2375, %v2232
        %v2417 = vmul.f32 %v2379, %v2234
        %v2418 = vmul.f32 %v2383, %v2236
        %v2419 = vmul.f32 %v2387, %v2238
        %v2420 = vmul.f32 %v2391, %v2240
        %v2421 = vmul.f32 %v2395, %v2242
        %v2422 = vmul.f32 %v2399, %v2244
        %v2423 = vmul.f32 %v2403, %v2246
        %v2424 = vmul.f32 %v2407, %v2248
        %v2425 = vadd.f32 %v2201, %v2409
        %v2426 = vadd.f32 %v2202, %v2410
        %v2427 = vadd.f32 %v2203, %v2411
        %v2428 = vadd.f32 %v2204, %v2412
        %v2429 = vadd.f32 %v2205, %v2413
        %v2430 = vadd.f32 %v2206, %v2414
        %v2431 = vadd.f32 %v2207, %v2415
        %v2432 = vadd.f32 %v2208, %v2416
        %v2433 = vadd.f32 %v2209, %v2417
        %v2434 = vadd.f32 %v2210, %v2418
        %v2435 = vadd.f32 %v2211, %v2419
        %v2436 = vadd.f32 %v2212, %v2420
        %v2437 = vadd.f32 %v2213, %v2421
        %v2438 = vadd.f32 %v2214, %v2422
        %v2439 = vadd.f32 %v2215, %v2423
        %v2440 = vadd.f32 %v2216, %v2424
        %2441 = vrot.lane.b32.xlu0 %v1529, 3
        %v2442 = vpop.permute.xlu0 %2441
        %2443 = vrot.lane.b32.xlu0 %v1530, 3
        %v2444 = vpop.permute.xlu0 %2443
        %2445 = vrot.lane.b32.xlu0 %v1531, 3
        %v2446 = vpop.permute.xlu0 %2445
        %2447 = vrot.lane.b32.xlu0 %v1532, 3
        %v2448 = vpop.permute.xlu0 %2447
        %2449 = vrot.lane.b32.xlu0 %v1533, 3
        %v2450 = vpop.permute.xlu0 %2449
        %2451 = vrot.lane.b32.xlu0 %v1534, 3
        %v2452 = vpop.permute.xlu0 %2451
        %2453 = vrot.lane.b32.xlu0 %v1535, 3
        %v2454 = vpop.permute.xlu0 %2453
        %2455 = vrot.lane.b32.xlu0 %v1536, 3
        %v2456 = vpop.permute.xlu0 %2455
        %2457 = vrot.lane.b32.xlu0 %v1537, 3
        %v2458 = vpop.permute.xlu0 %2457
        %2459 = vrot.lane.b32.xlu0 %v1538, 3
        %v2460 = vpop.permute.xlu0 %2459
        %2461 = vrot.lane.b32.xlu0 %v1539, 3
        %v2462 = vpop.permute.xlu0 %2461
        %2463 = vrot.lane.b32.xlu0 %v1540, 3
        %v2464 = vpop.permute.xlu0 %2463
        %2465 = vrot.lane.b32.xlu0 %v1541, 3
        %v2466 = vpop.permute.xlu0 %2465
        %2467 = vrot.lane.b32.xlu0 %v1542, 3
        %v2468 = vpop.permute.xlu0 %2467
        %2469 = vrot.lane.b32.xlu0 %v1543, 3
        %v2470 = vpop.permute.xlu0 %2469
        %2471 = vrot.lane.b32.xlu0 %v1544, 3
        %v2472 = vpop.permute.xlu0 %2471
        %2473 = vset.pattern.permute.xlu0 4
        %2474 = vperm.xlu0 %2473, %v980
        %v2475 = vpop.permute.xlu0 %2474
        %2477 = vset.pattern.permute.xlu0 4
        %2478 = vperm.xlu0 %2477, %v981
        %v2479 = vpop.permute.xlu0 %2478
        %2481 = vset.pattern.permute.xlu0 4
        %2482 = vperm.xlu0 %2481, %v982
        %v2483 = vpop.permute.xlu0 %2482
        %2485 = vset.pattern.permute.xlu0 4
        %2486 = vperm.xlu0 %2485, %v983
        %v2487 = vpop.permute.xlu0 %2486
        %2489 = vset.pattern.permute.xlu0 4
        %2490 = vperm.xlu0 %2489, %v984
        %v2491 = vpop.permute.xlu0 %2490
        %2493 = vset.pattern.permute.xlu0 4
        %2494 = vperm.xlu0 %2493, %v985
        %v2495 = vpop.permute.xlu0 %2494
        %2497 = vset.pattern.permute.xlu0 4
        %2498 = vperm.xlu0 %2497, %v986
        %v2499 = vpop.permute.xlu0 %2498
        %2501 = vset.pattern.permute.xlu0 4
        %2502 = vperm.xlu0 %2501, %v987
        %v2503 = vpop.permute.xlu0 %2502
        %2505 = vset.pattern.permute.xlu0 4
        %2506 = vperm.xlu0 %2505, %v988
        %v2507 = vpop.permute.xlu0 %2506
        %2509 = vset.pattern.permute.xlu0 4
        %2510 = vperm.xlu0 %2509, %v989
        %v2511 = vpop.permute.xlu0 %2510
        %2513 = vset.pattern.permute.xlu0 4
        %2514 = vperm.xlu0 %2513, %v990
        %v2515 = vpop.permute.xlu0 %2514
        %2517 = vset.pattern.permute.xlu0 4
        %2518 = vperm.xlu0 %2517, %v991
        %v2519 = vpop.permute.xlu0 %2518
        %2521 = vset.pattern.permute.xlu0 4
        %2522 = vperm.xlu0 %2521, %v992
        %v2523 = vpop.permute.xlu0 %2522
        %2525 = vset.pattern.permute.xlu0 4
        %2526 = vperm.xlu0 %2525, %v993
        %v2527 = vpop.permute.xlu0 %2526
        %2529 = vset.pattern.permute.xlu0 4
        %2530 = vperm.xlu0 %2529, %v994
        %v2531 = vpop.permute.xlu0 %2530
        %2533 = vset.pattern.permute.xlu0 4
        %2534 = vperm.xlu0 %2533, %v995
        %v2535 = vpop.permute.xlu0 %2534
        %v2537 = vmul.f32 %v2475, %v2442
        %v2538 = vmul.f32 %v2479, %v2444
        %v2539 = vmul.f32 %v2483, %v2446
        %v2540 = vmul.f32 %v2487, %v2448
        %v2541 = vmul.f32 %v2491, %v2450
        %v2542 = vmul.f32 %v2495, %v2452
        %v2543 = vmul.f32 %v2499, %v2454
        %v2544 = vmul.f32 %v2503, %v2456
        %v2545 = vmul.f32 %v2507, %v2458
        %v2546 = vmul.f32 %v2511, %v2460
        %v2547 = vmul.f32 %v2515, %v2462
        %v2548 = vmul.f32 %v2519, %v2464
        %v2549 = vmul.f32 %v2523, %v2466
        %v2550 = vmul.f32 %v2527, %v2468
        %v2551 = vmul.f32 %v2531, %v2470
        %v2552 = vmul.f32 %v2535, %v2472
        %v2553 = vadd.f32 %v2329, %v2537
        %v2554 = vadd.f32 %v2330, %v2538
        %v2555 = vadd.f32 %v2331, %v2539
        %v2556 = vadd.f32 %v2332, %v2540
        %v2557 = vadd.f32 %v2333, %v2541
        %v2558 = vadd.f32 %v2334, %v2542
        %v2559 = vadd.f32 %v2335, %v2543
        %v2560 = vadd.f32 %v2336, %v2544
        %v2561 = vadd.f32 %v2337, %v2545
        %v2562 = vadd.f32 %v2338, %v2546
        %v2563 = vadd.f32 %v2339, %v2547
        %v2564 = vadd.f32 %v2340, %v2548
        %v2565 = vadd.f32 %v2341, %v2549
        %v2566 = vadd.f32 %v2342, %v2550
        %v2567 = vadd.f32 %v2343, %v2551
        %v2568 = vadd.f32 %v2344, %v2552
        %2569 = vset.pattern.permute.xlu0 20
        %2570 = vperm.xlu0 %2569, %v980
        %v2571 = vpop.permute.xlu0 %2570
        %2573 = vset.pattern.permute.xlu0 20
        %2574 = vperm.xlu0 %2573, %v981
        %v2575 = vpop.permute.xlu0 %2574
        %2577 = vset.pattern.permute.xlu0 20
        %2578 = vperm.xlu0 %2577, %v982
        %v2579 = vpop.permute.xlu0 %2578
        %2581 = vset.pattern.permute.xlu0 20
        %2582 = vperm.xlu0 %2581, %v983
        %v2583 = vpop.permute.xlu0 %2582
        %2585 = vset.pattern.permute.xlu0 20
        %2586 = vperm.xlu0 %2585, %v984
        %v2587 = vpop.permute.xlu0 %2586
        %2589 = vset.pattern.permute.xlu0 20
        %2590 = vperm.xlu0 %2589, %v985
        %v2591 = vpop.permute.xlu0 %2590
        %2593 = vset.pattern.permute.xlu0 20
        %2594 = vperm.xlu0 %2593, %v986
        %v2595 = vpop.permute.xlu0 %2594
        %2597 = vset.pattern.permute.xlu0 20
        %2598 = vperm.xlu0 %2597, %v987
        %v2599 = vpop.permute.xlu0 %2598
        %2601 = vset.pattern.permute.xlu0 20
        %2602 = vperm.xlu0 %2601, %v988
        %v2603 = vpop.permute.xlu0 %2602
        %2605 = vset.pattern.permute.xlu0 20
        %2606 = vperm.xlu0 %2605, %v989
        %v2607 = vpop.permute.xlu0 %2606
        %2609 = vset.pattern.permute.xlu0 20
        %2610 = vperm.xlu0 %2609, %v990
        %v2611 = vpop.permute.xlu0 %2610
        %2613 = vset.pattern.permute.xlu0 20
        %2614 = vperm.xlu0 %2613, %v991
        %v2615 = vpop.permute.xlu0 %2614
        %2617 = vset.pattern.permute.xlu0 20
        %2618 = vperm.xlu0 %2617, %v992
        %v2619 = vpop.permute.xlu0 %2618
        %2621 = vset.pattern.permute.xlu0 20
        %2622 = vperm.xlu0 %2621, %v993
        %v2623 = vpop.permute.xlu0 %2622
        %2625 = vset.pattern.permute.xlu0 20
        %2626 = vperm.xlu0 %2625, %v994
        %v2627 = vpop.permute.xlu0 %2626
        %2629 = vset.pattern.permute.xlu0 20
        %2630 = vperm.xlu0 %2629, %v995
        %v2631 = vpop.permute.xlu0 %2630
        %v2633 = vmul.f32 %v2571, %v2442
        %v2634 = vmul.f32 %v2575, %v2444
        %v2635 = vmul.f32 %v2579, %v2446
        %v2636 = vmul.f32 %v2583, %v2448
        %v2637 = vmul.f32 %v2587, %v2450
        %v2638 = vmul.f32 %v2591, %v2452
        %v2639 = vmul.f32 %v2595, %v2454
        %v2640 = vmul.f32 %v2599, %v2456
        %v2641 = vmul.f32 %v2603, %v2458
        %v2642 = vmul.f32 %v2607, %v2460
        %v2643 = vmul.f32 %v2611, %v2462
        %v2644 = vmul.f32 %v2615, %v2464
        %v2645 = vmul.f32 %v2619, %v2466
        %v2646 = vmul.f32 %v2623, %v2468
        %v2647 = vmul.f32 %v2627, %v2470
        %v2648 = vmul.f32 %v2631, %v2472
        %v2649 = vadd.f32 %v2425, %v2633
        %v2650 = vadd.f32 %v2426, %v2634
        %v2651 = vadd.f32 %v2427, %v2635
        %v2652 = vadd.f32 %v2428, %v2636
        %v2653 = vadd.f32 %v2429, %v2637
        %v2654 = vadd.f32 %v2430, %v2638
        %v2655 = vadd.f32 %v2431, %v2639
        %v2656 = vadd.f32 %v2432, %v2640
        %v2657 = vadd.f32 %v2433, %v2641
        %v2658 = vadd.f32 %v2434, %v2642
        %v2659 = vadd.f32 %v2435, %v2643
        %v2660 = vadd.f32 %v2436, %v2644
        %v2661 = vadd.f32 %v2437, %v2645
        %v2662 = vadd.f32 %v2438, %v2646
        %v2663 = vadd.f32 %v2439, %v2647
        %v2664 = vadd.f32 %v2440, %v2648
        %2665 = vrot.lane.b32.xlu0 %v1529, 2
        %v2666 = vpop.permute.xlu0 %2665
        %2667 = vrot.lane.b32.xlu0 %v1530, 2
        %v2668 = vpop.permute.xlu0 %2667
        %2669 = vrot.lane.b32.xlu0 %v1531, 2
        %v2670 = vpop.permute.xlu0 %2669
        %2671 = vrot.lane.b32.xlu0 %v1532, 2
        %v2672 = vpop.permute.xlu0 %2671
        %2673 = vrot.lane.b32.xlu0 %v1533, 2
        %v2674 = vpop.permute.xlu0 %2673
        %2675 = vrot.lane.b32.xlu0 %v1534, 2
        %v2676 = vpop.permute.xlu0 %2675
        %2677 = vrot.lane.b32.xlu0 %v1535, 2
        %v2678 = vpop.permute.xlu0 %2677
        %2679 = vrot.lane.b32.xlu0 %v1536, 2
        %v2680 = vpop.permute.xlu0 %2679
        %2681 = vrot.lane.b32.xlu0 %v1537, 2
        %v2682 = vpop.permute.xlu0 %2681
        %2683 = vrot.lane.b32.xlu0 %v1538, 2
        %v2684 = vpop.permute.xlu0 %2683
        %2685 = vrot.lane.b32.xlu0 %v1539, 2
        %v2686 = vpop.permute.xlu0 %2685
        %2687 = vrot.lane.b32.xlu0 %v1540, 2
        %v2688 = vpop.permute.xlu0 %2687
        %2689 = vrot.lane.b32.xlu0 %v1541, 2
        %v2690 = vpop.permute.xlu0 %2689
        %2691 = vrot.lane.b32.xlu0 %v1542, 2
        %v2692 = vpop.permute.xlu0 %2691
        %2693 = vrot.lane.b32.xlu0 %v1543, 2
        %v2694 = vpop.permute.xlu0 %2693
        %2695 = vrot.lane.b32.xlu0 %v1544, 2
        %v2696 = vpop.permute.xlu0 %2695
        %2697 = vset.pattern.permute.xlu0 5
        %2698 = vperm.xlu0 %2697, %v980
        %v2699 = vpop.permute.xlu0 %2698
        %2701 = vset.pattern.permute.xlu0 5
        %2702 = vperm.xlu0 %2701, %v981
        %v2703 = vpop.permute.xlu0 %2702
        %2705 = vset.pattern.permute.xlu0 5
        %2706 = vperm.xlu0 %2705, %v982
        %v2707 = vpop.permute.xlu0 %2706
        %2709 = vset.pattern.permute.xlu0 5
        %2710 = vperm.xlu0 %2709, %v983
        %v2711 = vpop.permute.xlu0 %2710
        %2713 = vset.pattern.permute.xlu0 5
        %2714 = vperm.xlu0 %2713, %v984
        %v2715 = vpop.permute.xlu0 %2714
        %2717 = vset.pattern.permute.xlu0 5
        %2718 = vperm.xlu0 %2717, %v985
        %v2719 = vpop.permute.xlu0 %2718
        %2721 = vset.pattern.permute.xlu0 5
        %2722 = vperm.xlu0 %2721, %v986
        %v2723 = vpop.permute.xlu0 %2722
        %2725 = vset.pattern.permute.xlu0 5
        %2726 = vperm.xlu0 %2725, %v987
        %v2727 = vpop.permute.xlu0 %2726
        %2729 = vset.pattern.permute.xlu0 5
        %2730 = vperm.xlu0 %2729, %v988
        %v2731 = vpop.permute.xlu0 %2730
        %2733 = vset.pattern.permute.xlu0 5
        %2734 = vperm.xlu0 %2733, %v989
        %v2735 = vpop.permute.xlu0 %2734
        %2737 = vset.pattern.permute.xlu0 5
        %2738 = vperm.xlu0 %2737, %v990
        %v2739 = vpop.permute.xlu0 %2738
        %2741 = vset.pattern.permute.xlu0 5
        %2742 = vperm.xlu0 %2741, %v991
        %v2743 = vpop.permute.xlu0 %2742
        %2745 = vset.pattern.permute.xlu0 5
        %2746 = vperm.xlu0 %2745, %v992
        %v2747 = vpop.permute.xlu0 %2746
        %2749 = vset.pattern.permute.xlu0 5
        %2750 = vperm.xlu0 %2749, %v993
        %v2751 = vpop.permute.xlu0 %2750
        %2753 = vset.pattern.permute.xlu0 5
        %2754 = vperm.xlu0 %2753, %v994
        %v2755 = vpop.permute.xlu0 %2754
        %2757 = vset.pattern.permute.xlu0 5
        %2758 = vperm.xlu0 %2757, %v995
        %v2759 = vpop.permute.xlu0 %2758
        %v2761 = vmul.f32 %v2699, %v2666
        %v2762 = vmul.f32 %v2703, %v2668
        %v2763 = vmul.f32 %v2707, %v2670
        %v2764 = vmul.f32 %v2711, %v2672
        %v2765 = vmul.f32 %v2715, %v2674
        %v2766 = vmul.f32 %v2719, %v2676
        %v2767 = vmul.f32 %v2723, %v2678
        %v2768 = vmul.f32 %v2727, %v2680
        %v2769 = vmul.f32 %v2731, %v2682
        %v2770 = vmul.f32 %v2735, %v2684
        %v2771 = vmul.f32 %v2739, %v2686
        %v2772 = vmul.f32 %v2743, %v2688
        %v2773 = vmul.f32 %v2747, %v2690
        %v2774 = vmul.f32 %v2751, %v2692
        %v2775 = vmul.f32 %v2755, %v2694
        %v2776 = vmul.f32 %v2759, %v2696
        %v2777 = vadd.f32 %v2553, %v2761
        %v2778 = vadd.f32 %v2554, %v2762
        %v2779 = vadd.f32 %v2555, %v2763
        %v2780 = vadd.f32 %v2556, %v2764
        %v2781 = vadd.f32 %v2557, %v2765
        %v2782 = vadd.f32 %v2558, %v2766
        %v2783 = vadd.f32 %v2559, %v2767
        %v2784 = vadd.f32 %v2560, %v2768
        %v2785 = vadd.f32 %v2561, %v2769
        %v2786 = vadd.f32 %v2562, %v2770
        %v2787 = vadd.f32 %v2563, %v2771
        %v2788 = vadd.f32 %v2564, %v2772
        %v2789 = vadd.f32 %v2565, %v2773
        %v2790 = vadd.f32 %v2566, %v2774
        %v2791 = vadd.f32 %v2567, %v2775
        %v2792 = vadd.f32 %v2568, %v2776
        %2793 = vset.pattern.permute.xlu0 21
        %2794 = vperm.xlu0 %2793, %v980
        %v2795 = vpop.permute.xlu0 %2794
        %2797 = vset.pattern.permute.xlu0 21
        %2798 = vperm.xlu0 %2797, %v981
        %v2799 = vpop.permute.xlu0 %2798
        %2801 = vset.pattern.permute.xlu0 21
        %2802 = vperm.xlu0 %2801, %v982
        %v2803 = vpop.permute.xlu0 %2802
        %2805 = vset.pattern.permute.xlu0 21
        %2806 = vperm.xlu0 %2805, %v983
        %v2807 = vpop.permute.xlu0 %2806
        %2809 = vset.pattern.permute.xlu0 21
        %2810 = vperm.xlu0 %2809, %v984
        %v2811 = vpop.permute.xlu0 %2810
        %2813 = vset.pattern.permute.xlu0 21
        %2814 = vperm.xlu0 %2813, %v985
        %v2815 = vpop.permute.xlu0 %2814
        %2817 = vset.pattern.permute.xlu0 21
        %2818 = vperm.xlu0 %2817, %v986
        %v2819 = vpop.permute.xlu0 %2818
        %2821 = vset.pattern.permute.xlu0 21
        %2822 = vperm.xlu0 %2821, %v987
        %v2823 = vpop.permute.xlu0 %2822
        %2825 = vset.pattern.permute.xlu0 21
        %2826 = vperm.xlu0 %2825, %v988
        %v2827 = vpop.permute.xlu0 %2826
        %2829 = vset.pattern.permute.xlu0 21
        %2830 = vperm.xlu0 %2829, %v989
        %v2831 = vpop.permute.xlu0 %2830
        %2833 = vset.pattern.permute.xlu0 21
        %2834 = vperm.xlu0 %2833, %v990
        %v2835 = vpop.permute.xlu0 %2834
        %2837 = vset.pattern.permute.xlu0 21
        %2838 = vperm.xlu0 %2837, %v991
        %v2839 = vpop.permute.xlu0 %2838
        %2841 = vset.pattern.permute.xlu0 21
        %2842 = vperm.xlu0 %2841, %v992
        %v2843 = vpop.permute.xlu0 %2842
        %2845 = vset.pattern.permute.xlu0 21
        %2846 = vperm.xlu0 %2845, %v993
        %v2847 = vpop.permute.xlu0 %2846
        %2849 = vset.pattern.permute.xlu0 21
        %2850 = vperm.xlu0 %2849, %v994
        %v2851 = vpop.permute.xlu0 %2850
        %2853 = vset.pattern.permute.xlu0 21
        %2854 = vperm.xlu0 %2853, %v995
        %v2855 = vpop.permute.xlu0 %2854
        %v2857 = vmul.f32 %v2795, %v2666
        %v2858 = vmul.f32 %v2799, %v2668
        %v2859 = vmul.f32 %v2803, %v2670
        %v2860 = vmul.f32 %v2807, %v2672
        %v2861 = vmul.f32 %v2811, %v2674
        %v2862 = vmul.f32 %v2815, %v2676
        %v2863 = vmul.f32 %v2819, %v2678
        %v2864 = vmul.f32 %v2823, %v2680
        %v2865 = vmul.f32 %v2827, %v2682
        %v2866 = vmul.f32 %v2831, %v2684
        %v2867 = vmul.f32 %v2835, %v2686
        %v2868 = vmul.f32 %v2839, %v2688
        %v2869 = vmul.f32 %v2843, %v2690
        %v2870 = vmul.f32 %v2847, %v2692
        %v2871 = vmul.f32 %v2851, %v2694
        %v2872 = vmul.f32 %v2855, %v2696
        %v2873 = vadd.f32 %v2649, %v2857
        %v2874 = vadd.f32 %v2650, %v2858
        %v2875 = vadd.f32 %v2651, %v2859
        %v2876 = vadd.f32 %v2652, %v2860
        %v2877 = vadd.f32 %v2653, %v2861
        %v2878 = vadd.f32 %v2654, %v2862
        %v2879 = vadd.f32 %v2655, %v2863
        %v2880 = vadd.f32 %v2656, %v2864
        %v2881 = vadd.f32 %v2657, %v2865
        %v2882 = vadd.f32 %v2658, %v2866
        %v2883 = vadd.f32 %v2659, %v2867
        %v2884 = vadd.f32 %v2660, %v2868
        %v2885 = vadd.f32 %v2661, %v2869
        %v2886 = vadd.f32 %v2662, %v2870
        %v2887 = vadd.f32 %v2663, %v2871
        %v2888 = vadd.f32 %v2664, %v2872
        %2889 = vrot.lane.b32.xlu0 %v1529, 1
        %v2890 = vpop.permute.xlu0 %2889
        %2891 = vrot.lane.b32.xlu0 %v1530, 1
        %v2892 = vpop.permute.xlu0 %2891
        %2893 = vrot.lane.b32.xlu0 %v1531, 1
        %v2894 = vpop.permute.xlu0 %2893
        %2895 = vrot.lane.b32.xlu0 %v1532, 1
        %v2896 = vpop.permute.xlu0 %2895
        %2897 = vrot.lane.b32.xlu0 %v1533, 1
        %v2898 = vpop.permute.xlu0 %2897
        %2899 = vrot.lane.b32.xlu0 %v1534, 1
        %v2900 = vpop.permute.xlu0 %2899
        %2901 = vrot.lane.b32.xlu0 %v1535, 1
        %v2902 = vpop.permute.xlu0 %2901
        %2903 = vrot.lane.b32.xlu0 %v1536, 1
        %v2904 = vpop.permute.xlu0 %2903
        %2905 = vrot.lane.b32.xlu0 %v1537, 1
        %v2906 = vpop.permute.xlu0 %2905
        %2907 = vrot.lane.b32.xlu0 %v1538, 1
        %v2908 = vpop.permute.xlu0 %2907
        %2909 = vrot.lane.b32.xlu0 %v1539, 1
        %v2910 = vpop.permute.xlu0 %2909
        %2911 = vrot.lane.b32.xlu0 %v1540, 1
        %v2912 = vpop.permute.xlu0 %2911
        %2913 = vrot.lane.b32.xlu0 %v1541, 1
        %v2914 = vpop.permute.xlu0 %2913
        %2915 = vrot.lane.b32.xlu0 %v1542, 1
        %v2916 = vpop.permute.xlu0 %2915
        %2917 = vrot.lane.b32.xlu0 %v1543, 1
        %v2918 = vpop.permute.xlu0 %2917
        %2919 = vrot.lane.b32.xlu0 %v1544, 1
        %v2920 = vpop.permute.xlu0 %2919
        %2921 = vset.pattern.permute.xlu0 6
        %2922 = vperm.xlu0 %2921, %v980
        %v2923 = vpop.permute.xlu0 %2922
        %2925 = vset.pattern.permute.xlu0 6
        %2926 = vperm.xlu0 %2925, %v981
        %v2927 = vpop.permute.xlu0 %2926
        %2929 = vset.pattern.permute.xlu0 6
        %2930 = vperm.xlu0 %2929, %v982
        %v2931 = vpop.permute.xlu0 %2930
        %2933 = vset.pattern.permute.xlu0 6
        %2934 = vperm.xlu0 %2933, %v983
        %v2935 = vpop.permute.xlu0 %2934
        %2937 = vset.pattern.permute.xlu0 6
        %2938 = vperm.xlu0 %2937, %v984
        %v2939 = vpop.permute.xlu0 %2938
        %2941 = vset.pattern.permute.xlu0 6
        %2942 = vperm.xlu0 %2941, %v985
        %v2943 = vpop.permute.xlu0 %2942
        %2945 = vset.pattern.permute.xlu0 6
        %2946 = vperm.xlu0 %2945, %v986
        %v2947 = vpop.permute.xlu0 %2946
        %2949 = vset.pattern.permute.xlu0 6
        %2950 = vperm.xlu0 %2949, %v987
        %v2951 = vpop.permute.xlu0 %2950
        %2953 = vset.pattern.permute.xlu0 6
        %2954 = vperm.xlu0 %2953, %v988
        %v2955 = vpop.permute.xlu0 %2954
        %2957 = vset.pattern.permute.xlu0 6
        %2958 = vperm.xlu0 %2957, %v989
        %v2959 = vpop.permute.xlu0 %2958
        %2961 = vset.pattern.permute.xlu0 6
        %2962 = vperm.xlu0 %2961, %v990
        %v2963 = vpop.permute.xlu0 %2962
        %2965 = vset.pattern.permute.xlu0 6
        %2966 = vperm.xlu0 %2965, %v991
        %v2967 = vpop.permute.xlu0 %2966
        %2969 = vset.pattern.permute.xlu0 6
        %2970 = vperm.xlu0 %2969, %v992
        %v2971 = vpop.permute.xlu0 %2970
        %2973 = vset.pattern.permute.xlu0 6
        %2974 = vperm.xlu0 %2973, %v993
        %v2975 = vpop.permute.xlu0 %2974
        %2977 = vset.pattern.permute.xlu0 6
        %2978 = vperm.xlu0 %2977, %v994
        %v2979 = vpop.permute.xlu0 %2978
        %2981 = vset.pattern.permute.xlu0 6
        %2982 = vperm.xlu0 %2981, %v995
        %v2983 = vpop.permute.xlu0 %2982
        %v2985 = vmul.f32 %v2923, %v2890
        %v2986 = vmul.f32 %v2927, %v2892
        %v2987 = vmul.f32 %v2931, %v2894
        %v2988 = vmul.f32 %v2935, %v2896
        %v2989 = vmul.f32 %v2939, %v2898
        %v2990 = vmul.f32 %v2943, %v2900
        %v2991 = vmul.f32 %v2947, %v2902
        %v2992 = vmul.f32 %v2951, %v2904
        %v2993 = vmul.f32 %v2955, %v2906
        %v2994 = vmul.f32 %v2959, %v2908
        %v2995 = vmul.f32 %v2963, %v2910
        %v2996 = vmul.f32 %v2967, %v2912
        %v2997 = vmul.f32 %v2971, %v2914
        %v2998 = vmul.f32 %v2975, %v2916
        %v2999 = vmul.f32 %v2979, %v2918
        %v3000 = vmul.f32 %v2983, %v2920
        %v3001 = vadd.f32 %v2777, %v2985
        %v3002 = vadd.f32 %v2778, %v2986
        %v3003 = vadd.f32 %v2779, %v2987
        %v3004 = vadd.f32 %v2780, %v2988
        %v3005 = vadd.f32 %v2781, %v2989
        %v3006 = vadd.f32 %v2782, %v2990
        %v3007 = vadd.f32 %v2783, %v2991
        %v3008 = vadd.f32 %v2784, %v2992
        %v3009 = vadd.f32 %v2785, %v2993
        %v3010 = vadd.f32 %v2786, %v2994
        %v3011 = vadd.f32 %v2787, %v2995
        %v3012 = vadd.f32 %v2788, %v2996
        %v3013 = vadd.f32 %v2789, %v2997
        %v3014 = vadd.f32 %v2790, %v2998
        %v3015 = vadd.f32 %v2791, %v2999
        %v3016 = vadd.f32 %v2792, %v3000
        %3017 = vset.pattern.permute.xlu0 22
        %3018 = vperm.xlu0 %3017, %v980
        %v3019 = vpop.permute.xlu0 %3018
        %3021 = vset.pattern.permute.xlu0 22
        %3022 = vperm.xlu0 %3021, %v981
        %v3023 = vpop.permute.xlu0 %3022
        %3025 = vset.pattern.permute.xlu0 22
        %3026 = vperm.xlu0 %3025, %v982
        %v3027 = vpop.permute.xlu0 %3026
        %3029 = vset.pattern.permute.xlu0 22
        %3030 = vperm.xlu0 %3029, %v983
        %v3031 = vpop.permute.xlu0 %3030
        %3033 = vset.pattern.permute.xlu0 22
        %3034 = vperm.xlu0 %3033, %v984
        %v3035 = vpop.permute.xlu0 %3034
        %3037 = vset.pattern.permute.xlu0 22
        %3038 = vperm.xlu0 %3037, %v985
        %v3039 = vpop.permute.xlu0 %3038
        %3041 = vset.pattern.permute.xlu0 22
        %3042 = vperm.xlu0 %3041, %v986
        %v3043 = vpop.permute.xlu0 %3042
        %3045 = vset.pattern.permute.xlu0 22
        %3046 = vperm.xlu0 %3045, %v987
        %v3047 = vpop.permute.xlu0 %3046
        %3049 = vset.pattern.permute.xlu0 22
        %3050 = vperm.xlu0 %3049, %v988
        %v3051 = vpop.permute.xlu0 %3050
        %3053 = vset.pattern.permute.xlu0 22
        %3054 = vperm.xlu0 %3053, %v989
        %v3055 = vpop.permute.xlu0 %3054
        %3057 = vset.pattern.permute.xlu0 22
        %3058 = vperm.xlu0 %3057, %v990
        %v3059 = vpop.permute.xlu0 %3058
        %3061 = vset.pattern.permute.xlu0 22
        %3062 = vperm.xlu0 %3061, %v991
        %v3063 = vpop.permute.xlu0 %3062
        %3065 = vset.pattern.permute.xlu0 22
        %3066 = vperm.xlu0 %3065, %v992
        %v3067 = vpop.permute.xlu0 %3066
        %3069 = vset.pattern.permute.xlu0 22
        %3070 = vperm.xlu0 %3069, %v993
        %v3071 = vpop.permute.xlu0 %3070
        %3073 = vset.pattern.permute.xlu0 22
        %3074 = vperm.xlu0 %3073, %v994
        %v3075 = vpop.permute.xlu0 %3074
        %3077 = vset.pattern.permute.xlu0 22
        %3078 = vperm.xlu0 %3077, %v995
        %v3079 = vpop.permute.xlu0 %3078
        %v3081 = vmul.f32 %v3019, %v2890
        %v3082 = vmul.f32 %v3023, %v2892
        %v3083 = vmul.f32 %v3027, %v2894
        %v3084 = vmul.f32 %v3031, %v2896
        %v3085 = vmul.f32 %v3035, %v2898
        %v3086 = vmul.f32 %v3039, %v2900
        %v3087 = vmul.f32 %v3043, %v2902
        %v3088 = vmul.f32 %v3047, %v2904
        %v3089 = vmul.f32 %v3051, %v2906
        %v3090 = vmul.f32 %v3055, %v2908
        %v3091 = vmul.f32 %v3059, %v2910
        %v3092 = vmul.f32 %v3063, %v2912
        %v3093 = vmul.f32 %v3067, %v2914
        %v3094 = vmul.f32 %v3071, %v2916
        %v3095 = vmul.f32 %v3075, %v2918
        %v3096 = vmul.f32 %v3079, %v2920
        %v3097 = vadd.f32 %v2873, %v3081
        %v3098 = vadd.f32 %v2874, %v3082
        %v3099 = vadd.f32 %v2875, %v3083
        %v3100 = vadd.f32 %v2876, %v3084
        %v3101 = vadd.f32 %v2877, %v3085
        %v3102 = vadd.f32 %v2878, %v3086
        %v3103 = vadd.f32 %v2879, %v3087
        %v3104 = vadd.f32 %v2880, %v3088
        %v3105 = vadd.f32 %v2881, %v3089
        %v3106 = vadd.f32 %v2882, %v3090
        %v3107 = vadd.f32 %v2883, %v3091
        %v3108 = vadd.f32 %v2884, %v3092
        %v3109 = vadd.f32 %v2885, %v3093
        %v3110 = vadd.f32 %v2886, %v3094
        %v3111 = vadd.f32 %v2887, %v3095
        %v3112 = vadd.f32 %v2888, %v3096
        %3113 = vset.pattern.permute.xlu0 7
        %3114 = vperm.xlu0 %3113, %v980
        %v3115 = vpop.permute.xlu0 %3114
        %3117 = vset.pattern.permute.xlu0 7
        %3118 = vperm.xlu0 %3117, %v981
        %v3119 = vpop.permute.xlu0 %3118
        %3121 = vset.pattern.permute.xlu0 7
        %3122 = vperm.xlu0 %3121, %v982
        %v3123 = vpop.permute.xlu0 %3122
        %3125 = vset.pattern.permute.xlu0 7
        %3126 = vperm.xlu0 %3125, %v983
        %v3127 = vpop.permute.xlu0 %3126
        %3129 = vset.pattern.permute.xlu0 7
        %3130 = vperm.xlu0 %3129, %v984
        %v3131 = vpop.permute.xlu0 %3130
        %3133 = vset.pattern.permute.xlu0 7
        %3134 = vperm.xlu0 %3133, %v985
        %v3135 = vpop.permute.xlu0 %3134
        %3137 = vset.pattern.permute.xlu0 7
        %3138 = vperm.xlu0 %3137, %v986
        %v3139 = vpop.permute.xlu0 %3138
        %3141 = vset.pattern.permute.xlu0 7
        %3142 = vperm.xlu0 %3141, %v987
        %v3143 = vpop.permute.xlu0 %3142
        %3145 = vset.pattern.permute.xlu0 7
        %3146 = vperm.xlu0 %3145, %v988
        %v3147 = vpop.permute.xlu0 %3146
        %3149 = vset.pattern.permute.xlu0 7
        %3150 = vperm.xlu0 %3149, %v989
        %v3151 = vpop.permute.xlu0 %3150
        %3153 = vset.pattern.permute.xlu0 7
        %3154 = vperm.xlu0 %3153, %v990
        %v3155 = vpop.permute.xlu0 %3154
        %3157 = vset.pattern.permute.xlu0 7
        %3158 = vperm.xlu0 %3157, %v991
        %v3159 = vpop.permute.xlu0 %3158
        %3161 = vset.pattern.permute.xlu0 7
        %3162 = vperm.xlu0 %3161, %v992
        %v3163 = vpop.permute.xlu0 %3162
        %3165 = vset.pattern.permute.xlu0 7
        %3166 = vperm.xlu0 %3165, %v993
        %v3167 = vpop.permute.xlu0 %3166
        %3169 = vset.pattern.permute.xlu0 7
        %3170 = vperm.xlu0 %3169, %v994
        %v3171 = vpop.permute.xlu0 %3170
        %3173 = vset.pattern.permute.xlu0 7
        %3174 = vperm.xlu0 %3173, %v995
        %v3175 = vpop.permute.xlu0 %3174
        %v3177 = vmul.f32 %v3115, %v1529
        %v3178 = vmul.f32 %v3119, %v1530
        %v3179 = vmul.f32 %v3123, %v1531
        %v3180 = vmul.f32 %v3127, %v1532
        %v3181 = vmul.f32 %v3131, %v1533
        %v3182 = vmul.f32 %v3135, %v1534
        %v3183 = vmul.f32 %v3139, %v1535
        %v3184 = vmul.f32 %v3143, %v1536
        %v3185 = vmul.f32 %v3147, %v1537
        %v3186 = vmul.f32 %v3151, %v1538
        %v3187 = vmul.f32 %v3155, %v1539
        %v3188 = vmul.f32 %v3159, %v1540
        %v3189 = vmul.f32 %v3163, %v1541
        %v3190 = vmul.f32 %v3167, %v1542
        %v3191 = vmul.f32 %v3171, %v1543
        %v3192 = vmul.f32 %v3175, %v1544
        %v3193 = vadd.f32 %v3001, %v3177
        %v3194 = vadd.f32 %v3002, %v3178
        %v3195 = vadd.f32 %v3003, %v3179
        %v3196 = vadd.f32 %v3004, %v3180
        %v3197 = vadd.f32 %v3005, %v3181
        %v3198 = vadd.f32 %v3006, %v3182
        %v3199 = vadd.f32 %v3007, %v3183
        %v3200 = vadd.f32 %v3008, %v3184
        %v3201 = vadd.f32 %v3009, %v3185
        %v3202 = vadd.f32 %v3010, %v3186
        %v3203 = vadd.f32 %v3011, %v3187
        %v3204 = vadd.f32 %v3012, %v3188
        %v3205 = vadd.f32 %v3013, %v3189
        %v3206 = vadd.f32 %v3014, %v3190
        %v3207 = vadd.f32 %v3015, %v3191
        %v3208 = vadd.f32 %v3016, %v3192
        %3209 = vset.pattern.permute.xlu0 23
        %3210 = vperm.xlu0 %3209, %v980
        %v3211 = vpop.permute.xlu0 %3210
        %3213 = vset.pattern.permute.xlu0 23
        %3214 = vperm.xlu0 %3213, %v981
        %v3215 = vpop.permute.xlu0 %3214
        %3217 = vset.pattern.permute.xlu0 23
        %3218 = vperm.xlu0 %3217, %v982
        %v3219 = vpop.permute.xlu0 %3218
        %3221 = vset.pattern.permute.xlu0 23
        %3222 = vperm.xlu0 %3221, %v983
        %v3223 = vpop.permute.xlu0 %3222
        %3225 = vset.pattern.permute.xlu0 23
        %3226 = vperm.xlu0 %3225, %v984
        %v3227 = vpop.permute.xlu0 %3226
        %3229 = vset.pattern.permute.xlu0 23
        %3230 = vperm.xlu0 %3229, %v985
        %v3231 = vpop.permute.xlu0 %3230
        %3233 = vset.pattern.permute.xlu0 23
        %3234 = vperm.xlu0 %3233, %v986
        %v3235 = vpop.permute.xlu0 %3234
        %3237 = vset.pattern.permute.xlu0 23
        %3238 = vperm.xlu0 %3237, %v987
        %v3239 = vpop.permute.xlu0 %3238
        %3241 = vset.pattern.permute.xlu0 23
        %3242 = vperm.xlu0 %3241, %v988
        %v3243 = vpop.permute.xlu0 %3242
        %3245 = vset.pattern.permute.xlu0 23
        %3246 = vperm.xlu0 %3245, %v989
        %v3247 = vpop.permute.xlu0 %3246
        %3249 = vset.pattern.permute.xlu0 23
        %3250 = vperm.xlu0 %3249, %v990
        %v3251 = vpop.permute.xlu0 %3250
        %3253 = vset.pattern.permute.xlu0 23
        %3254 = vperm.xlu0 %3253, %v991
        %v3255 = vpop.permute.xlu0 %3254
        %3257 = vset.pattern.permute.xlu0 23
        %3258 = vperm.xlu0 %3257, %v992
        %v3259 = vpop.permute.xlu0 %3258
        %3261 = vset.pattern.permute.xlu0 23
        %3262 = vperm.xlu0 %3261, %v993
        %v3263 = vpop.permute.xlu0 %3262
        %3265 = vset.pattern.permute.xlu0 23
        %3266 = vperm.xlu0 %3265, %v994
        %v3267 = vpop.permute.xlu0 %3266
        %3269 = vset.pattern.permute.xlu0 23
        %3270 = vperm.xlu0 %3269, %v995
        %v3271 = vpop.permute.xlu0 %3270
        %v3273 = vmul.f32 %v3211, %v1529
        %v3274 = vmul.f32 %v3215, %v1530
        %v3275 = vmul.f32 %v3219, %v1531
        %v3276 = vmul.f32 %v3223, %v1532
        %v3277 = vmul.f32 %v3227, %v1533
        %v3278 = vmul.f32 %v3231, %v1534
        %v3279 = vmul.f32 %v3235, %v1535
        %v3280 = vmul.f32 %v3239, %v1536
        %v3281 = vmul.f32 %v3243, %v1537
        %v3282 = vmul.f32 %v3247, %v1538
        %v3283 = vmul.f32 %v3251, %v1539
        %v3284 = vmul.f32 %v3255, %v1540
        %v3285 = vmul.f32 %v3259, %v1541
        %v3286 = vmul.f32 %v3263, %v1542
        %v3287 = vmul.f32 %v3267, %v1543
        %v3288 = vmul.f32 %v3271, %v1544
        %v3289 = vadd.f32 %v3097, %v3273
        %v3290 = vadd.f32 %v3098, %v3274
        %v3291 = vadd.f32 %v3099, %v3275
        %v3292 = vadd.f32 %v3100, %v3276
        %v3293 = vadd.f32 %v3101, %v3277
        %v3294 = vadd.f32 %v3102, %v3278
        %v3295 = vadd.f32 %v3103, %v3279
        %v3296 = vadd.f32 %v3104, %v3280
        %v3297 = vadd.f32 %v3105, %v3281
        %v3298 = vadd.f32 %v3106, %v3282
        %v3299 = vadd.f32 %v3107, %v3283
        %v3300 = vadd.f32 %v3108, %v3284
        %v3301 = vadd.f32 %v3109, %v3285
        %v3302 = vadd.f32 %v3110, %v3286
        %v3303 = vadd.f32 %v3111, %v3287
        %v3304 = vadd.f32 %v3112, %v3288
        %3305 = vrot.lane.b32.xlu0 %v1529, 127
        %v3306 = vpop.permute.xlu0 %3305
        %3307 = vrot.lane.b32.xlu0 %v1530, 127
        %v3308 = vpop.permute.xlu0 %3307
        %3309 = vrot.lane.b32.xlu0 %v1531, 127
        %v3310 = vpop.permute.xlu0 %3309
        %3311 = vrot.lane.b32.xlu0 %v1532, 127
        %v3312 = vpop.permute.xlu0 %3311
        %3313 = vrot.lane.b32.xlu0 %v1533, 127
        %v3314 = vpop.permute.xlu0 %3313
        %3315 = vrot.lane.b32.xlu0 %v1534, 127
        %v3316 = vpop.permute.xlu0 %3315
        %3317 = vrot.lane.b32.xlu0 %v1535, 127
        %v3318 = vpop.permute.xlu0 %3317
        %3319 = vrot.lane.b32.xlu0 %v1536, 127
        %v3320 = vpop.permute.xlu0 %3319
        %3321 = vrot.lane.b32.xlu0 %v1537, 127
        %v3322 = vpop.permute.xlu0 %3321
        %3323 = vrot.lane.b32.xlu0 %v1538, 127
        %v3324 = vpop.permute.xlu0 %3323
        %3325 = vrot.lane.b32.xlu0 %v1539, 127
        %v3326 = vpop.permute.xlu0 %3325
        %3327 = vrot.lane.b32.xlu0 %v1540, 127
        %v3328 = vpop.permute.xlu0 %3327
        %3329 = vrot.lane.b32.xlu0 %v1541, 127
        %v3330 = vpop.permute.xlu0 %3329
        %3331 = vrot.lane.b32.xlu0 %v1542, 127
        %v3332 = vpop.permute.xlu0 %3331
        %3333 = vrot.lane.b32.xlu0 %v1543, 127
        %v3334 = vpop.permute.xlu0 %3333
        %3335 = vrot.lane.b32.xlu0 %v1544, 127
        %v3336 = vpop.permute.xlu0 %3335
        %3337 = vset.pattern.permute.xlu0 8
        %3338 = vperm.xlu0 %3337, %v980
        %v3339 = vpop.permute.xlu0 %3338
        %3341 = vset.pattern.permute.xlu0 8
        %3342 = vperm.xlu0 %3341, %v981
        %v3343 = vpop.permute.xlu0 %3342
        %3345 = vset.pattern.permute.xlu0 8
        %3346 = vperm.xlu0 %3345, %v982
        %v3347 = vpop.permute.xlu0 %3346
        %3349 = vset.pattern.permute.xlu0 8
        %3350 = vperm.xlu0 %3349, %v983
        %v3351 = vpop.permute.xlu0 %3350
        %3353 = vset.pattern.permute.xlu0 8
        %3354 = vperm.xlu0 %3353, %v984
        %v3355 = vpop.permute.xlu0 %3354
        %3357 = vset.pattern.permute.xlu0 8
        %3358 = vperm.xlu0 %3357, %v985
        %v3359 = vpop.permute.xlu0 %3358
        %3361 = vset.pattern.permute.xlu0 8
        %3362 = vperm.xlu0 %3361, %v986
        %v3363 = vpop.permute.xlu0 %3362
        %3365 = vset.pattern.permute.xlu0 8
        %3366 = vperm.xlu0 %3365, %v987
        %v3367 = vpop.permute.xlu0 %3366
        %3369 = vset.pattern.permute.xlu0 8
        %3370 = vperm.xlu0 %3369, %v988
        %v3371 = vpop.permute.xlu0 %3370
        %3373 = vset.pattern.permute.xlu0 8
        %3374 = vperm.xlu0 %3373, %v989
        %v3375 = vpop.permute.xlu0 %3374
        %3377 = vset.pattern.permute.xlu0 8
        %3378 = vperm.xlu0 %3377, %v990
        %v3379 = vpop.permute.xlu0 %3378
        %3381 = vset.pattern.permute.xlu0 8
        %3382 = vperm.xlu0 %3381, %v991
        %v3383 = vpop.permute.xlu0 %3382
        %3385 = vset.pattern.permute.xlu0 8
        %3386 = vperm.xlu0 %3385, %v992
        %v3387 = vpop.permute.xlu0 %3386
        %3389 = vset.pattern.permute.xlu0 8
        %3390 = vperm.xlu0 %3389, %v993
        %v3391 = vpop.permute.xlu0 %3390
        %3393 = vset.pattern.permute.xlu0 8
        %3394 = vperm.xlu0 %3393, %v994
        %v3395 = vpop.permute.xlu0 %3394
        %3397 = vset.pattern.permute.xlu0 8
        %3398 = vperm.xlu0 %3397, %v995
        %v3399 = vpop.permute.xlu0 %3398
        %v3401 = vmul.f32 %v3339, %v3306
        %v3402 = vmul.f32 %v3343, %v3308
        %v3403 = vmul.f32 %v3347, %v3310
        %v3404 = vmul.f32 %v3351, %v3312
        %v3405 = vmul.f32 %v3355, %v3314
        %v3406 = vmul.f32 %v3359, %v3316
        %v3407 = vmul.f32 %v3363, %v3318
        %v3408 = vmul.f32 %v3367, %v3320
        %v3409 = vmul.f32 %v3371, %v3322
        %v3410 = vmul.f32 %v3375, %v3324
        %v3411 = vmul.f32 %v3379, %v3326
        %v3412 = vmul.f32 %v3383, %v3328
        %v3413 = vmul.f32 %v3387, %v3330
        %v3414 = vmul.f32 %v3391, %v3332
        %v3415 = vmul.f32 %v3395, %v3334
        %v3416 = vmul.f32 %v3399, %v3336
        %v3417 = vadd.f32 %v3193, %v3401
        %v3418 = vadd.f32 %v3194, %v3402
        %v3419 = vadd.f32 %v3195, %v3403
        %v3420 = vadd.f32 %v3196, %v3404
        %v3421 = vadd.f32 %v3197, %v3405
        %v3422 = vadd.f32 %v3198, %v3406
        %v3423 = vadd.f32 %v3199, %v3407
        %v3424 = vadd.f32 %v3200, %v3408
        %v3425 = vadd.f32 %v3201, %v3409
        %v3426 = vadd.f32 %v3202, %v3410
        %v3427 = vadd.f32 %v3203, %v3411
        %v3428 = vadd.f32 %v3204, %v3412
        %v3429 = vadd.f32 %v3205, %v3413
        %v3430 = vadd.f32 %v3206, %v3414
        %v3431 = vadd.f32 %v3207, %v3415
        %v3432 = vadd.f32 %v3208, %v3416
        %3433 = vset.pattern.permute.xlu0 24
        %3434 = vperm.xlu0 %3433, %v980
        %v3435 = vpop.permute.xlu0 %3434
        %3437 = vset.pattern.permute.xlu0 24
        %3438 = vperm.xlu0 %3437, %v981
        %v3439 = vpop.permute.xlu0 %3438
        %3441 = vset.pattern.permute.xlu0 24
        %3442 = vperm.xlu0 %3441, %v982
        %v3443 = vpop.permute.xlu0 %3442
        %3445 = vset.pattern.permute.xlu0 24
        %3446 = vperm.xlu0 %3445, %v983
        %v3447 = vpop.permute.xlu0 %3446
        %3449 = vset.pattern.permute.xlu0 24
        %3450 = vperm.xlu0 %3449, %v984
        %v3451 = vpop.permute.xlu0 %3450
        %3453 = vset.pattern.permute.xlu0 24
        %3454 = vperm.xlu0 %3453, %v985
        %v3455 = vpop.permute.xlu0 %3454
        %3457 = vset.pattern.permute.xlu0 24
        %3458 = vperm.xlu0 %3457, %v986
        %v3459 = vpop.permute.xlu0 %3458
        %3461 = vset.pattern.permute.xlu0 24
        %3462 = vperm.xlu0 %3461, %v987
        %v3463 = vpop.permute.xlu0 %3462
        %3465 = vset.pattern.permute.xlu0 24
        %3466 = vperm.xlu0 %3465, %v988
        %v3467 = vpop.permute.xlu0 %3466
        %3469 = vset.pattern.permute.xlu0 24
        %3470 = vperm.xlu0 %3469, %v989
        %v3471 = vpop.permute.xlu0 %3470
        %3473 = vset.pattern.permute.xlu0 24
        %3474 = vperm.xlu0 %3473, %v990
        %v3475 = vpop.permute.xlu0 %3474
        %3477 = vset.pattern.permute.xlu0 24
        %3478 = vperm.xlu0 %3477, %v991
        %v3479 = vpop.permute.xlu0 %3478
        %3481 = vset.pattern.permute.xlu0 24
        %3482 = vperm.xlu0 %3481, %v992
        %v3483 = vpop.permute.xlu0 %3482
        %3485 = vset.pattern.permute.xlu0 24
        %3486 = vperm.xlu0 %3485, %v993
        %v3487 = vpop.permute.xlu0 %3486
        %3489 = vset.pattern.permute.xlu0 24
        %3490 = vperm.xlu0 %3489, %v994
        %v3491 = vpop.permute.xlu0 %3490
        %3493 = vset.pattern.permute.xlu0 24
        %3494 = vperm.xlu0 %3493, %v995
        %v3495 = vpop.permute.xlu0 %3494
        %v3497 = vmul.f32 %v3435, %v3306
        %v3498 = vmul.f32 %v3439, %v3308
        %v3499 = vmul.f32 %v3443, %v3310
        %v3500 = vmul.f32 %v3447, %v3312
        %v3501 = vmul.f32 %v3451, %v3314
        %v3502 = vmul.f32 %v3455, %v3316
        %v3503 = vmul.f32 %v3459, %v3318
        %v3504 = vmul.f32 %v3463, %v3320
        %v3505 = vmul.f32 %v3467, %v3322
        %v3506 = vmul.f32 %v3471, %v3324
        %v3507 = vmul.f32 %v3475, %v3326
        %v3508 = vmul.f32 %v3479, %v3328
        %v3509 = vmul.f32 %v3483, %v3330
        %v3510 = vmul.f32 %v3487, %v3332
        %v3511 = vmul.f32 %v3491, %v3334
        %v3512 = vmul.f32 %v3495, %v3336
        %v3513 = vadd.f32 %v3289, %v3497
        %v3514 = vadd.f32 %v3290, %v3498
        %v3515 = vadd.f32 %v3291, %v3499
        %v3516 = vadd.f32 %v3292, %v3500
        %v3517 = vadd.f32 %v3293, %v3501
        %v3518 = vadd.f32 %v3294, %v3502
        %v3519 = vadd.f32 %v3295, %v3503
        %v3520 = vadd.f32 %v3296, %v3504
        %v3521 = vadd.f32 %v3297, %v3505
        %v3522 = vadd.f32 %v3298, %v3506
        %v3523 = vadd.f32 %v3299, %v3507
        %v3524 = vadd.f32 %v3300, %v3508
        %v3525 = vadd.f32 %v3301, %v3509
        %v3526 = vadd.f32 %v3302, %v3510
        %v3527 = vadd.f32 %v3303, %v3511
        %v3528 = vadd.f32 %v3304, %v3512
        %3529 = vrot.lane.b32.xlu0 %v1529, 126
        %v3530 = vpop.permute.xlu0 %3529
        %3531 = vrot.lane.b32.xlu0 %v1530, 126
        %v3532 = vpop.permute.xlu0 %3531
        %3533 = vrot.lane.b32.xlu0 %v1531, 126
        %v3534 = vpop.permute.xlu0 %3533
        %3535 = vrot.lane.b32.xlu0 %v1532, 126
        %v3536 = vpop.permute.xlu0 %3535
        %3537 = vrot.lane.b32.xlu0 %v1533, 126
        %v3538 = vpop.permute.xlu0 %3537
        %3539 = vrot.lane.b32.xlu0 %v1534, 126
        %v3540 = vpop.permute.xlu0 %3539
        %3541 = vrot.lane.b32.xlu0 %v1535, 126
        %v3542 = vpop.permute.xlu0 %3541
        %3543 = vrot.lane.b32.xlu0 %v1536, 126
        %v3544 = vpop.permute.xlu0 %3543
        %3545 = vrot.lane.b32.xlu0 %v1537, 126
        %v3546 = vpop.permute.xlu0 %3545
        %3547 = vrot.lane.b32.xlu0 %v1538, 126
        %v3548 = vpop.permute.xlu0 %3547
        %3549 = vrot.lane.b32.xlu0 %v1539, 126
        %v3550 = vpop.permute.xlu0 %3549
        %3551 = vrot.lane.b32.xlu0 %v1540, 126
        %v3552 = vpop.permute.xlu0 %3551
        %3553 = vrot.lane.b32.xlu0 %v1541, 126
        %v3554 = vpop.permute.xlu0 %3553
        %3555 = vrot.lane.b32.xlu0 %v1542, 126
        %v3556 = vpop.permute.xlu0 %3555
        %3557 = vrot.lane.b32.xlu0 %v1543, 126
        %v3558 = vpop.permute.xlu0 %3557
        %3559 = vrot.lane.b32.xlu0 %v1544, 126
        %v3560 = vpop.permute.xlu0 %3559
        %3561 = vset.pattern.permute.xlu0 9
        %3562 = vperm.xlu0 %3561, %v980
        %v3563 = vpop.permute.xlu0 %3562
        %3565 = vset.pattern.permute.xlu0 9
        %3566 = vperm.xlu0 %3565, %v981
        %v3567 = vpop.permute.xlu0 %3566
        %3569 = vset.pattern.permute.xlu0 9
        %3570 = vperm.xlu0 %3569, %v982
        %v3571 = vpop.permute.xlu0 %3570
        %3573 = vset.pattern.permute.xlu0 9
        %3574 = vperm.xlu0 %3573, %v983
        %v3575 = vpop.permute.xlu0 %3574
        %3577 = vset.pattern.permute.xlu0 9
        %3578 = vperm.xlu0 %3577, %v984
        %v3579 = vpop.permute.xlu0 %3578
        %3581 = vset.pattern.permute.xlu0 9
        %3582 = vperm.xlu0 %3581, %v985
        %v3583 = vpop.permute.xlu0 %3582
        %3585 = vset.pattern.permute.xlu0 9
        %3586 = vperm.xlu0 %3585, %v986
        %v3587 = vpop.permute.xlu0 %3586
        %3589 = vset.pattern.permute.xlu0 9
        %3590 = vperm.xlu0 %3589, %v987
        %v3591 = vpop.permute.xlu0 %3590
        %3593 = vset.pattern.permute.xlu0 9
        %3594 = vperm.xlu0 %3593, %v988
        %v3595 = vpop.permute.xlu0 %3594
        %3597 = vset.pattern.permute.xlu0 9
        %3598 = vperm.xlu0 %3597, %v989
        %v3599 = vpop.permute.xlu0 %3598
        %3601 = vset.pattern.permute.xlu0 9
        %3602 = vperm.xlu0 %3601, %v990
        %v3603 = vpop.permute.xlu0 %3602
        %3605 = vset.pattern.permute.xlu0 9
        %3606 = vperm.xlu0 %3605, %v991
        %v3607 = vpop.permute.xlu0 %3606
        %3609 = vset.pattern.permute.xlu0 9
        %3610 = vperm.xlu0 %3609, %v992
        %v3611 = vpop.permute.xlu0 %3610
        %3613 = vset.pattern.permute.xlu0 9
        %3614 = vperm.xlu0 %3613, %v993
        %v3615 = vpop.permute.xlu0 %3614
        %3617 = vset.pattern.permute.xlu0 9
        %3618 = vperm.xlu0 %3617, %v994
        %v3619 = vpop.permute.xlu0 %3618
        %3621 = vset.pattern.permute.xlu0 9
        %3622 = vperm.xlu0 %3621, %v995
        %v3623 = vpop.permute.xlu0 %3622
        %v3625 = vmul.f32 %v3563, %v3530
        %v3626 = vmul.f32 %v3567, %v3532
        %v3627 = vmul.f32 %v3571, %v3534
        %v3628 = vmul.f32 %v3575, %v3536
        %v3629 = vmul.f32 %v3579, %v3538
        %v3630 = vmul.f32 %v3583, %v3540
        %v3631 = vmul.f32 %v3587, %v3542
        %v3632 = vmul.f32 %v3591, %v3544
        %v3633 = vmul.f32 %v3595, %v3546
        %v3634 = vmul.f32 %v3599, %v3548
        %v3635 = vmul.f32 %v3603, %v3550
        %v3636 = vmul.f32 %v3607, %v3552
        %v3637 = vmul.f32 %v3611, %v3554
        %v3638 = vmul.f32 %v3615, %v3556
        %v3639 = vmul.f32 %v3619, %v3558
        %v3640 = vmul.f32 %v3623, %v3560
        %v3641 = vadd.f32 %v3417, %v3625
        %v3642 = vadd.f32 %v3418, %v3626
        %v3643 = vadd.f32 %v3419, %v3627
        %v3644 = vadd.f32 %v3420, %v3628
        %v3645 = vadd.f32 %v3421, %v3629
        %v3646 = vadd.f32 %v3422, %v3630
        %v3647 = vadd.f32 %v3423, %v3631
        %v3648 = vadd.f32 %v3424, %v3632
        %v3649 = vadd.f32 %v3425, %v3633
        %v3650 = vadd.f32 %v3426, %v3634
        %v3651 = vadd.f32 %v3427, %v3635
        %v3652 = vadd.f32 %v3428, %v3636
        %v3653 = vadd.f32 %v3429, %v3637
        %v3654 = vadd.f32 %v3430, %v3638
        %v3655 = vadd.f32 %v3431, %v3639
        %v3656 = vadd.f32 %v3432, %v3640
        %3657 = vset.pattern.permute.xlu0 25
        %3658 = vperm.xlu0 %3657, %v980
        %v3659 = vpop.permute.xlu0 %3658
        %3661 = vset.pattern.permute.xlu0 25
        %3662 = vperm.xlu0 %3661, %v981
        %v3663 = vpop.permute.xlu0 %3662
        %3665 = vset.pattern.permute.xlu0 25
        %3666 = vperm.xlu0 %3665, %v982
        %v3667 = vpop.permute.xlu0 %3666
        %3669 = vset.pattern.permute.xlu0 25
        %3670 = vperm.xlu0 %3669, %v983
        %v3671 = vpop.permute.xlu0 %3670
        %3673 = vset.pattern.permute.xlu0 25
        %3674 = vperm.xlu0 %3673, %v984
        %v3675 = vpop.permute.xlu0 %3674
        %3677 = vset.pattern.permute.xlu0 25
        %3678 = vperm.xlu0 %3677, %v985
        %v3679 = vpop.permute.xlu0 %3678
        %3681 = vset.pattern.permute.xlu0 25
        %3682 = vperm.xlu0 %3681, %v986
        %v3683 = vpop.permute.xlu0 %3682
        %3685 = vset.pattern.permute.xlu0 25
        %3686 = vperm.xlu0 %3685, %v987
        %v3687 = vpop.permute.xlu0 %3686
        %3689 = vset.pattern.permute.xlu0 25
        %3690 = vperm.xlu0 %3689, %v988
        %v3691 = vpop.permute.xlu0 %3690
        %3693 = vset.pattern.permute.xlu0 25
        %3694 = vperm.xlu0 %3693, %v989
        %v3695 = vpop.permute.xlu0 %3694
        %3697 = vset.pattern.permute.xlu0 25
        %3698 = vperm.xlu0 %3697, %v990
        %v3699 = vpop.permute.xlu0 %3698
        %3701 = vset.pattern.permute.xlu0 25
        %3702 = vperm.xlu0 %3701, %v991
        %v3703 = vpop.permute.xlu0 %3702
        %3705 = vset.pattern.permute.xlu0 25
        %3706 = vperm.xlu0 %3705, %v992
        %v3707 = vpop.permute.xlu0 %3706
        %3709 = vset.pattern.permute.xlu0 25
        %3710 = vperm.xlu0 %3709, %v993
        %v3711 = vpop.permute.xlu0 %3710
        %3713 = vset.pattern.permute.xlu0 25
        %3714 = vperm.xlu0 %3713, %v994
        %v3715 = vpop.permute.xlu0 %3714
        %3717 = vset.pattern.permute.xlu0 25
        %3718 = vperm.xlu0 %3717, %v995
        %v3719 = vpop.permute.xlu0 %3718
        %v3721 = vmul.f32 %v3659, %v3530
        %v3722 = vmul.f32 %v3663, %v3532
        %v3723 = vmul.f32 %v3667, %v3534
        %v3724 = vmul.f32 %v3671, %v3536
        %v3725 = vmul.f32 %v3675, %v3538
        %v3726 = vmul.f32 %v3679, %v3540
        %v3727 = vmul.f32 %v3683, %v3542
        %v3728 = vmul.f32 %v3687, %v3544
        %v3729 = vmul.f32 %v3691, %v3546
        %v3730 = vmul.f32 %v3695, %v3548
        %v3731 = vmul.f32 %v3699, %v3550
        %v3732 = vmul.f32 %v3703, %v3552
        %v3733 = vmul.f32 %v3707, %v3554
        %v3734 = vmul.f32 %v3711, %v3556
        %v3735 = vmul.f32 %v3715, %v3558
        %v3736 = vmul.f32 %v3719, %v3560
        %v3737 = vadd.f32 %v3513, %v3721
        %v3738 = vadd.f32 %v3514, %v3722
        %v3739 = vadd.f32 %v3515, %v3723
        %v3740 = vadd.f32 %v3516, %v3724
        %v3741 = vadd.f32 %v3517, %v3725
        %v3742 = vadd.f32 %v3518, %v3726
        %v3743 = vadd.f32 %v3519, %v3727
        %v3744 = vadd.f32 %v3520, %v3728
        %v3745 = vadd.f32 %v3521, %v3729
        %v3746 = vadd.f32 %v3522, %v3730
        %v3747 = vadd.f32 %v3523, %v3731
        %v3748 = vadd.f32 %v3524, %v3732
        %v3749 = vadd.f32 %v3525, %v3733
        %v3750 = vadd.f32 %v3526, %v3734
        %v3751 = vadd.f32 %v3527, %v3735
        %v3752 = vadd.f32 %v3528, %v3736
        %3753 = vrot.lane.b32.xlu0 %v1529, 125
        %v3754 = vpop.permute.xlu0 %3753
        %3755 = vrot.lane.b32.xlu0 %v1530, 125
        %v3756 = vpop.permute.xlu0 %3755
        %3757 = vrot.lane.b32.xlu0 %v1531, 125
        %v3758 = vpop.permute.xlu0 %3757
        %3759 = vrot.lane.b32.xlu0 %v1532, 125
        %v3760 = vpop.permute.xlu0 %3759
        %3761 = vrot.lane.b32.xlu0 %v1533, 125
        %v3762 = vpop.permute.xlu0 %3761
        %3763 = vrot.lane.b32.xlu0 %v1534, 125
        %v3764 = vpop.permute.xlu0 %3763
        %3765 = vrot.lane.b32.xlu0 %v1535, 125
        %v3766 = vpop.permute.xlu0 %3765
        %3767 = vrot.lane.b32.xlu0 %v1536, 125
        %v3768 = vpop.permute.xlu0 %3767
        %3769 = vrot.lane.b32.xlu0 %v1537, 125
        %v3770 = vpop.permute.xlu0 %3769
        %3771 = vrot.lane.b32.xlu0 %v1538, 125
        %v3772 = vpop.permute.xlu0 %3771
        %3773 = vrot.lane.b32.xlu0 %v1539, 125
        %v3774 = vpop.permute.xlu0 %3773
        %3775 = vrot.lane.b32.xlu0 %v1540, 125
        %v3776 = vpop.permute.xlu0 %3775
        %3777 = vrot.lane.b32.xlu0 %v1541, 125
        %v3778 = vpop.permute.xlu0 %3777
        %3779 = vrot.lane.b32.xlu0 %v1542, 125
        %v3780 = vpop.permute.xlu0 %3779
        %3781 = vrot.lane.b32.xlu0 %v1543, 125
        %v3782 = vpop.permute.xlu0 %3781
        %3783 = vrot.lane.b32.xlu0 %v1544, 125
        %v3784 = vpop.permute.xlu0 %3783
        %3785 = vset.pattern.permute.xlu0 10
        %3786 = vperm.xlu0 %3785, %v980
        %v3787 = vpop.permute.xlu0 %3786
        %3789 = vset.pattern.permute.xlu0 10
        %3790 = vperm.xlu0 %3789, %v981
        %v3791 = vpop.permute.xlu0 %3790
        %3793 = vset.pattern.permute.xlu0 10
        %3794 = vperm.xlu0 %3793, %v982
        %v3795 = vpop.permute.xlu0 %3794
        %3797 = vset.pattern.permute.xlu0 10
        %3798 = vperm.xlu0 %3797, %v983
        %v3799 = vpop.permute.xlu0 %3798
        %3801 = vset.pattern.permute.xlu0 10
        %3802 = vperm.xlu0 %3801, %v984
        %v3803 = vpop.permute.xlu0 %3802
        %3805 = vset.pattern.permute.xlu0 10
        %3806 = vperm.xlu0 %3805, %v985
        %v3807 = vpop.permute.xlu0 %3806
        %3809 = vset.pattern.permute.xlu0 10
        %3810 = vperm.xlu0 %3809, %v986
        %v3811 = vpop.permute.xlu0 %3810
        %3813 = vset.pattern.permute.xlu0 10
        %3814 = vperm.xlu0 %3813, %v987
        %v3815 = vpop.permute.xlu0 %3814
        %3817 = vset.pattern.permute.xlu0 10
        %3818 = vperm.xlu0 %3817, %v988
        %v3819 = vpop.permute.xlu0 %3818
        %3821 = vset.pattern.permute.xlu0 10
        %3822 = vperm.xlu0 %3821, %v989
        %v3823 = vpop.permute.xlu0 %3822
        %3825 = vset.pattern.permute.xlu0 10
        %3826 = vperm.xlu0 %3825, %v990
        %v3827 = vpop.permute.xlu0 %3826
        %3829 = vset.pattern.permute.xlu0 10
        %3830 = vperm.xlu0 %3829, %v991
        %v3831 = vpop.permute.xlu0 %3830
        %3833 = vset.pattern.permute.xlu0 10
        %3834 = vperm.xlu0 %3833, %v992
        %v3835 = vpop.permute.xlu0 %3834
        %3837 = vset.pattern.permute.xlu0 10
        %3838 = vperm.xlu0 %3837, %v993
        %v3839 = vpop.permute.xlu0 %3838
        %3841 = vset.pattern.permute.xlu0 10
        %3842 = vperm.xlu0 %3841, %v994
        %v3843 = vpop.permute.xlu0 %3842
        %3845 = vset.pattern.permute.xlu0 10
        %3846 = vperm.xlu0 %3845, %v995
        %v3847 = vpop.permute.xlu0 %3846
        %v3849 = vmul.f32 %v3787, %v3754
        %v3850 = vmul.f32 %v3791, %v3756
        %v3851 = vmul.f32 %v3795, %v3758
        %v3852 = vmul.f32 %v3799, %v3760
        %v3853 = vmul.f32 %v3803, %v3762
        %v3854 = vmul.f32 %v3807, %v3764
        %v3855 = vmul.f32 %v3811, %v3766
        %v3856 = vmul.f32 %v3815, %v3768
        %v3857 = vmul.f32 %v3819, %v3770
        %v3858 = vmul.f32 %v3823, %v3772
        %v3859 = vmul.f32 %v3827, %v3774
        %v3860 = vmul.f32 %v3831, %v3776
        %v3861 = vmul.f32 %v3835, %v3778
        %v3862 = vmul.f32 %v3839, %v3780
        %v3863 = vmul.f32 %v3843, %v3782
        %v3864 = vmul.f32 %v3847, %v3784
        %v3865 = vadd.f32 %v3641, %v3849
        %v3866 = vadd.f32 %v3642, %v3850
        %v3867 = vadd.f32 %v3643, %v3851
        %v3868 = vadd.f32 %v3644, %v3852
        %v3869 = vadd.f32 %v3645, %v3853
        %v3870 = vadd.f32 %v3646, %v3854
        %v3871 = vadd.f32 %v3647, %v3855
        %v3872 = vadd.f32 %v3648, %v3856
        %v3873 = vadd.f32 %v3649, %v3857
        %v3874 = vadd.f32 %v3650, %v3858
        %v3875 = vadd.f32 %v3651, %v3859
        %v3876 = vadd.f32 %v3652, %v3860
        %v3877 = vadd.f32 %v3653, %v3861
        %v3878 = vadd.f32 %v3654, %v3862
        %v3879 = vadd.f32 %v3655, %v3863
        %v3880 = vadd.f32 %v3656, %v3864
        %3881 = vset.pattern.permute.xlu0 26
        %3882 = vperm.xlu0 %3881, %v980
        %v3883 = vpop.permute.xlu0 %3882
        %3885 = vset.pattern.permute.xlu0 26
        %3886 = vperm.xlu0 %3885, %v981
        %v3887 = vpop.permute.xlu0 %3886
        %3889 = vset.pattern.permute.xlu0 26
        %3890 = vperm.xlu0 %3889, %v982
        %v3891 = vpop.permute.xlu0 %3890
        %3893 = vset.pattern.permute.xlu0 26
        %3894 = vperm.xlu0 %3893, %v983
        %v3895 = vpop.permute.xlu0 %3894
        %3897 = vset.pattern.permute.xlu0 26
        %3898 = vperm.xlu0 %3897, %v984
        %v3899 = vpop.permute.xlu0 %3898
        %3901 = vset.pattern.permute.xlu0 26
        %3902 = vperm.xlu0 %3901, %v985
        %v3903 = vpop.permute.xlu0 %3902
        %3905 = vset.pattern.permute.xlu0 26
        %3906 = vperm.xlu0 %3905, %v986
        %v3907 = vpop.permute.xlu0 %3906
        %3909 = vset.pattern.permute.xlu0 26
        %3910 = vperm.xlu0 %3909, %v987
        %v3911 = vpop.permute.xlu0 %3910
        %3913 = vset.pattern.permute.xlu0 26
        %3914 = vperm.xlu0 %3913, %v988
        %v3915 = vpop.permute.xlu0 %3914
        %3917 = vset.pattern.permute.xlu0 26
        %3918 = vperm.xlu0 %3917, %v989
        %v3919 = vpop.permute.xlu0 %3918
        %3921 = vset.pattern.permute.xlu0 26
        %3922 = vperm.xlu0 %3921, %v990
        %v3923 = vpop.permute.xlu0 %3922
        %3925 = vset.pattern.permute.xlu0 26
        %3926 = vperm.xlu0 %3925, %v991
        %v3927 = vpop.permute.xlu0 %3926
        %3929 = vset.pattern.permute.xlu0 26
        %3930 = vperm.xlu0 %3929, %v992
        %v3931 = vpop.permute.xlu0 %3930
        %3933 = vset.pattern.permute.xlu0 26
        %3934 = vperm.xlu0 %3933, %v993
        %v3935 = vpop.permute.xlu0 %3934
        %3937 = vset.pattern.permute.xlu0 26
        %3938 = vperm.xlu0 %3937, %v994
        %v3939 = vpop.permute.xlu0 %3938
        %3941 = vset.pattern.permute.xlu0 26
        %3942 = vperm.xlu0 %3941, %v995
        %v3943 = vpop.permute.xlu0 %3942
        %v3945 = vmul.f32 %v3883, %v3754
        %v3946 = vmul.f32 %v3887, %v3756
        %v3947 = vmul.f32 %v3891, %v3758
        %v3948 = vmul.f32 %v3895, %v3760
        %v3949 = vmul.f32 %v3899, %v3762
        %v3950 = vmul.f32 %v3903, %v3764
        %v3951 = vmul.f32 %v3907, %v3766
        %v3952 = vmul.f32 %v3911, %v3768
        %v3953 = vmul.f32 %v3915, %v3770
        %v3954 = vmul.f32 %v3919, %v3772
        %v3955 = vmul.f32 %v3923, %v3774
        %v3956 = vmul.f32 %v3927, %v3776
        %v3957 = vmul.f32 %v3931, %v3778
        %v3958 = vmul.f32 %v3935, %v3780
        %v3959 = vmul.f32 %v3939, %v3782
        %v3960 = vmul.f32 %v3943, %v3784
        %v3961 = vadd.f32 %v3737, %v3945
        %v3962 = vadd.f32 %v3738, %v3946
        %v3963 = vadd.f32 %v3739, %v3947
        %v3964 = vadd.f32 %v3740, %v3948
        %v3965 = vadd.f32 %v3741, %v3949
        %v3966 = vadd.f32 %v3742, %v3950
        %v3967 = vadd.f32 %v3743, %v3951
        %v3968 = vadd.f32 %v3744, %v3952
        %v3969 = vadd.f32 %v3745, %v3953
        %v3970 = vadd.f32 %v3746, %v3954
        %v3971 = vadd.f32 %v3747, %v3955
        %v3972 = vadd.f32 %v3748, %v3956
        %v3973 = vadd.f32 %v3749, %v3957
        %v3974 = vadd.f32 %v3750, %v3958
        %v3975 = vadd.f32 %v3751, %v3959
        %v3976 = vadd.f32 %v3752, %v3960
        %3977 = vrot.lane.b32.xlu0 %v1529, 124
        %v3978 = vpop.permute.xlu0 %3977
        %3979 = vrot.lane.b32.xlu0 %v1530, 124
        %v3980 = vpop.permute.xlu0 %3979
        %3981 = vrot.lane.b32.xlu0 %v1531, 124
        %v3982 = vpop.permute.xlu0 %3981
        %3983 = vrot.lane.b32.xlu0 %v1532, 124
        %v3984 = vpop.permute.xlu0 %3983
        %3985 = vrot.lane.b32.xlu0 %v1533, 124
        %v3986 = vpop.permute.xlu0 %3985
        %3987 = vrot.lane.b32.xlu0 %v1534, 124
        %v3988 = vpop.permute.xlu0 %3987
        %3989 = vrot.lane.b32.xlu0 %v1535, 124
        %v3990 = vpop.permute.xlu0 %3989
        %3991 = vrot.lane.b32.xlu0 %v1536, 124
        %v3992 = vpop.permute.xlu0 %3991
        %3993 = vrot.lane.b32.xlu0 %v1537, 124
        %v3994 = vpop.permute.xlu0 %3993
        %3995 = vrot.lane.b32.xlu0 %v1538, 124
        %v3996 = vpop.permute.xlu0 %3995
        %3997 = vrot.lane.b32.xlu0 %v1539, 124
        %v3998 = vpop.permute.xlu0 %3997
        %3999 = vrot.lane.b32.xlu0 %v1540, 124
        %v4000 = vpop.permute.xlu0 %3999
        %4001 = vrot.lane.b32.xlu0 %v1541, 124
        %v4002 = vpop.permute.xlu0 %4001
        %4003 = vrot.lane.b32.xlu0 %v1542, 124
        %v4004 = vpop.permute.xlu0 %4003
        %4005 = vrot.lane.b32.xlu0 %v1543, 124
        %v4006 = vpop.permute.xlu0 %4005
        %4007 = vrot.lane.b32.xlu0 %v1544, 124
        %v4008 = vpop.permute.xlu0 %4007
        %4009 = vset.pattern.permute.xlu0 11
        %4010 = vperm.xlu0 %4009, %v980
        %v4011 = vpop.permute.xlu0 %4010
        %4013 = vset.pattern.permute.xlu0 11
        %4014 = vperm.xlu0 %4013, %v981
        %v4015 = vpop.permute.xlu0 %4014
        %4017 = vset.pattern.permute.xlu0 11
        %4018 = vperm.xlu0 %4017, %v982
        %v4019 = vpop.permute.xlu0 %4018
        %4021 = vset.pattern.permute.xlu0 11
        %4022 = vperm.xlu0 %4021, %v983
        %v4023 = vpop.permute.xlu0 %4022
        %4025 = vset.pattern.permute.xlu0 11
        %4026 = vperm.xlu0 %4025, %v984
        %v4027 = vpop.permute.xlu0 %4026
        %4029 = vset.pattern.permute.xlu0 11
        %4030 = vperm.xlu0 %4029, %v985
        %v4031 = vpop.permute.xlu0 %4030
        %4033 = vset.pattern.permute.xlu0 11
        %4034 = vperm.xlu0 %4033, %v986
        %v4035 = vpop.permute.xlu0 %4034
        %4037 = vset.pattern.permute.xlu0 11
        %4038 = vperm.xlu0 %4037, %v987
        %v4039 = vpop.permute.xlu0 %4038
        %4041 = vset.pattern.permute.xlu0 11
        %4042 = vperm.xlu0 %4041, %v988
        %v4043 = vpop.permute.xlu0 %4042
        %4045 = vset.pattern.permute.xlu0 11
        %4046 = vperm.xlu0 %4045, %v989
        %v4047 = vpop.permute.xlu0 %4046
        %4049 = vset.pattern.permute.xlu0 11
        %4050 = vperm.xlu0 %4049, %v990
        %v4051 = vpop.permute.xlu0 %4050
        %4053 = vset.pattern.permute.xlu0 11
        %4054 = vperm.xlu0 %4053, %v991
        %v4055 = vpop.permute.xlu0 %4054
        %4057 = vset.pattern.permute.xlu0 11
        %4058 = vperm.xlu0 %4057, %v992
        %v4059 = vpop.permute.xlu0 %4058
        %4061 = vset.pattern.permute.xlu0 11
        %4062 = vperm.xlu0 %4061, %v993
        %v4063 = vpop.permute.xlu0 %4062
        %4065 = vset.pattern.permute.xlu0 11
        %4066 = vperm.xlu0 %4065, %v994
        %v4067 = vpop.permute.xlu0 %4066
        %4069 = vset.pattern.permute.xlu0 11
        %4070 = vperm.xlu0 %4069, %v995
        %v4071 = vpop.permute.xlu0 %4070
        %v4073 = vmul.f32 %v4011, %v3978
        %v4074 = vmul.f32 %v4015, %v3980
        %v4075 = vmul.f32 %v4019, %v3982
        %v4076 = vmul.f32 %v4023, %v3984
        %v4077 = vmul.f32 %v4027, %v3986
        %v4078 = vmul.f32 %v4031, %v3988
        %v4079 = vmul.f32 %v4035, %v3990
        %v4080 = vmul.f32 %v4039, %v3992
        %v4081 = vmul.f32 %v4043, %v3994
        %v4082 = vmul.f32 %v4047, %v3996
        %v4083 = vmul.f32 %v4051, %v3998
        %v4084 = vmul.f32 %v4055, %v4000
        %v4085 = vmul.f32 %v4059, %v4002
        %v4086 = vmul.f32 %v4063, %v4004
        %v4087 = vmul.f32 %v4067, %v4006
        %v4088 = vmul.f32 %v4071, %v4008
        %v4089 = vadd.f32 %v3865, %v4073
        %v4090 = vadd.f32 %v3866, %v4074
        %v4091 = vadd.f32 %v3867, %v4075
        %v4092 = vadd.f32 %v3868, %v4076
        %v4093 = vadd.f32 %v3869, %v4077
        %v4094 = vadd.f32 %v3870, %v4078
        %v4095 = vadd.f32 %v3871, %v4079
        %v4096 = vadd.f32 %v3872, %v4080
        %v4097 = vadd.f32 %v3873, %v4081
        %v4098 = vadd.f32 %v3874, %v4082
        %v4099 = vadd.f32 %v3875, %v4083
        %v4100 = vadd.f32 %v3876, %v4084
        %v4101 = vadd.f32 %v3877, %v4085
        %v4102 = vadd.f32 %v3878, %v4086
        %v4103 = vadd.f32 %v3879, %v4087
        %v4104 = vadd.f32 %v3880, %v4088
        %4105 = vset.pattern.permute.xlu0 27
        %4106 = vperm.xlu0 %4105, %v980
        %v4107 = vpop.permute.xlu0 %4106
        %4109 = vset.pattern.permute.xlu0 27
        %4110 = vperm.xlu0 %4109, %v981
        %v4111 = vpop.permute.xlu0 %4110
        %4113 = vset.pattern.permute.xlu0 27
        %4114 = vperm.xlu0 %4113, %v982
        %v4115 = vpop.permute.xlu0 %4114
        %4117 = vset.pattern.permute.xlu0 27
        %4118 = vperm.xlu0 %4117, %v983
        %v4119 = vpop.permute.xlu0 %4118
        %4121 = vset.pattern.permute.xlu0 27
        %4122 = vperm.xlu0 %4121, %v984
        %v4123 = vpop.permute.xlu0 %4122
        %4125 = vset.pattern.permute.xlu0 27
        %4126 = vperm.xlu0 %4125, %v985
        %v4127 = vpop.permute.xlu0 %4126
        %4129 = vset.pattern.permute.xlu0 27
        %4130 = vperm.xlu0 %4129, %v986
        %v4131 = vpop.permute.xlu0 %4130
        %4133 = vset.pattern.permute.xlu0 27
        %4134 = vperm.xlu0 %4133, %v987
        %v4135 = vpop.permute.xlu0 %4134
        %4137 = vset.pattern.permute.xlu0 27
        %4138 = vperm.xlu0 %4137, %v988
        %v4139 = vpop.permute.xlu0 %4138
        %4141 = vset.pattern.permute.xlu0 27
        %4142 = vperm.xlu0 %4141, %v989
        %v4143 = vpop.permute.xlu0 %4142
        %4145 = vset.pattern.permute.xlu0 27
        %4146 = vperm.xlu0 %4145, %v990
        %v4147 = vpop.permute.xlu0 %4146
        %4149 = vset.pattern.permute.xlu0 27
        %4150 = vperm.xlu0 %4149, %v991
        %v4151 = vpop.permute.xlu0 %4150
        %4153 = vset.pattern.permute.xlu0 27
        %4154 = vperm.xlu0 %4153, %v992
        %v4155 = vpop.permute.xlu0 %4154
        %4157 = vset.pattern.permute.xlu0 27
        %4158 = vperm.xlu0 %4157, %v993
        %v4159 = vpop.permute.xlu0 %4158
        %4161 = vset.pattern.permute.xlu0 27
        %4162 = vperm.xlu0 %4161, %v994
        %v4163 = vpop.permute.xlu0 %4162
        %4165 = vset.pattern.permute.xlu0 27
        %4166 = vperm.xlu0 %4165, %v995
        %v4167 = vpop.permute.xlu0 %4166
        %v4169 = vmul.f32 %v4107, %v3978
        %v4170 = vmul.f32 %v4111, %v3980
        %v4171 = vmul.f32 %v4115, %v3982
        %v4172 = vmul.f32 %v4119, %v3984
        %v4173 = vmul.f32 %v4123, %v3986
        %v4174 = vmul.f32 %v4127, %v3988
        %v4175 = vmul.f32 %v4131, %v3990
        %v4176 = vmul.f32 %v4135, %v3992
        %v4177 = vmul.f32 %v4139, %v3994
        %v4178 = vmul.f32 %v4143, %v3996
        %v4179 = vmul.f32 %v4147, %v3998
        %v4180 = vmul.f32 %v4151, %v4000
        %v4181 = vmul.f32 %v4155, %v4002
        %v4182 = vmul.f32 %v4159, %v4004
        %v4183 = vmul.f32 %v4163, %v4006
        %v4184 = vmul.f32 %v4167, %v4008
        %v4185 = vadd.f32 %v3961, %v4169
        %v4186 = vadd.f32 %v3962, %v4170
        %v4187 = vadd.f32 %v3963, %v4171
        %v4188 = vadd.f32 %v3964, %v4172
        %v4189 = vadd.f32 %v3965, %v4173
        %v4190 = vadd.f32 %v3966, %v4174
        %v4191 = vadd.f32 %v3967, %v4175
        %v4192 = vadd.f32 %v3968, %v4176
        %v4193 = vadd.f32 %v3969, %v4177
        %v4194 = vadd.f32 %v3970, %v4178
        %v4195 = vadd.f32 %v3971, %v4179
        %v4196 = vadd.f32 %v3972, %v4180
        %v4197 = vadd.f32 %v3973, %v4181
        %v4198 = vadd.f32 %v3974, %v4182
        %v4199 = vadd.f32 %v3975, %v4183
        %v4200 = vadd.f32 %v3976, %v4184
        %4201 = vrot.lane.b32.xlu0 %v1529, 123
        %v4202 = vpop.permute.xlu0 %4201
        %4203 = vrot.lane.b32.xlu0 %v1530, 123
        %v4204 = vpop.permute.xlu0 %4203
        %4205 = vrot.lane.b32.xlu0 %v1531, 123
        %v4206 = vpop.permute.xlu0 %4205
        %4207 = vrot.lane.b32.xlu0 %v1532, 123
        %v4208 = vpop.permute.xlu0 %4207
        %4209 = vrot.lane.b32.xlu0 %v1533, 123
        %v4210 = vpop.permute.xlu0 %4209
        %4211 = vrot.lane.b32.xlu0 %v1534, 123
        %v4212 = vpop.permute.xlu0 %4211
        %4213 = vrot.lane.b32.xlu0 %v1535, 123
        %v4214 = vpop.permute.xlu0 %4213
        %4215 = vrot.lane.b32.xlu0 %v1536, 123
        %v4216 = vpop.permute.xlu0 %4215
        %4217 = vrot.lane.b32.xlu0 %v1537, 123
        %v4218 = vpop.permute.xlu0 %4217
        %4219 = vrot.lane.b32.xlu0 %v1538, 123
        %v4220 = vpop.permute.xlu0 %4219
        %4221 = vrot.lane.b32.xlu0 %v1539, 123
        %v4222 = vpop.permute.xlu0 %4221
        %4223 = vrot.lane.b32.xlu0 %v1540, 123
        %v4224 = vpop.permute.xlu0 %4223
        %4225 = vrot.lane.b32.xlu0 %v1541, 123
        %v4226 = vpop.permute.xlu0 %4225
        %4227 = vrot.lane.b32.xlu0 %v1542, 123
        %v4228 = vpop.permute.xlu0 %4227
        %4229 = vrot.lane.b32.xlu0 %v1543, 123
        %v4230 = vpop.permute.xlu0 %4229
        %4231 = vrot.lane.b32.xlu0 %v1544, 123
        %v4232 = vpop.permute.xlu0 %4231
        %4233 = vset.pattern.permute.xlu0 12
        %4234 = vperm.xlu0 %4233, %v980
        %v4235 = vpop.permute.xlu0 %4234
        %4237 = vset.pattern.permute.xlu0 12
        %4238 = vperm.xlu0 %4237, %v981
        %v4239 = vpop.permute.xlu0 %4238
        %4241 = vset.pattern.permute.xlu0 12
        %4242 = vperm.xlu0 %4241, %v982
        %v4243 = vpop.permute.xlu0 %4242
        %4245 = vset.pattern.permute.xlu0 12
        %4246 = vperm.xlu0 %4245, %v983
        %v4247 = vpop.permute.xlu0 %4246
        %4249 = vset.pattern.permute.xlu0 12
        %4250 = vperm.xlu0 %4249, %v984
        %v4251 = vpop.permute.xlu0 %4250
        %4253 = vset.pattern.permute.xlu0 12
        %4254 = vperm.xlu0 %4253, %v985
        %v4255 = vpop.permute.xlu0 %4254
        %4257 = vset.pattern.permute.xlu0 12
        %4258 = vperm.xlu0 %4257, %v986
        %v4259 = vpop.permute.xlu0 %4258
        %4261 = vset.pattern.permute.xlu0 12
        %4262 = vperm.xlu0 %4261, %v987
        %v4263 = vpop.permute.xlu0 %4262
        %4265 = vset.pattern.permute.xlu0 12
        %4266 = vperm.xlu0 %4265, %v988
        %v4267 = vpop.permute.xlu0 %4266
        %4269 = vset.pattern.permute.xlu0 12
        %4270 = vperm.xlu0 %4269, %v989
        %v4271 = vpop.permute.xlu0 %4270
        %4273 = vset.pattern.permute.xlu0 12
        %4274 = vperm.xlu0 %4273, %v990
        %v4275 = vpop.permute.xlu0 %4274
        %4277 = vset.pattern.permute.xlu0 12
        %4278 = vperm.xlu0 %4277, %v991
        %v4279 = vpop.permute.xlu0 %4278
        %4281 = vset.pattern.permute.xlu0 12
        %4282 = vperm.xlu0 %4281, %v992
        %v4283 = vpop.permute.xlu0 %4282
        %4285 = vset.pattern.permute.xlu0 12
        %4286 = vperm.xlu0 %4285, %v993
        %v4287 = vpop.permute.xlu0 %4286
        %4289 = vset.pattern.permute.xlu0 12
        %4290 = vperm.xlu0 %4289, %v994
        %v4291 = vpop.permute.xlu0 %4290
        %4293 = vset.pattern.permute.xlu0 12
        %4294 = vperm.xlu0 %4293, %v995
        %v4295 = vpop.permute.xlu0 %4294
        %v4297 = vmul.f32 %v4235, %v4202
        %v4298 = vmul.f32 %v4239, %v4204
        %v4299 = vmul.f32 %v4243, %v4206
        %v4300 = vmul.f32 %v4247, %v4208
        %v4301 = vmul.f32 %v4251, %v4210
        %v4302 = vmul.f32 %v4255, %v4212
        %v4303 = vmul.f32 %v4259, %v4214
        %v4304 = vmul.f32 %v4263, %v4216
        %v4305 = vmul.f32 %v4267, %v4218
        %v4306 = vmul.f32 %v4271, %v4220
        %v4307 = vmul.f32 %v4275, %v4222
        %v4308 = vmul.f32 %v4279, %v4224
        %v4309 = vmul.f32 %v4283, %v4226
        %v4310 = vmul.f32 %v4287, %v4228
        %v4311 = vmul.f32 %v4291, %v4230
        %v4312 = vmul.f32 %v4295, %v4232
        %v4313 = vadd.f32 %v4089, %v4297
        %v4314 = vadd.f32 %v4090, %v4298
        %v4315 = vadd.f32 %v4091, %v4299
        %v4316 = vadd.f32 %v4092, %v4300
        %v4317 = vadd.f32 %v4093, %v4301
        %v4318 = vadd.f32 %v4094, %v4302
        %v4319 = vadd.f32 %v4095, %v4303
        %v4320 = vadd.f32 %v4096, %v4304
        %v4321 = vadd.f32 %v4097, %v4305
        %v4322 = vadd.f32 %v4098, %v4306
        %v4323 = vadd.f32 %v4099, %v4307
        %v4324 = vadd.f32 %v4100, %v4308
        %v4325 = vadd.f32 %v4101, %v4309
        %v4326 = vadd.f32 %v4102, %v4310
        %v4327 = vadd.f32 %v4103, %v4311
        %v4328 = vadd.f32 %v4104, %v4312
        %4329 = vset.pattern.permute.xlu0 28
        %4330 = vperm.xlu0 %4329, %v980
        %v4331 = vpop.permute.xlu0 %4330
        %4333 = vset.pattern.permute.xlu0 28
        %4334 = vperm.xlu0 %4333, %v981
        %v4335 = vpop.permute.xlu0 %4334
        %4337 = vset.pattern.permute.xlu0 28
        %4338 = vperm.xlu0 %4337, %v982
        %v4339 = vpop.permute.xlu0 %4338
        %4341 = vset.pattern.permute.xlu0 28
        %4342 = vperm.xlu0 %4341, %v983
        %v4343 = vpop.permute.xlu0 %4342
        %4345 = vset.pattern.permute.xlu0 28
        %4346 = vperm.xlu0 %4345, %v984
        %v4347 = vpop.permute.xlu0 %4346
        %4349 = vset.pattern.permute.xlu0 28
        %4350 = vperm.xlu0 %4349, %v985
        %v4351 = vpop.permute.xlu0 %4350
        %4353 = vset.pattern.permute.xlu0 28
        %4354 = vperm.xlu0 %4353, %v986
        %v4355 = vpop.permute.xlu0 %4354
        %4357 = vset.pattern.permute.xlu0 28
        %4358 = vperm.xlu0 %4357, %v987
        %v4359 = vpop.permute.xlu0 %4358
        %4361 = vset.pattern.permute.xlu0 28
        %4362 = vperm.xlu0 %4361, %v988
        %v4363 = vpop.permute.xlu0 %4362
        %4365 = vset.pattern.permute.xlu0 28
        %4366 = vperm.xlu0 %4365, %v989
        %v4367 = vpop.permute.xlu0 %4366
        %4369 = vset.pattern.permute.xlu0 28
        %4370 = vperm.xlu0 %4369, %v990
        %v4371 = vpop.permute.xlu0 %4370
        %4373 = vset.pattern.permute.xlu0 28
        %4374 = vperm.xlu0 %4373, %v991
        %v4375 = vpop.permute.xlu0 %4374
        %4377 = vset.pattern.permute.xlu0 28
        %4378 = vperm.xlu0 %4377, %v992
        %v4379 = vpop.permute.xlu0 %4378
        %4381 = vset.pattern.permute.xlu0 28
        %4382 = vperm.xlu0 %4381, %v993
        %v4383 = vpop.permute.xlu0 %4382
        %4385 = vset.pattern.permute.xlu0 28
        %4386 = vperm.xlu0 %4385, %v994
        %v4387 = vpop.permute.xlu0 %4386
        %4389 = vset.pattern.permute.xlu0 28
        %4390 = vperm.xlu0 %4389, %v995
        %v4391 = vpop.permute.xlu0 %4390
        %v4393 = vmul.f32 %v4331, %v4202
        %v4394 = vmul.f32 %v4335, %v4204
        %v4395 = vmul.f32 %v4339, %v4206
        %v4396 = vmul.f32 %v4343, %v4208
        %v4397 = vmul.f32 %v4347, %v4210
        %v4398 = vmul.f32 %v4351, %v4212
        %v4399 = vmul.f32 %v4355, %v4214
        %v4400 = vmul.f32 %v4359, %v4216
        %v4401 = vmul.f32 %v4363, %v4218
        %v4402 = vmul.f32 %v4367, %v4220
        %v4403 = vmul.f32 %v4371, %v4222
        %v4404 = vmul.f32 %v4375, %v4224
        %v4405 = vmul.f32 %v4379, %v4226
        %v4406 = vmul.f32 %v4383, %v4228
        %v4407 = vmul.f32 %v4387, %v4230
        %v4408 = vmul.f32 %v4391, %v4232
        %v4409 = vadd.f32 %v4185, %v4393
        %v4410 = vadd.f32 %v4186, %v4394
        %v4411 = vadd.f32 %v4187, %v4395
        %v4412 = vadd.f32 %v4188, %v4396
        %v4413 = vadd.f32 %v4189, %v4397
        %v4414 = vadd.f32 %v4190, %v4398
        %v4415 = vadd.f32 %v4191, %v4399
        %v4416 = vadd.f32 %v4192, %v4400
        %v4417 = vadd.f32 %v4193, %v4401
        %v4418 = vadd.f32 %v4194, %v4402
        %v4419 = vadd.f32 %v4195, %v4403
        %v4420 = vadd.f32 %v4196, %v4404
        %v4421 = vadd.f32 %v4197, %v4405
        %v4422 = vadd.f32 %v4198, %v4406
        %v4423 = vadd.f32 %v4199, %v4407
        %v4424 = vadd.f32 %v4200, %v4408
        %4425 = vrot.lane.b32.xlu0 %v1529, 122
        %v4426 = vpop.permute.xlu0 %4425
        %4427 = vrot.lane.b32.xlu0 %v1530, 122
        %v4428 = vpop.permute.xlu0 %4427
        %4429 = vrot.lane.b32.xlu0 %v1531, 122
        %v4430 = vpop.permute.xlu0 %4429
        %4431 = vrot.lane.b32.xlu0 %v1532, 122
        %v4432 = vpop.permute.xlu0 %4431
        %4433 = vrot.lane.b32.xlu0 %v1533, 122
        %v4434 = vpop.permute.xlu0 %4433
        %4435 = vrot.lane.b32.xlu0 %v1534, 122
        %v4436 = vpop.permute.xlu0 %4435
        %4437 = vrot.lane.b32.xlu0 %v1535, 122
        %v4438 = vpop.permute.xlu0 %4437
        %4439 = vrot.lane.b32.xlu0 %v1536, 122
        %v4440 = vpop.permute.xlu0 %4439
        %4441 = vrot.lane.b32.xlu0 %v1537, 122
        %v4442 = vpop.permute.xlu0 %4441
        %4443 = vrot.lane.b32.xlu0 %v1538, 122
        %v4444 = vpop.permute.xlu0 %4443
        %4445 = vrot.lane.b32.xlu0 %v1539, 122
        %v4446 = vpop.permute.xlu0 %4445
        %4447 = vrot.lane.b32.xlu0 %v1540, 122
        %v4448 = vpop.permute.xlu0 %4447
        %4449 = vrot.lane.b32.xlu0 %v1541, 122
        %v4450 = vpop.permute.xlu0 %4449
        %4451 = vrot.lane.b32.xlu0 %v1542, 122
        %v4452 = vpop.permute.xlu0 %4451
        %4453 = vrot.lane.b32.xlu0 %v1543, 122
        %v4454 = vpop.permute.xlu0 %4453
        %4455 = vrot.lane.b32.xlu0 %v1544, 122
        %v4456 = vpop.permute.xlu0 %4455
        %4457 = vset.pattern.permute.xlu0 13
        %4458 = vperm.xlu0 %4457, %v980
        %v4459 = vpop.permute.xlu0 %4458
        %4461 = vset.pattern.permute.xlu0 13
        %4462 = vperm.xlu0 %4461, %v981
        %v4463 = vpop.permute.xlu0 %4462
        %4465 = vset.pattern.permute.xlu0 13
        %4466 = vperm.xlu0 %4465, %v982
        %v4467 = vpop.permute.xlu0 %4466
        %4469 = vset.pattern.permute.xlu0 13
        %4470 = vperm.xlu0 %4469, %v983
        %v4471 = vpop.permute.xlu0 %4470
        %4473 = vset.pattern.permute.xlu0 13
        %4474 = vperm.xlu0 %4473, %v984
        %v4475 = vpop.permute.xlu0 %4474
        %4477 = vset.pattern.permute.xlu0 13
        %4478 = vperm.xlu0 %4477, %v985
        %v4479 = vpop.permute.xlu0 %4478
        %4481 = vset.pattern.permute.xlu0 13
        %4482 = vperm.xlu0 %4481, %v986
        %v4483 = vpop.permute.xlu0 %4482
        %4485 = vset.pattern.permute.xlu0 13
        %4486 = vperm.xlu0 %4485, %v987
        %v4487 = vpop.permute.xlu0 %4486
        %4489 = vset.pattern.permute.xlu0 13
        %4490 = vperm.xlu0 %4489, %v988
        %v4491 = vpop.permute.xlu0 %4490
        %4493 = vset.pattern.permute.xlu0 13
        %4494 = vperm.xlu0 %4493, %v989
        %v4495 = vpop.permute.xlu0 %4494
        %4497 = vset.pattern.permute.xlu0 13
        %4498 = vperm.xlu0 %4497, %v990
        %v4499 = vpop.permute.xlu0 %4498
        %4501 = vset.pattern.permute.xlu0 13
        %4502 = vperm.xlu0 %4501, %v991
        %v4503 = vpop.permute.xlu0 %4502
        %4505 = vset.pattern.permute.xlu0 13
        %4506 = vperm.xlu0 %4505, %v992
        %v4507 = vpop.permute.xlu0 %4506
        %4509 = vset.pattern.permute.xlu0 13
        %4510 = vperm.xlu0 %4509, %v993
        %v4511 = vpop.permute.xlu0 %4510
        %4513 = vset.pattern.permute.xlu0 13
        %4514 = vperm.xlu0 %4513, %v994
        %v4515 = vpop.permute.xlu0 %4514
        %4517 = vset.pattern.permute.xlu0 13
        %4518 = vperm.xlu0 %4517, %v995
        %v4519 = vpop.permute.xlu0 %4518
        %v4521 = vmul.f32 %v4459, %v4426
        %v4522 = vmul.f32 %v4463, %v4428
        %v4523 = vmul.f32 %v4467, %v4430
        %v4524 = vmul.f32 %v4471, %v4432
        %v4525 = vmul.f32 %v4475, %v4434
        %v4526 = vmul.f32 %v4479, %v4436
        %v4527 = vmul.f32 %v4483, %v4438
        %v4528 = vmul.f32 %v4487, %v4440
        %v4529 = vmul.f32 %v4491, %v4442
        %v4530 = vmul.f32 %v4495, %v4444
        %v4531 = vmul.f32 %v4499, %v4446
        %v4532 = vmul.f32 %v4503, %v4448
        %v4533 = vmul.f32 %v4507, %v4450
        %v4534 = vmul.f32 %v4511, %v4452
        %v4535 = vmul.f32 %v4515, %v4454
        %v4536 = vmul.f32 %v4519, %v4456
        %v4537 = vadd.f32 %v4313, %v4521
        %v4538 = vadd.f32 %v4314, %v4522
        %v4539 = vadd.f32 %v4315, %v4523
        %v4540 = vadd.f32 %v4316, %v4524
        %v4541 = vadd.f32 %v4317, %v4525
        %v4542 = vadd.f32 %v4318, %v4526
        %v4543 = vadd.f32 %v4319, %v4527
        %v4544 = vadd.f32 %v4320, %v4528
        %v4545 = vadd.f32 %v4321, %v4529
        %v4546 = vadd.f32 %v4322, %v4530
        %v4547 = vadd.f32 %v4323, %v4531
        %v4548 = vadd.f32 %v4324, %v4532
        %v4549 = vadd.f32 %v4325, %v4533
        %v4550 = vadd.f32 %v4326, %v4534
        %v4551 = vadd.f32 %v4327, %v4535
        %v4552 = vadd.f32 %v4328, %v4536
        %4553 = vset.pattern.permute.xlu0 29
        %4554 = vperm.xlu0 %4553, %v980
        %v4555 = vpop.permute.xlu0 %4554
        %4557 = vset.pattern.permute.xlu0 29
        %4558 = vperm.xlu0 %4557, %v981
        %v4559 = vpop.permute.xlu0 %4558
        %4561 = vset.pattern.permute.xlu0 29
        %4562 = vperm.xlu0 %4561, %v982
        %v4563 = vpop.permute.xlu0 %4562
        %4565 = vset.pattern.permute.xlu0 29
        %4566 = vperm.xlu0 %4565, %v983
        %v4567 = vpop.permute.xlu0 %4566
        %4569 = vset.pattern.permute.xlu0 29
        %4570 = vperm.xlu0 %4569, %v984
        %v4571 = vpop.permute.xlu0 %4570
        %4573 = vset.pattern.permute.xlu0 29
        %4574 = vperm.xlu0 %4573, %v985
        %v4575 = vpop.permute.xlu0 %4574
        %4577 = vset.pattern.permute.xlu0 29
        %4578 = vperm.xlu0 %4577, %v986
        %v4579 = vpop.permute.xlu0 %4578
        %4581 = vset.pattern.permute.xlu0 29
        %4582 = vperm.xlu0 %4581, %v987
        %v4583 = vpop.permute.xlu0 %4582
        %4585 = vset.pattern.permute.xlu0 29
        %4586 = vperm.xlu0 %4585, %v988
        %v4587 = vpop.permute.xlu0 %4586
        %4589 = vset.pattern.permute.xlu0 29
        %4590 = vperm.xlu0 %4589, %v989
        %v4591 = vpop.permute.xlu0 %4590
        %4593 = vset.pattern.permute.xlu0 29
        %4594 = vperm.xlu0 %4593, %v990
        %v4595 = vpop.permute.xlu0 %4594
        %4597 = vset.pattern.permute.xlu0 29
        %4598 = vperm.xlu0 %4597, %v991
        %v4599 = vpop.permute.xlu0 %4598
        %4601 = vset.pattern.permute.xlu0 29
        %4602 = vperm.xlu0 %4601, %v992
        %v4603 = vpop.permute.xlu0 %4602
        %4605 = vset.pattern.permute.xlu0 29
        %4606 = vperm.xlu0 %4605, %v993
        %v4607 = vpop.permute.xlu0 %4606
        %4609 = vset.pattern.permute.xlu0 29
        %4610 = vperm.xlu0 %4609, %v994
        %v4611 = vpop.permute.xlu0 %4610
        %4613 = vset.pattern.permute.xlu0 29
        %4614 = vperm.xlu0 %4613, %v995
        %v4615 = vpop.permute.xlu0 %4614
        %v4617 = vmul.f32 %v4555, %v4426
        %v4618 = vmul.f32 %v4559, %v4428
        %v4619 = vmul.f32 %v4563, %v4430
        %v4620 = vmul.f32 %v4567, %v4432
        %v4621 = vmul.f32 %v4571, %v4434
        %v4622 = vmul.f32 %v4575, %v4436
        %v4623 = vmul.f32 %v4579, %v4438
        %v4624 = vmul.f32 %v4583, %v4440
        %v4625 = vmul.f32 %v4587, %v4442
        %v4626 = vmul.f32 %v4591, %v4444
        %v4627 = vmul.f32 %v4595, %v4446
        %v4628 = vmul.f32 %v4599, %v4448
        %v4629 = vmul.f32 %v4603, %v4450
        %v4630 = vmul.f32 %v4607, %v4452
        %v4631 = vmul.f32 %v4611, %v4454
        %v4632 = vmul.f32 %v4615, %v4456
        %v4633 = vadd.f32 %v4409, %v4617
        %v4634 = vadd.f32 %v4410, %v4618
        %v4635 = vadd.f32 %v4411, %v4619
        %v4636 = vadd.f32 %v4412, %v4620
        %v4637 = vadd.f32 %v4413, %v4621
        %v4638 = vadd.f32 %v4414, %v4622
        %v4639 = vadd.f32 %v4415, %v4623
        %v4640 = vadd.f32 %v4416, %v4624
        %v4641 = vadd.f32 %v4417, %v4625
        %v4642 = vadd.f32 %v4418, %v4626
        %v4643 = vadd.f32 %v4419, %v4627
        %v4644 = vadd.f32 %v4420, %v4628
        %v4645 = vadd.f32 %v4421, %v4629
        %v4646 = vadd.f32 %v4422, %v4630
        %v4647 = vadd.f32 %v4423, %v4631
        %v4648 = vadd.f32 %v4424, %v4632
        %4649 = vrot.lane.b32.xlu0 %v1529, 121
        %v4650 = vpop.permute.xlu0 %4649
        %4651 = vrot.lane.b32.xlu0 %v1530, 121
        %v4652 = vpop.permute.xlu0 %4651
        %4653 = vrot.lane.b32.xlu0 %v1531, 121
        %v4654 = vpop.permute.xlu0 %4653
        %4655 = vrot.lane.b32.xlu0 %v1532, 121
        %v4656 = vpop.permute.xlu0 %4655
        %4657 = vrot.lane.b32.xlu0 %v1533, 121
        %v4658 = vpop.permute.xlu0 %4657
        %4659 = vrot.lane.b32.xlu0 %v1534, 121
        %v4660 = vpop.permute.xlu0 %4659
        %4661 = vrot.lane.b32.xlu0 %v1535, 121
        %v4662 = vpop.permute.xlu0 %4661
        %4663 = vrot.lane.b32.xlu0 %v1536, 121
        %v4664 = vpop.permute.xlu0 %4663
        %4665 = vrot.lane.b32.xlu0 %v1537, 121
        %v4666 = vpop.permute.xlu0 %4665
        %4667 = vrot.lane.b32.xlu0 %v1538, 121
        %v4668 = vpop.permute.xlu0 %4667
        %4669 = vrot.lane.b32.xlu0 %v1539, 121
        %v4670 = vpop.permute.xlu0 %4669
        %4671 = vrot.lane.b32.xlu0 %v1540, 121
        %v4672 = vpop.permute.xlu0 %4671
        %4673 = vrot.lane.b32.xlu0 %v1541, 121
        %v4674 = vpop.permute.xlu0 %4673
        %4675 = vrot.lane.b32.xlu0 %v1542, 121
        %v4676 = vpop.permute.xlu0 %4675
        %4677 = vrot.lane.b32.xlu0 %v1543, 121
        %v4678 = vpop.permute.xlu0 %4677
        %4679 = vrot.lane.b32.xlu0 %v1544, 121
        %v4680 = vpop.permute.xlu0 %4679
        %4681 = vset.pattern.permute.xlu0 14
        %4682 = vperm.xlu0 %4681, %v980
        %v4683 = vpop.permute.xlu0 %4682
        %4685 = vset.pattern.permute.xlu0 14
        %4686 = vperm.xlu0 %4685, %v981
        %v4687 = vpop.permute.xlu0 %4686
        %4689 = vset.pattern.permute.xlu0 14
        %4690 = vperm.xlu0 %4689, %v982
        %v4691 = vpop.permute.xlu0 %4690
        %4693 = vset.pattern.permute.xlu0 14
        %4694 = vperm.xlu0 %4693, %v983
        %v4695 = vpop.permute.xlu0 %4694
        %4697 = vset.pattern.permute.xlu0 14
        %4698 = vperm.xlu0 %4697, %v984
        %v4699 = vpop.permute.xlu0 %4698
        %4701 = vset.pattern.permute.xlu0 14
        %4702 = vperm.xlu0 %4701, %v985
        %v4703 = vpop.permute.xlu0 %4702
        %4705 = vset.pattern.permute.xlu0 14
        %4706 = vperm.xlu0 %4705, %v986
        %v4707 = vpop.permute.xlu0 %4706
        %4709 = vset.pattern.permute.xlu0 14
        %4710 = vperm.xlu0 %4709, %v987
        %v4711 = vpop.permute.xlu0 %4710
        %4713 = vset.pattern.permute.xlu0 14
        %4714 = vperm.xlu0 %4713, %v988
        %v4715 = vpop.permute.xlu0 %4714
        %4717 = vset.pattern.permute.xlu0 14
        %4718 = vperm.xlu0 %4717, %v989
        %v4719 = vpop.permute.xlu0 %4718
        %4721 = vset.pattern.permute.xlu0 14
        %4722 = vperm.xlu0 %4721, %v990
        %v4723 = vpop.permute.xlu0 %4722
        %4725 = vset.pattern.permute.xlu0 14
        %4726 = vperm.xlu0 %4725, %v991
        %v4727 = vpop.permute.xlu0 %4726
        %4729 = vset.pattern.permute.xlu0 14
        %4730 = vperm.xlu0 %4729, %v992
        %v4731 = vpop.permute.xlu0 %4730
        %4733 = vset.pattern.permute.xlu0 14
        %4734 = vperm.xlu0 %4733, %v993
        %v4735 = vpop.permute.xlu0 %4734
        %4737 = vset.pattern.permute.xlu0 14
        %4738 = vperm.xlu0 %4737, %v994
        %v4739 = vpop.permute.xlu0 %4738
        %4741 = vset.pattern.permute.xlu0 14
        %4742 = vperm.xlu0 %4741, %v995
        %v4743 = vpop.permute.xlu0 %4742
        %v4745 = vmul.f32 %v4683, %v4650
        %v4746 = vmul.f32 %v4687, %v4652
        %v4747 = vmul.f32 %v4691, %v4654
        %v4748 = vmul.f32 %v4695, %v4656
        %v4749 = vmul.f32 %v4699, %v4658
        %v4750 = vmul.f32 %v4703, %v4660
        %v4751 = vmul.f32 %v4707, %v4662
        %v4752 = vmul.f32 %v4711, %v4664
        %v4753 = vmul.f32 %v4715, %v4666
        %v4754 = vmul.f32 %v4719, %v4668
        %v4755 = vmul.f32 %v4723, %v4670
        %v4756 = vmul.f32 %v4727, %v4672
        %v4757 = vmul.f32 %v4731, %v4674
        %v4758 = vmul.f32 %v4735, %v4676
        %v4759 = vmul.f32 %v4739, %v4678
        %v4760 = vmul.f32 %v4743, %v4680
        %v4761 = vadd.f32 %v4537, %v4745
        %v4762 = vadd.f32 %v4538, %v4746
        %v4763 = vadd.f32 %v4539, %v4747
        %v4764 = vadd.f32 %v4540, %v4748
        %v4765 = vadd.f32 %v4541, %v4749
        %v4766 = vadd.f32 %v4542, %v4750
        %v4767 = vadd.f32 %v4543, %v4751
        %v4768 = vadd.f32 %v4544, %v4752
        %v4769 = vadd.f32 %v4545, %v4753
        %v4770 = vadd.f32 %v4546, %v4754
        %v4771 = vadd.f32 %v4547, %v4755
        %v4772 = vadd.f32 %v4548, %v4756
        %v4773 = vadd.f32 %v4549, %v4757
        %v4774 = vadd.f32 %v4550, %v4758
        %v4775 = vadd.f32 %v4551, %v4759
        %v4776 = vadd.f32 %v4552, %v4760
        %4777 = vset.pattern.permute.xlu0 30
        %4778 = vperm.xlu0 %4777, %v980
        %v4779 = vpop.permute.xlu0 %4778
        %4781 = vset.pattern.permute.xlu0 30
        %4782 = vperm.xlu0 %4781, %v981
        %v4783 = vpop.permute.xlu0 %4782
        %4785 = vset.pattern.permute.xlu0 30
        %4786 = vperm.xlu0 %4785, %v982
        %v4787 = vpop.permute.xlu0 %4786
        %4789 = vset.pattern.permute.xlu0 30
        %4790 = vperm.xlu0 %4789, %v983
        %v4791 = vpop.permute.xlu0 %4790
        %4793 = vset.pattern.permute.xlu0 30
        %4794 = vperm.xlu0 %4793, %v984
        %v4795 = vpop.permute.xlu0 %4794
        %4797 = vset.pattern.permute.xlu0 30
        %4798 = vperm.xlu0 %4797, %v985
        %v4799 = vpop.permute.xlu0 %4798
        %4801 = vset.pattern.permute.xlu0 30
        %4802 = vperm.xlu0 %4801, %v986
        %v4803 = vpop.permute.xlu0 %4802
        %4805 = vset.pattern.permute.xlu0 30
        %4806 = vperm.xlu0 %4805, %v987
        %v4807 = vpop.permute.xlu0 %4806
        %4809 = vset.pattern.permute.xlu0 30
        %4810 = vperm.xlu0 %4809, %v988
        %v4811 = vpop.permute.xlu0 %4810
        %4813 = vset.pattern.permute.xlu0 30
        %4814 = vperm.xlu0 %4813, %v989
        %v4815 = vpop.permute.xlu0 %4814
        %4817 = vset.pattern.permute.xlu0 30
        %4818 = vperm.xlu0 %4817, %v990
        %v4819 = vpop.permute.xlu0 %4818
        %4821 = vset.pattern.permute.xlu0 30
        %4822 = vperm.xlu0 %4821, %v991
        %v4823 = vpop.permute.xlu0 %4822
        %4825 = vset.pattern.permute.xlu0 30
        %4826 = vperm.xlu0 %4825, %v992
        %v4827 = vpop.permute.xlu0 %4826
        %4829 = vset.pattern.permute.xlu0 30
        %4830 = vperm.xlu0 %4829, %v993
        %v4831 = vpop.permute.xlu0 %4830
        %4833 = vset.pattern.permute.xlu0 30
        %4834 = vperm.xlu0 %4833, %v994
        %v4835 = vpop.permute.xlu0 %4834
        %4837 = vset.pattern.permute.xlu0 30
        %4838 = vperm.xlu0 %4837, %v995
        %v4839 = vpop.permute.xlu0 %4838
        %v4841 = vmul.f32 %v4779, %v4650
        %v4842 = vmul.f32 %v4783, %v4652
        %v4843 = vmul.f32 %v4787, %v4654
        %v4844 = vmul.f32 %v4791, %v4656
        %v4845 = vmul.f32 %v4795, %v4658
        %v4846 = vmul.f32 %v4799, %v4660
        %v4847 = vmul.f32 %v4803, %v4662
        %v4848 = vmul.f32 %v4807, %v4664
        %v4849 = vmul.f32 %v4811, %v4666
        %v4850 = vmul.f32 %v4815, %v4668
        %v4851 = vmul.f32 %v4819, %v4670
        %v4852 = vmul.f32 %v4823, %v4672
        %v4853 = vmul.f32 %v4827, %v4674
        %v4854 = vmul.f32 %v4831, %v4676
        %v4855 = vmul.f32 %v4835, %v4678
        %v4856 = vmul.f32 %v4839, %v4680
        %v4857 = vadd.f32 %v4633, %v4841
        %v4858 = vadd.f32 %v4634, %v4842
        %v4859 = vadd.f32 %v4635, %v4843
        %v4860 = vadd.f32 %v4636, %v4844
        %v4861 = vadd.f32 %v4637, %v4845
        %v4862 = vadd.f32 %v4638, %v4846
        %v4863 = vadd.f32 %v4639, %v4847
        %v4864 = vadd.f32 %v4640, %v4848
        %v4865 = vadd.f32 %v4641, %v4849
        %v4866 = vadd.f32 %v4642, %v4850
        %v4867 = vadd.f32 %v4643, %v4851
        %v4868 = vadd.f32 %v4644, %v4852
        %v4869 = vadd.f32 %v4645, %v4853
        %v4870 = vadd.f32 %v4646, %v4854
        %v4871 = vadd.f32 %v4647, %v4855
        %v4872 = vadd.f32 %v4648, %v4856
        %4873 = vrot.lane.b32.xlu0 %v1529, 120
        %v4874 = vpop.permute.xlu0 %4873
        %4875 = vrot.lane.b32.xlu0 %v1530, 120
        %v4876 = vpop.permute.xlu0 %4875
        %4877 = vrot.lane.b32.xlu0 %v1531, 120
        %v4878 = vpop.permute.xlu0 %4877
        %4879 = vrot.lane.b32.xlu0 %v1532, 120
        %v4880 = vpop.permute.xlu0 %4879
        %4881 = vrot.lane.b32.xlu0 %v1533, 120
        %v4882 = vpop.permute.xlu0 %4881
        %4883 = vrot.lane.b32.xlu0 %v1534, 120
        %v4884 = vpop.permute.xlu0 %4883
        %4885 = vrot.lane.b32.xlu0 %v1535, 120
        %v4886 = vpop.permute.xlu0 %4885
        %4887 = vrot.lane.b32.xlu0 %v1536, 120
        %v4888 = vpop.permute.xlu0 %4887
        %4889 = vrot.lane.b32.xlu0 %v1537, 120
        %v4890 = vpop.permute.xlu0 %4889
        %4891 = vrot.lane.b32.xlu0 %v1538, 120
        %v4892 = vpop.permute.xlu0 %4891
        %4893 = vrot.lane.b32.xlu0 %v1539, 120
        %v4894 = vpop.permute.xlu0 %4893
        %4895 = vrot.lane.b32.xlu0 %v1540, 120
        %v4896 = vpop.permute.xlu0 %4895
        %4897 = vrot.lane.b32.xlu0 %v1541, 120
        %v4898 = vpop.permute.xlu0 %4897
        %4899 = vrot.lane.b32.xlu0 %v1542, 120
        %v4900 = vpop.permute.xlu0 %4899
        %4901 = vrot.lane.b32.xlu0 %v1543, 120
        %v4902 = vpop.permute.xlu0 %4901
        %4903 = vrot.lane.b32.xlu0 %v1544, 120
        %v4904 = vpop.permute.xlu0 %4903
        %4905 = vset.pattern.permute.xlu0 15
        %4906 = vperm.xlu0 %4905, %v980
        %v4907 = vpop.permute.xlu0 %4906
        %4909 = vset.pattern.permute.xlu0 15
        %4910 = vperm.xlu0 %4909, %v981
        %v4911 = vpop.permute.xlu0 %4910
        %4913 = vset.pattern.permute.xlu0 15
        %4914 = vperm.xlu0 %4913, %v982
        %v4915 = vpop.permute.xlu0 %4914
        %4917 = vset.pattern.permute.xlu0 15
        %4918 = vperm.xlu0 %4917, %v983
        %v4919 = vpop.permute.xlu0 %4918
        %4921 = vset.pattern.permute.xlu0 15
        %4922 = vperm.xlu0 %4921, %v984
        %v4923 = vpop.permute.xlu0 %4922
        %4925 = vset.pattern.permute.xlu0 15
        %4926 = vperm.xlu0 %4925, %v985
        %v4927 = vpop.permute.xlu0 %4926
        %4929 = vset.pattern.permute.xlu0 15
        %4930 = vperm.xlu0 %4929, %v986
        %v4931 = vpop.permute.xlu0 %4930
        %4933 = vset.pattern.permute.xlu0 15
        %4934 = vperm.xlu0 %4933, %v987
        %v4935 = vpop.permute.xlu0 %4934
        %4937 = vset.pattern.permute.xlu0 15
        %4938 = vperm.xlu0 %4937, %v988
        %v4939 = vpop.permute.xlu0 %4938
        %4941 = vset.pattern.permute.xlu0 15
        %4942 = vperm.xlu0 %4941, %v989
        %v4943 = vpop.permute.xlu0 %4942
        %4945 = vset.pattern.permute.xlu0 15
        %4946 = vperm.xlu0 %4945, %v990
        %v4947 = vpop.permute.xlu0 %4946
        %4949 = vset.pattern.permute.xlu0 15
        %4950 = vperm.xlu0 %4949, %v991
        %v4951 = vpop.permute.xlu0 %4950
        %4953 = vset.pattern.permute.xlu0 15
        %4954 = vperm.xlu0 %4953, %v992
        %v4955 = vpop.permute.xlu0 %4954
        %4957 = vset.pattern.permute.xlu0 15
        %4958 = vperm.xlu0 %4957, %v993
        %v4959 = vpop.permute.xlu0 %4958
        %4961 = vset.pattern.permute.xlu0 15
        %4962 = vperm.xlu0 %4961, %v994
        %v4963 = vpop.permute.xlu0 %4962
        %4965 = vset.pattern.permute.xlu0 15
        %4966 = vperm.xlu0 %4965, %v995
        %v4967 = vpop.permute.xlu0 %4966
        %v4969 = vmul.f32 %v4907, %v4874
        %v4970 = vmul.f32 %v4911, %v4876
        %v4971 = vmul.f32 %v4915, %v4878
        %v4972 = vmul.f32 %v4919, %v4880
        %v4973 = vmul.f32 %v4923, %v4882
        %v4974 = vmul.f32 %v4927, %v4884
        %v4975 = vmul.f32 %v4931, %v4886
        %v4976 = vmul.f32 %v4935, %v4888
        %v4977 = vmul.f32 %v4939, %v4890
        %v4978 = vmul.f32 %v4943, %v4892
        %v4979 = vmul.f32 %v4947, %v4894
        %v4980 = vmul.f32 %v4951, %v4896
        %v4981 = vmul.f32 %v4955, %v4898
        %v4982 = vmul.f32 %v4959, %v4900
        %v4983 = vmul.f32 %v4963, %v4902
        %v4984 = vmul.f32 %v4967, %v4904
        %v4985 = vadd.f32 %v4761, %v4969
        %v4986 = vadd.f32 %v4762, %v4970
        %v4987 = vadd.f32 %v4763, %v4971
        %v4988 = vadd.f32 %v4764, %v4972
        %v4989 = vadd.f32 %v4765, %v4973
        %v4990 = vadd.f32 %v4766, %v4974
        %v4991 = vadd.f32 %v4767, %v4975
        %v4992 = vadd.f32 %v4768, %v4976
        %v4993 = vadd.f32 %v4769, %v4977
        %v4994 = vadd.f32 %v4770, %v4978
        %v4995 = vadd.f32 %v4771, %v4979
        %v4996 = vadd.f32 %v4772, %v4980
        %v4997 = vadd.f32 %v4773, %v4981
        %v4998 = vadd.f32 %v4774, %v4982
        %v4999 = vadd.f32 %v4775, %v4983
        %v5000 = vadd.f32 %v4776, %v4984
        %5001 = vset.pattern.permute.xlu0 31
        %5002 = vperm.xlu0 %5001, %v980
        %v5003 = vpop.permute.xlu0 %5002
        %5005 = vset.pattern.permute.xlu0 31
        %5006 = vperm.xlu0 %5005, %v981
        %v5007 = vpop.permute.xlu0 %5006
        %5009 = vset.pattern.permute.xlu0 31
        %5010 = vperm.xlu0 %5009, %v982
        %v5011 = vpop.permute.xlu0 %5010
        %5013 = vset.pattern.permute.xlu0 31
        %5014 = vperm.xlu0 %5013, %v983
        %v5015 = vpop.permute.xlu0 %5014
        %5017 = vset.pattern.permute.xlu0 31
        %5018 = vperm.xlu0 %5017, %v984
        %v5019 = vpop.permute.xlu0 %5018
        %5021 = vset.pattern.permute.xlu0 31
        %5022 = vperm.xlu0 %5021, %v985
        %v5023 = vpop.permute.xlu0 %5022
        %5025 = vset.pattern.permute.xlu0 31
        %5026 = vperm.xlu0 %5025, %v986
        %v5027 = vpop.permute.xlu0 %5026
        %5029 = vset.pattern.permute.xlu0 31
        %5030 = vperm.xlu0 %5029, %v987
        %v5031 = vpop.permute.xlu0 %5030
        %5033 = vset.pattern.permute.xlu0 31
        %5034 = vperm.xlu0 %5033, %v988
        %v5035 = vpop.permute.xlu0 %5034
        %5037 = vset.pattern.permute.xlu0 31
        %5038 = vperm.xlu0 %5037, %v989
        %v5039 = vpop.permute.xlu0 %5038
        %5041 = vset.pattern.permute.xlu0 31
        %5042 = vperm.xlu0 %5041, %v990
        %v5043 = vpop.permute.xlu0 %5042
        %5045 = vset.pattern.permute.xlu0 31
        %5046 = vperm.xlu0 %5045, %v991
        %v5047 = vpop.permute.xlu0 %5046
        %5049 = vset.pattern.permute.xlu0 31
        %5050 = vperm.xlu0 %5049, %v992
        %v5051 = vpop.permute.xlu0 %5050
        %5053 = vset.pattern.permute.xlu0 31
        %5054 = vperm.xlu0 %5053, %v993
        %v5055 = vpop.permute.xlu0 %5054
        %5057 = vset.pattern.permute.xlu0 31
        %5058 = vperm.xlu0 %5057, %v994
        %v5059 = vpop.permute.xlu0 %5058
        %5061 = vset.pattern.permute.xlu0 31
        %5062 = vperm.xlu0 %5061, %v995
        %v5063 = vpop.permute.xlu0 %5062
        %v5065 = vmul.f32 %v5003, %v4874
        %v5066 = vmul.f32 %v5007, %v4876
        %v5067 = vmul.f32 %v5011, %v4878
        %v5068 = vmul.f32 %v5015, %v4880
        %v5069 = vmul.f32 %v5019, %v4882
        %v5070 = vmul.f32 %v5023, %v4884
        %v5071 = vmul.f32 %v5027, %v4886
        %v5072 = vmul.f32 %v5031, %v4888
        %v5073 = vmul.f32 %v5035, %v4890
        %v5074 = vmul.f32 %v5039, %v4892
        %v5075 = vmul.f32 %v5043, %v4894
        %v5076 = vmul.f32 %v5047, %v4896
        %v5077 = vmul.f32 %v5051, %v4898
        %v5078 = vmul.f32 %v5055, %v4900
        %v5079 = vmul.f32 %v5059, %v4902
        %v5080 = vmul.f32 %v5063, %v4904
        %v5081 = vadd.f32 %v4857, %v5065
        %v5082 = vadd.f32 %v4858, %v5066
        %v5083 = vadd.f32 %v4859, %v5067
        %v5084 = vadd.f32 %v4860, %v5068
        %v5085 = vadd.f32 %v4861, %v5069
        %v5086 = vadd.f32 %v4862, %v5070
        %v5087 = vadd.f32 %v4863, %v5071
        %v5088 = vadd.f32 %v4864, %v5072
        %v5089 = vadd.f32 %v4865, %v5073
        %v5090 = vadd.f32 %v4866, %v5074
        %v5091 = vadd.f32 %v4867, %v5075
        %v5092 = vadd.f32 %v4868, %v5076
        %v5093 = vadd.f32 %v4869, %v5077
        %v5094 = vadd.f32 %v4870, %v5078
        %v5095 = vadd.f32 %v4871, %v5079
        %v5096 = vadd.f32 %v4872, %v5080
        %5097 = vset.pattern.permute.xlu0 33
        %5098 = vperm.xlu0 %5097, %v980
        %v5099 = vpop.permute.xlu0 %5098
        %5101 = vset.pattern.permute.xlu0 33
        %5102 = vperm.xlu0 %5101, %v981
        %v5103 = vpop.permute.xlu0 %5102
        %5105 = vset.pattern.permute.xlu0 33
        %5106 = vperm.xlu0 %5105, %v982
        %v5107 = vpop.permute.xlu0 %5106
        %5109 = vset.pattern.permute.xlu0 33
        %5110 = vperm.xlu0 %5109, %v983
        %v5111 = vpop.permute.xlu0 %5110
        %5113 = vset.pattern.permute.xlu0 33
        %5114 = vperm.xlu0 %5113, %v984
        %v5115 = vpop.permute.xlu0 %5114
        %5117 = vset.pattern.permute.xlu0 33
        %5118 = vperm.xlu0 %5117, %v985
        %v5119 = vpop.permute.xlu0 %5118
        %5121 = vset.pattern.permute.xlu0 33
        %5122 = vperm.xlu0 %5121, %v986
        %v5123 = vpop.permute.xlu0 %5122
        %5125 = vset.pattern.permute.xlu0 33
        %5126 = vperm.xlu0 %5125, %v987
        %v5127 = vpop.permute.xlu0 %5126
        %5129 = vset.pattern.permute.xlu0 33
        %5130 = vperm.xlu0 %5129, %v988
        %v5131 = vpop.permute.xlu0 %5130
        %5133 = vset.pattern.permute.xlu0 33
        %5134 = vperm.xlu0 %5133, %v989
        %v5135 = vpop.permute.xlu0 %5134
        %5137 = vset.pattern.permute.xlu0 33
        %5138 = vperm.xlu0 %5137, %v990
        %v5139 = vpop.permute.xlu0 %5138
        %5141 = vset.pattern.permute.xlu0 33
        %5142 = vperm.xlu0 %5141, %v991
        %v5143 = vpop.permute.xlu0 %5142
        %5145 = vset.pattern.permute.xlu0 33
        %5146 = vperm.xlu0 %5145, %v992
        %v5147 = vpop.permute.xlu0 %5146
        %5149 = vset.pattern.permute.xlu0 33
        %5150 = vperm.xlu0 %5149, %v993
        %v5151 = vpop.permute.xlu0 %5150
        %5153 = vset.pattern.permute.xlu0 33
        %5154 = vperm.xlu0 %5153, %v994
        %v5155 = vpop.permute.xlu0 %5154
        %5157 = vset.pattern.permute.xlu0 33
        %5158 = vperm.xlu0 %5157, %v995
        %v5159 = vpop.permute.xlu0 %5158
        %v5161 = vadd.f32 %v4985, %v5099
        %v5162 = vadd.f32 %v4986, %v5103
        %v5163 = vadd.f32 %v4987, %v5107
        %v5164 = vadd.f32 %v4988, %v5111
        %v5165 = vadd.f32 %v4989, %v5115
        %v5166 = vadd.f32 %v4990, %v5119
        %v5167 = vadd.f32 %v4991, %v5123
        %v5168 = vadd.f32 %v4992, %v5127
        %v5169 = vadd.f32 %v4993, %v5131
        %v5170 = vadd.f32 %v4994, %v5135
        %v5171 = vadd.f32 %v4995, %v5139
        %v5172 = vadd.f32 %v4996, %v5143
        %v5173 = vadd.f32 %v4997, %v5147
        %v5174 = vadd.f32 %v4998, %v5151
        %v5175 = vadd.f32 %v4999, %v5155
        %v5176 = vadd.f32 %v5000, %v5159
        %vm5177 = vcmp.gt.f32.partialorder %v5161, 0.0
        %vm5178 = vcmp.gt.f32.partialorder %v5162, 0.0
        %vm5179 = vcmp.gt.f32.partialorder %v5163, 0.0
        %vm5180 = vcmp.gt.f32.partialorder %v5164, 0.0
        %vm5181 = vcmp.gt.f32.partialorder %v5165, 0.0
        %vm5182 = vcmp.gt.f32.partialorder %v5166, 0.0
        %vm5183 = vcmp.gt.f32.partialorder %v5167, 0.0
        %vm5184 = vcmp.gt.f32.partialorder %v5168, 0.0
        %vm5185 = vcmp.gt.f32.partialorder %v5169, 0.0
        %vm5186 = vcmp.gt.f32.partialorder %v5170, 0.0
        %vm5187 = vcmp.gt.f32.partialorder %v5171, 0.0
        %vm5188 = vcmp.gt.f32.partialorder %v5172, 0.0
        %vm5189 = vcmp.gt.f32.partialorder %v5173, 0.0
        %vm5190 = vcmp.gt.f32.partialorder %v5174, 0.0
        %vm5191 = vcmp.gt.f32.partialorder %v5175, 0.0
        %vm5192 = vcmp.gt.f32.partialorder %v5176, 0.0
        %v5193 = vmin.f32 %v5161, 0.0
        %v5194 = vmin.f32 %v5162, 0.0
        %v5195 = vmin.f32 %v5163, 0.0
        %v5196 = vmin.f32 %v5164, 0.0
        %v5197 = vmin.f32 %v5165, 0.0
        %v5198 = vmin.f32 %v5166, 0.0
        %v5199 = vmin.f32 %v5167, 0.0
        %v5200 = vmin.f32 %v5168, 0.0
        %v5201 = vmin.f32 %v5169, 0.0
        %v5202 = vmin.f32 %v5170, 0.0
        %v5203 = vmin.f32 %v5171, 0.0
        %v5204 = vmin.f32 %v5172, 0.0
        %v5205 = vmin.f32 %v5173, 0.0
        %v5206 = vmin.f32 %v5174, 0.0
        %v5207 = vmin.f32 %v5175, 0.0
        %v5208 = vmin.f32 %v5176, 0.0
        %v5209 = vmul.f32 %v5193, 1.442695
        %v5210 = vpow.pop %v5209
        %v5211 = vmul.f32 %v5194, 1.442695
        %v5212 = vpow.pop %v5211
        %v5213 = vmul.f32 %v5195, 1.442695
        %v5214 = vpow.pop %v5213
        %v5215 = vmul.f32 %v5196, 1.442695
        %v5216 = vpow.pop %v5215
        %v5217 = vmul.f32 %v5197, 1.442695
        %v5218 = vpow.pop %v5217
        %v5219 = vmul.f32 %v5198, 1.442695
        %v5220 = vpow.pop %v5219
        %v5221 = vmul.f32 %v5199, 1.442695
        %v5222 = vpow.pop %v5221
        %v5223 = vmul.f32 %v5200, 1.442695
        %v5224 = vpow.pop %v5223
        %v5225 = vmul.f32 %v5201, 1.442695
        %v5226 = vpow.pop %v5225
        %v5227 = vmul.f32 %v5202, 1.442695
        %v5228 = vpow.pop %v5227
        %v5229 = vmul.f32 %v5203, 1.442695
        %v5230 = vpow.pop %v5229
        %v5231 = vmul.f32 %v5204, 1.442695
        %v5232 = vpow.pop %v5231
        %v5233 = vmul.f32 %v5205, 1.442695
        %v5234 = vpow.pop %v5233
        %v5235 = vmul.f32 %v5206, 1.442695
        %v5236 = vpow.pop %v5235
        %v5237 = vmul.f32 %v5207, 1.442695
        %v5238 = vpow.pop %v5237
        %v5239 = vmul.f32 %v5208, 1.442695
        %v5240 = vpow.pop %v5239
        %v5241 = vsub.f32 %v5210, 1.0
        %v5242 = vsub.f32 %v5212, 1.0
        %v5243 = vsub.f32 %v5214, 1.0
        %v5244 = vsub.f32 %v5216, 1.0
        %v5245 = vsub.f32 %v5218, 1.0
        %v5246 = vsub.f32 %v5220, 1.0
        %v5247 = vsub.f32 %v5222, 1.0
        %v5248 = vsub.f32 %v5224, 1.0
        %v5249 = vsub.f32 %v5226, 1.0
        %v5250 = vsub.f32 %v5228, 1.0
        %v5251 = vsub.f32 %v5230, 1.0
        %v5252 = vsub.f32 %v5232, 1.0
        %v5253 = vsub.f32 %v5234, 1.0
        %v5254 = vsub.f32 %v5236, 1.0
        %v5255 = vsub.f32 %v5238, 1.0
        %v5256 = vsub.f32 %v5240, 1.0
        %v5257 = vsel %vm5177, %v5161, %v5241
        %v5258 = vsel %vm5178, %v5162, %v5242
        %v5259 = vsel %vm5179, %v5163, %v5243
        %v5260 = vsel %vm5180, %v5164, %v5244
        %v5261 = vsel %vm5181, %v5165, %v5245
        %v5262 = vsel %vm5182, %v5166, %v5246
        %v5263 = vsel %vm5183, %v5167, %v5247
        %v5264 = vsel %vm5184, %v5168, %v5248
        %v5265 = vsel %vm5185, %v5169, %v5249
        %v5266 = vsel %vm5186, %v5170, %v5250
        %v5267 = vsel %vm5187, %v5171, %v5251
        %v5268 = vsel %vm5188, %v5172, %v5252
        %v5269 = vsel %vm5189, %v5173, %v5253
        %v5270 = vsel %vm5190, %v5174, %v5254
        %v5271 = vsel %vm5191, %v5175, %v5255
        %v5272 = vsel %vm5192, %v5176, %v5256
        %5273 = vset.pattern.permute.xlu0 34
        %5274 = vperm.xlu0 %5273, %v980
        %v5275 = vpop.permute.xlu0 %5274
        %5277 = vset.pattern.permute.xlu0 34
        %5278 = vperm.xlu0 %5277, %v981
        %v5279 = vpop.permute.xlu0 %5278
        %5281 = vset.pattern.permute.xlu0 34
        %5282 = vperm.xlu0 %5281, %v982
        %v5283 = vpop.permute.xlu0 %5282
        %5285 = vset.pattern.permute.xlu0 34
        %5286 = vperm.xlu0 %5285, %v983
        %v5287 = vpop.permute.xlu0 %5286
        %5289 = vset.pattern.permute.xlu0 34
        %5290 = vperm.xlu0 %5289, %v984
        %v5291 = vpop.permute.xlu0 %5290
        %5293 = vset.pattern.permute.xlu0 34
        %5294 = vperm.xlu0 %5293, %v985
        %v5295 = vpop.permute.xlu0 %5294
        %5297 = vset.pattern.permute.xlu0 34
        %5298 = vperm.xlu0 %5297, %v986
        %v5299 = vpop.permute.xlu0 %5298
        %5301 = vset.pattern.permute.xlu0 34
        %5302 = vperm.xlu0 %5301, %v987
        %v5303 = vpop.permute.xlu0 %5302
        %5305 = vset.pattern.permute.xlu0 34
        %5306 = vperm.xlu0 %5305, %v988
        %v5307 = vpop.permute.xlu0 %5306
        %5309 = vset.pattern.permute.xlu0 34
        %5310 = vperm.xlu0 %5309, %v989
        %v5311 = vpop.permute.xlu0 %5310
        %5313 = vset.pattern.permute.xlu0 34
        %5314 = vperm.xlu0 %5313, %v990
        %v5315 = vpop.permute.xlu0 %5314
        %5317 = vset.pattern.permute.xlu0 34
        %5318 = vperm.xlu0 %5317, %v991
        %v5319 = vpop.permute.xlu0 %5318
        %5321 = vset.pattern.permute.xlu0 34
        %5322 = vperm.xlu0 %5321, %v992
        %v5323 = vpop.permute.xlu0 %5322
        %5325 = vset.pattern.permute.xlu0 34
        %5326 = vperm.xlu0 %5325, %v993
        %v5327 = vpop.permute.xlu0 %5326
        %5329 = vset.pattern.permute.xlu0 34
        %5330 = vperm.xlu0 %5329, %v994
        %v5331 = vpop.permute.xlu0 %5330
        %5333 = vset.pattern.permute.xlu0 34
        %5334 = vperm.xlu0 %5333, %v995
        %v5335 = vpop.permute.xlu0 %5334
        %v5337 = vadd.f32 %v5081, %v5275
        %v5338 = vadd.f32 %v5082, %v5279
        %v5339 = vadd.f32 %v5083, %v5283
        %v5340 = vadd.f32 %v5084, %v5287
        %v5341 = vadd.f32 %v5085, %v5291
        %v5342 = vadd.f32 %v5086, %v5295
        %v5343 = vadd.f32 %v5087, %v5299
        %v5344 = vadd.f32 %v5088, %v5303
        %v5345 = vadd.f32 %v5089, %v5307
        %v5346 = vadd.f32 %v5090, %v5311
        %v5347 = vadd.f32 %v5091, %v5315
        %v5348 = vadd.f32 %v5092, %v5319
        %v5349 = vadd.f32 %v5093, %v5323
        %v5350 = vadd.f32 %v5094, %v5327
        %v5351 = vadd.f32 %v5095, %v5331
        %v5352 = vadd.f32 %v5096, %v5335
        %vm5353 = vcmp.gt.f32.partialorder %v5337, 0.0
        %vm5354 = vcmp.gt.f32.partialorder %v5338, 0.0
        %vm5355 = vcmp.gt.f32.partialorder %v5339, 0.0
        %vm5356 = vcmp.gt.f32.partialorder %v5340, 0.0
        %vm5357 = vcmp.gt.f32.partialorder %v5341, 0.0
        %vm5358 = vcmp.gt.f32.partialorder %v5342, 0.0
        %vm5359 = vcmp.gt.f32.partialorder %v5343, 0.0
        %vm5360 = vcmp.gt.f32.partialorder %v5344, 0.0
        %vm5361 = vcmp.gt.f32.partialorder %v5345, 0.0
        %vm5362 = vcmp.gt.f32.partialorder %v5346, 0.0
        %vm5363 = vcmp.gt.f32.partialorder %v5347, 0.0
        %vm5364 = vcmp.gt.f32.partialorder %v5348, 0.0
        %vm5365 = vcmp.gt.f32.partialorder %v5349, 0.0
        %vm5366 = vcmp.gt.f32.partialorder %v5350, 0.0
        %vm5367 = vcmp.gt.f32.partialorder %v5351, 0.0
        %vm5368 = vcmp.gt.f32.partialorder %v5352, 0.0
        %v5369 = vmin.f32 %v5337, 0.0
        %v5370 = vmin.f32 %v5338, 0.0
        %v5371 = vmin.f32 %v5339, 0.0
        %v5372 = vmin.f32 %v5340, 0.0
        %v5373 = vmin.f32 %v5341, 0.0
        %v5374 = vmin.f32 %v5342, 0.0
        %v5375 = vmin.f32 %v5343, 0.0
        %v5376 = vmin.f32 %v5344, 0.0
        %v5377 = vmin.f32 %v5345, 0.0
        %v5378 = vmin.f32 %v5346, 0.0
        %v5379 = vmin.f32 %v5347, 0.0
        %v5380 = vmin.f32 %v5348, 0.0
        %v5381 = vmin.f32 %v5349, 0.0
        %v5382 = vmin.f32 %v5350, 0.0
        %v5383 = vmin.f32 %v5351, 0.0
        %v5384 = vmin.f32 %v5352, 0.0
        %v5385 = vmul.f32 %v5369, 1.442695
        %v5386 = vpow.pop %v5385
        %v5387 = vmul.f32 %v5370, 1.442695
        %v5388 = vpow.pop %v5387
        %v5389 = vmul.f32 %v5371, 1.442695
        %v5390 = vpow.pop %v5389
        %v5391 = vmul.f32 %v5372, 1.442695
        %v5392 = vpow.pop %v5391
        %v5393 = vmul.f32 %v5373, 1.442695
        %v5394 = vpow.pop %v5393
        %v5395 = vmul.f32 %v5374, 1.442695
        %v5396 = vpow.pop %v5395
        %v5397 = vmul.f32 %v5375, 1.442695
        %v5398 = vpow.pop %v5397
        %v5399 = vmul.f32 %v5376, 1.442695
        %v5400 = vpow.pop %v5399
        %v5401 = vmul.f32 %v5377, 1.442695
        %v5402 = vpow.pop %v5401
        %v5403 = vmul.f32 %v5378, 1.442695
        %v5404 = vpow.pop %v5403
        %v5405 = vmul.f32 %v5379, 1.442695
        %v5406 = vpow.pop %v5405
        %v5407 = vmul.f32 %v5380, 1.442695
        %v5408 = vpow.pop %v5407
        %v5409 = vmul.f32 %v5381, 1.442695
        %v5410 = vpow.pop %v5409
        %v5411 = vmul.f32 %v5382, 1.442695
        %v5412 = vpow.pop %v5411
        %v5413 = vmul.f32 %v5383, 1.442695
        %v5414 = vpow.pop %v5413
        %v5415 = vmul.f32 %v5384, 1.442695
        %v5416 = vpow.pop %v5415
        %v5417 = vsub.f32 %v5386, 1.0
        %v5418 = vsub.f32 %v5388, 1.0
        %v5419 = vsub.f32 %v5390, 1.0
        %v5420 = vsub.f32 %v5392, 1.0
        %v5421 = vsub.f32 %v5394, 1.0
        %v5422 = vsub.f32 %v5396, 1.0
        %v5423 = vsub.f32 %v5398, 1.0
        %v5424 = vsub.f32 %v5400, 1.0
        %v5425 = vsub.f32 %v5402, 1.0
        %v5426 = vsub.f32 %v5404, 1.0
        %v5427 = vsub.f32 %v5406, 1.0
        %v5428 = vsub.f32 %v5408, 1.0
        %v5429 = vsub.f32 %v5410, 1.0
        %v5430 = vsub.f32 %v5412, 1.0
        %v5431 = vsub.f32 %v5414, 1.0
        %v5432 = vsub.f32 %v5416, 1.0
        %v5433 = vsel %vm5353, %v5337, %v5417
        %v5434 = vsel %vm5354, %v5338, %v5418
        %v5435 = vsel %vm5355, %v5339, %v5419
        %v5436 = vsel %vm5356, %v5340, %v5420
        %v5437 = vsel %vm5357, %v5341, %v5421
        %v5438 = vsel %vm5358, %v5342, %v5422
        %v5439 = vsel %vm5359, %v5343, %v5423
        %v5440 = vsel %vm5360, %v5344, %v5424
        %v5441 = vsel %vm5361, %v5345, %v5425
        %v5442 = vsel %vm5362, %v5346, %v5426
        %v5443 = vsel %vm5363, %v5347, %v5427
        %v5444 = vsel %vm5364, %v5348, %v5428
        %v5445 = vsel %vm5365, %v5349, %v5429
        %v5446 = vsel %vm5366, %v5350, %v5430
        %v5447 = vsel %vm5367, %v5351, %v5431
        %v5448 = vsel %vm5368, %v5352, %v5432
        %v5449 = vld [vmem:[#allocation2] sm:$0xff]
        %v5450 = vld [vmem:[#allocation2 + $0x8] sm:$0xff]
        %v5451 = vld [vmem:[#allocation2 + $0x10] sm:$0xff]
        %v5452 = vld [vmem:[#allocation2 + $0x18] sm:$0xff]
        %v5453 = vld [vmem:[#allocation2 + $0x20] sm:$0xff]
        %v5454 = vld [vmem:[#allocation2 + $0x28] sm:$0xff]
        %v5455 = vld [vmem:[#allocation2 + $0x30] sm:$0xff]
        %v5456 = vld [vmem:[#allocation2 + $0x38] sm:$0xff]
        %v5457 = vld [vmem:[#allocation2 + $0x40] sm:$0xff]
        %v5458 = vld [vmem:[#allocation2 + $0x48] sm:$0xff]
        %v5459 = vld [vmem:[#allocation2 + $0x50] sm:$0xff]
        %v5460 = vld [vmem:[#allocation2 + $0x58] sm:$0xff]
        %v5461 = vld [vmem:[#allocation2 + $0x60] sm:$0xff]
        %v5462 = vld [vmem:[#allocation2 + $0x68] sm:$0xff]
        %v5463 = vld [vmem:[#allocation2 + $0x70] sm:$0xff]
        %v5464 = vld [vmem:[#allocation2 + $0x78] sm:$0xff]
        %v5465 = vld [vmem:[#allocation2 + $0x80] sm:$0xff]
        %v5466 = vld [vmem:[#allocation2 + $0x88] sm:$0xff]
        %v5467 = vld [vmem:[#allocation2 + $0x90] sm:$0xff]
        %v5468 = vld [vmem:[#allocation2 + $0x98] sm:$0xff]
        %v5469 = vld [vmem:[#allocation2 + $0xa0] sm:$0xff]
        %v5470 = vld [vmem:[#allocation2 + $0xa8] sm:$0xff]
        %v5471 = vld [vmem:[#allocation2 + $0xb0] sm:$0xff]
        %v5472 = vld [vmem:[#allocation2 + $0xb8] sm:$0xff]
        %v5473 = vld [vmem:[#allocation2 + $0xc0] sm:$0xff]
        %v5474 = vld [vmem:[#allocation2 + $0xc8] sm:$0xff]
        %v5475 = vld [vmem:[#allocation2 + $0xd0] sm:$0xff]
        %v5476 = vld [vmem:[#allocation2 + $0xd8] sm:$0xff]
        %v5477 = vld [vmem:[#allocation2 + $0xe0] sm:$0xff]
        %v5478 = vld [vmem:[#allocation2 + $0xe8] sm:$0xff]
        %v5479 = vld [vmem:[#allocation2 + $0xf0] sm:$0xff]
        %v5480 = vld [vmem:[#allocation2 + $0xf8] sm:$0xff]
        %v5481 = vmul.f32 %v5257, %v5449
        %v5482 = vmul.f32 %v5258, %v5451
        %v5483 = vmul.f32 %v5259, %v5453
        %v5484 = vmul.f32 %v5260, %v5455
        %v5485 = vmul.f32 %v5261, %v5457
        %v5486 = vmul.f32 %v5262, %v5459
        %v5487 = vmul.f32 %v5263, %v5461
        %v5488 = vmul.f32 %v5264, %v5463
        %v5489 = vmul.f32 %v5265, %v5465
        %v5490 = vmul.f32 %v5266, %v5467
        %v5491 = vmul.f32 %v5267, %v5469
        %v5492 = vmul.f32 %v5268, %v5471
        %v5493 = vmul.f32 %v5269, %v5473
        %v5494 = vmul.f32 %v5270, %v5475
        %v5495 = vmul.f32 %v5271, %v5477
        %v5496 = vmul.f32 %v5272, %v5479
        %v5497 = vmul.f32 %v5433, %v5450
        %v5498 = vmul.f32 %v5434, %v5452
        %v5499 = vmul.f32 %v5435, %v5454
        %v5500 = vmul.f32 %v5436, %v5456
        %v5501 = vmul.f32 %v5437, %v5458
        %v5502 = vmul.f32 %v5438, %v5460
        %v5503 = vmul.f32 %v5439, %v5462
        %v5504 = vmul.f32 %v5440, %v5464
        %v5505 = vmul.f32 %v5441, %v5466
        %v5506 = vmul.f32 %v5442, %v5468
        %v5507 = vmul.f32 %v5443, %v5470
        %v5508 = vmul.f32 %v5444, %v5472
        %v5509 = vmul.f32 %v5445, %v5474
        %v5510 = vmul.f32 %v5446, %v5476
        %v5511 = vmul.f32 %v5447, %v5478
        %v5512 = vmul.f32 %v5448, %v5480
        %v5513 = vadd.f32 %v5481, %v5497
        %v5514 = vadd.f32 %v5482, %v5498
        %v5515 = vadd.f32 %v5483, %v5499
        %v5516 = vadd.f32 %v5484, %v5500
        %v5517 = vadd.f32 %v5485, %v5501
        %v5518 = vadd.f32 %v5486, %v5502
        %v5519 = vadd.f32 %v5487, %v5503
        %v5520 = vadd.f32 %v5488, %v5504
        %v5521 = vadd.f32 %v5489, %v5505
        %v5522 = vadd.f32 %v5490, %v5506
        %v5523 = vadd.f32 %v5491, %v5507
        %v5524 = vadd.f32 %v5492, %v5508
        %v5525 = vadd.f32 %v5493, %v5509
        %v5526 = vadd.f32 %v5494, %v5510
        %v5527 = vadd.f32 %v5495, %v5511
        %v5528 = vadd.f32 %v5496, %v5512
        %5529 = vadd.xlane.f32.xlu0 %v5513
        %v5530 = vpop.xlane.xlu0 %5529
        %5531 = vadd.xlane.f32.xlu0 %v5514
        %v5532 = vpop.xlane.xlu0 %5531
        %5533 = vadd.xlane.f32.xlu0 %v5515
        %v5534 = vpop.xlane.xlu0 %5533
        %5535 = vadd.xlane.f32.xlu0 %v5516
        %v5536 = vpop.xlane.xlu0 %5535
        %5537 = vadd.xlane.f32.xlu0 %v5517
        %v5538 = vpop.xlane.xlu0 %5537
        %5539 = vadd.xlane.f32.xlu0 %v5518
        %v5540 = vpop.xlane.xlu0 %5539
        %5541 = vadd.xlane.f32.xlu0 %v5519
        %v5542 = vpop.xlane.xlu0 %5541
        %5543 = vadd.xlane.f32.xlu0 %v5520
        %v5544 = vpop.xlane.xlu0 %5543
        %5545 = vadd.xlane.f32.xlu0 %v5521
        %v5546 = vpop.xlane.xlu0 %5545
        %5547 = vadd.xlane.f32.xlu0 %v5522
        %v5548 = vpop.xlane.xlu0 %5547
        %5549 = vadd.xlane.f32.xlu0 %v5523
        %v5550 = vpop.xlane.xlu0 %5549
        %5551 = vadd.xlane.f32.xlu0 %v5524
        %v5552 = vpop.xlane.xlu0 %5551
        %5553 = vadd.xlane.f32.xlu0 %v5525
        %v5554 = vpop.xlane.xlu0 %5553
        %5555 = vadd.xlane.f32.xlu0 %v5526
        %v5556 = vpop.xlane.xlu0 %5555
        %5557 = vadd.xlane.f32.xlu0 %v5527
        %v5558 = vpop.xlane.xlu0 %5557
        %5559 = vadd.xlane.f32.xlu0 %v5528
        %v5560 = vpop.xlane.xlu0 %5559
        %v5561 = vadd.f32 %v5530, %v5546
        %v5562 = vadd.f32 %v5532, %v5548
        %v5563 = vadd.f32 %v5534, %v5550
        %v5564 = vadd.f32 %v5536, %v5552
        %v5565 = vadd.f32 %v5538, %v5554
        %v5566 = vadd.f32 %v5540, %v5556
        %v5567 = vadd.f32 %v5542, %v5558
        %v5568 = vadd.f32 %v5544, %v5560
        %v5569 = vadd.f32 %v5561, %v5565
        %v5570 = vadd.f32 %v5562, %v5566
        %v5571 = vadd.f32 %v5563, %v5567
        %v5572 = vadd.f32 %v5564, %v5568
        %v5573 = vadd.f32 %v5569, %v5571
        %v5574 = vadd.f32 %v5570, %v5572
        %v5575 = vadd.f32 %v5573, %v5574
        %v5576 = vld [vmem:[%s4] sm:$0x1]
        %v5577 = vlaneseq
        %v5578 = vshrl.u32 %v5577, 7
        %v5579 = vsub.s32 0, %v5578
        %v5580 = vrot.slane %v5576, %v5579
        %v5581 = vadd.f32 %v5575, %v5580
        %s5582 = scalar_lea.vmem [#allocation2], 256
        %v5583 = vld [vmem:[%s5582] sm:$0xff]
        %v5584 = vld [vmem:[%s5582 + $0x8] sm:$0xff]
        %v5585 = vld [vmem:[%s5582 + $0x10] sm:$0xff]
        %v5586 = vld [vmem:[%s5582 + $0x18] sm:$0xff]
        %v5587 = vld [vmem:[%s5582 + $0x20] sm:$0xff]
        %v5588 = vld [vmem:[%s5582 + $0x28] sm:$0xff]
        %v5589 = vld [vmem:[%s5582 + $0x30] sm:$0xff]
        %v5590 = vld [vmem:[%s5582 + $0x38] sm:$0xff]
        %v5591 = vld [vmem:[%s5582 + $0x40] sm:$0xff]
        %v5592 = vld [vmem:[%s5582 + $0x48] sm:$0xff]
        %v5593 = vld [vmem:[%s5582 + $0x50] sm:$0xff]
        %v5594 = vld [vmem:[%s5582 + $0x58] sm:$0xff]
        %v5595 = vld [vmem:[%s5582 + $0x60] sm:$0xff]
        %v5596 = vld [vmem:[%s5582 + $0x68] sm:$0xff]
        %v5597 = vld [vmem:[%s5582 + $0x70] sm:$0xff]
        %v5598 = vld [vmem:[%s5582 + $0x78] sm:$0xff]
        %v5599 = vld [vmem:[%s5582 + $0x80] sm:$0xff]
        %v5600 = vld [vmem:[%s5582 + $0x88] sm:$0xff]
        %v5601 = vld [vmem:[%s5582 + $0x90] sm:$0xff]
        %v5602 = vld [vmem:[%s5582 + $0x98] sm:$0xff]
        %v5603 = vld [vmem:[%s5582 + $0xa0] sm:$0xff]
        %v5604 = vld [vmem:[%s5582 + $0xa8] sm:$0xff]
        %v5605 = vld [vmem:[%s5582 + $0xb0] sm:$0xff]
        %v5606 = vld [vmem:[%s5582 + $0xb8] sm:$0xff]
        %v5607 = vld [vmem:[%s5582 + $0xc0] sm:$0xff]
        %v5608 = vld [vmem:[%s5582 + $0xc8] sm:$0xff]
        %v5609 = vld [vmem:[%s5582 + $0xd0] sm:$0xff]
        %v5610 = vld [vmem:[%s5582 + $0xd8] sm:$0xff]
        %v5611 = vld [vmem:[%s5582 + $0xe0] sm:$0xff]
        %v5612 = vld [vmem:[%s5582 + $0xe8] sm:$0xff]
        %v5613 = vld [vmem:[%s5582 + $0xf0] sm:$0xff]
        %v5614 = vld [vmem:[%s5582 + $0xf8] sm:$0xff]
        %v5615 = vmul.f32 %v5257, %v5583
        %v5616 = vmul.f32 %v5258, %v5585
        %v5617 = vmul.f32 %v5259, %v5587
        %v5618 = vmul.f32 %v5260, %v5589
        %v5619 = vmul.f32 %v5261, %v5591
        %v5620 = vmul.f32 %v5262, %v5593
        %v5621 = vmul.f32 %v5263, %v5595
        %v5622 = vmul.f32 %v5264, %v5597
        %v5623 = vmul.f32 %v5265, %v5599
        %v5624 = vmul.f32 %v5266, %v5601
        %v5625 = vmul.f32 %v5267, %v5603
        %v5626 = vmul.f32 %v5268, %v5605
        %v5627 = vmul.f32 %v5269, %v5607
        %v5628 = vmul.f32 %v5270, %v5609
        %v5629 = vmul.f32 %v5271, %v5611
        %v5630 = vmul.f32 %v5272, %v5613
        %v5631 = vmul.f32 %v5433, %v5584
        %v5632 = vmul.f32 %v5434, %v5586
        %v5633 = vmul.f32 %v5435, %v5588
        %v5634 = vmul.f32 %v5436, %v5590
        %v5635 = vmul.f32 %v5437, %v5592
        %v5636 = vmul.f32 %v5438, %v5594
        %v5637 = vmul.f32 %v5439, %v5596
        %v5638 = vmul.f32 %v5440, %v5598
        %v5639 = vmul.f32 %v5441, %v5600
        %v5640 = vmul.f32 %v5442, %v5602
        %v5641 = vmul.f32 %v5443, %v5604
        %v5642 = vmul.f32 %v5444, %v5606
        %v5643 = vmul.f32 %v5445, %v5608
        %v5644 = vmul.f32 %v5446, %v5610
        %v5645 = vmul.f32 %v5447, %v5612
        %v5646 = vmul.f32 %v5448, %v5614
        %v5647 = vadd.f32 %v5615, %v5631
        %v5648 = vadd.f32 %v5616, %v5632
        %v5649 = vadd.f32 %v5617, %v5633
        %v5650 = vadd.f32 %v5618, %v5634
        %v5651 = vadd.f32 %v5619, %v5635
        %v5652 = vadd.f32 %v5620, %v5636
        %v5653 = vadd.f32 %v5621, %v5637
        %v5654 = vadd.f32 %v5622, %v5638
        %v5655 = vadd.f32 %v5623, %v5639
        %v5656 = vadd.f32 %v5624, %v5640
        %v5657 = vadd.f32 %v5625, %v5641
        %v5658 = vadd.f32 %v5626, %v5642
        %v5659 = vadd.f32 %v5627, %v5643
        %v5660 = vadd.f32 %v5628, %v5644
        %v5661 = vadd.f32 %v5629, %v5645
        %v5662 = vadd.f32 %v5630, %v5646
        %5663 = vadd.xlane.f32.xlu0 %v5647
        %v5664 = vpop.xlane.xlu0 %5663
        %5665 = vadd.xlane.f32.xlu0 %v5648
        %v5666 = vpop.xlane.xlu0 %5665
        %5667 = vadd.xlane.f32.xlu0 %v5649
        %v5668 = vpop.xlane.xlu0 %5667
        %5669 = vadd.xlane.f32.xlu0 %v5650
        %v5670 = vpop.xlane.xlu0 %5669
        %5671 = vadd.xlane.f32.xlu0 %v5651
        %v5672 = vpop.xlane.xlu0 %5671
        %5673 = vadd.xlane.f32.xlu0 %v5652
        %v5674 = vpop.xlane.xlu0 %5673
        %5675 = vadd.xlane.f32.xlu0 %v5653
        %v5676 = vpop.xlane.xlu0 %5675
        %5677 = vadd.xlane.f32.xlu0 %v5654
        %v5678 = vpop.xlane.xlu0 %5677
        %5679 = vadd.xlane.f32.xlu0 %v5655
        %v5680 = vpop.xlane.xlu0 %5679
        %5681 = vadd.xlane.f32.xlu0 %v5656
        %v5682 = vpop.xlane.xlu0 %5681
        %5683 = vadd.xlane.f32.xlu0 %v5657
        %v5684 = vpop.xlane.xlu0 %5683
        %5685 = vadd.xlane.f32.xlu0 %v5658
        %v5686 = vpop.xlane.xlu0 %5685
        %5687 = vadd.xlane.f32.xlu0 %v5659
        %v5688 = vpop.xlane.xlu0 %5687
        %5689 = vadd.xlane.f32.xlu0 %v5660
        %v5690 = vpop.xlane.xlu0 %5689
        %5691 = vadd.xlane.f32.xlu0 %v5661
        %v5692 = vpop.xlane.xlu0 %5691
        %5693 = vadd.xlane.f32.xlu0 %v5662
        %v5694 = vpop.xlane.xlu0 %5693
        %v5695 = vadd.f32 %v5664, %v5680
        %v5696 = vadd.f32 %v5666, %v5682
        %v5697 = vadd.f32 %v5668, %v5684
        %v5698 = vadd.f32 %v5670, %v5686
        %v5699 = vadd.f32 %v5672, %v5688
        %v5700 = vadd.f32 %v5674, %v5690
        %v5701 = vadd.f32 %v5676, %v5692
        %v5702 = vadd.f32 %v5678, %v5694
        %v5703 = vadd.f32 %v5695, %v5699
        %v5704 = vadd.f32 %v5696, %v5700
        %v5705 = vadd.f32 %v5697, %v5701
        %v5706 = vadd.f32 %v5698, %v5702
        %v5707 = vadd.f32 %v5703, %v5705
        %v5708 = vadd.f32 %v5704, %v5706
        %v5709 = vadd.f32 %v5707, %v5708
        %v5710 = vadd.f32 %v5709, %v5580
        %s5711 = scalar_lea.vmem [#allocation2], 512
        %v5712 = vld [vmem:[%s5711] sm:$0xff]
        %v5713 = vld [vmem:[%s5711 + $0x8] sm:$0xff]
        %v5714 = vld [vmem:[%s5711 + $0x10] sm:$0xff]
        %v5715 = vld [vmem:[%s5711 + $0x18] sm:$0xff]
        %v5716 = vld [vmem:[%s5711 + $0x20] sm:$0xff]
        %v5717 = vld [vmem:[%s5711 + $0x28] sm:$0xff]
        %v5718 = vld [vmem:[%s5711 + $0x30] sm:$0xff]
        %v5719 = vld [vmem:[%s5711 + $0x38] sm:$0xff]
        %v5720 = vld [vmem:[%s5711 + $0x40] sm:$0xff]
        %v5721 = vld [vmem:[%s5711 + $0x48] sm:$0xff]
        %v5722 = vld [vmem:[%s5711 + $0x50] sm:$0xff]
        %v5723 = vld [vmem:[%s5711 + $0x58] sm:$0xff]
        %v5724 = vld [vmem:[%s5711 + $0x60] sm:$0xff]
        %v5725 = vld [vmem:[%s5711 + $0x68] sm:$0xff]
        %v5726 = vld [vmem:[%s5711 + $0x70] sm:$0xff]
        %v5727 = vld [vmem:[%s5711 + $0x78] sm:$0xff]
        %v5728 = vld [vmem:[%s5711 + $0x80] sm:$0xff]
        %v5729 = vld [vmem:[%s5711 + $0x88] sm:$0xff]
        %v5730 = vld [vmem:[%s5711 + $0x90] sm:$0xff]
        %v5731 = vld [vmem:[%s5711 + $0x98] sm:$0xff]
        %v5732 = vld [vmem:[%s5711 + $0xa0] sm:$0xff]
        %v5733 = vld [vmem:[%s5711 + $0xa8] sm:$0xff]
        %v5734 = vld [vmem:[%s5711 + $0xb0] sm:$0xff]
        %v5735 = vld [vmem:[%s5711 + $0xb8] sm:$0xff]
        %v5736 = vld [vmem:[%s5711 + $0xc0] sm:$0xff]
        %v5737 = vld [vmem:[%s5711 + $0xc8] sm:$0xff]
        %v5738 = vld [vmem:[%s5711 + $0xd0] sm:$0xff]
        %v5739 = vld [vmem:[%s5711 + $0xd8] sm:$0xff]
        %v5740 = vld [vmem:[%s5711 + $0xe0] sm:$0xff]
        %v5741 = vld [vmem:[%s5711 + $0xe8] sm:$0xff]
        %v5742 = vld [vmem:[%s5711 + $0xf0] sm:$0xff]
        %v5743 = vld [vmem:[%s5711 + $0xf8] sm:$0xff]
        %v5744 = vmul.f32 %v5257, %v5712
        %v5745 = vmul.f32 %v5258, %v5714
        %v5746 = vmul.f32 %v5259, %v5716
        %v5747 = vmul.f32 %v5260, %v5718
        %v5748 = vmul.f32 %v5261, %v5720
        %v5749 = vmul.f32 %v5262, %v5722
        %v5750 = vmul.f32 %v5263, %v5724
        %v5751 = vmul.f32 %v5264, %v5726
        %v5752 = vmul.f32 %v5265, %v5728
        %v5753 = vmul.f32 %v5266, %v5730
        %v5754 = vmul.f32 %v5267, %v5732
        %v5755 = vmul.f32 %v5268, %v5734
        %v5756 = vmul.f32 %v5269, %v5736
        %v5757 = vmul.f32 %v5270, %v5738
        %v5758 = vmul.f32 %v5271, %v5740
        %v5759 = vmul.f32 %v5272, %v5742
        %v5760 = vmul.f32 %v5433, %v5713
        %v5761 = vmul.f32 %v5434, %v5715
        %v5762 = vmul.f32 %v5435, %v5717
        %v5763 = vmul.f32 %v5436, %v5719
        %v5764 = vmul.f32 %v5437, %v5721
        %v5765 = vmul.f32 %v5438, %v5723
        %v5766 = vmul.f32 %v5439, %v5725
        %v5767 = vmul.f32 %v5440, %v5727
        %v5768 = vmul.f32 %v5441, %v5729
        %v5769 = vmul.f32 %v5442, %v5731
        %v5770 = vmul.f32 %v5443, %v5733
        %v5771 = vmul.f32 %v5444, %v5735
        %v5772 = vmul.f32 %v5445, %v5737
        %v5773 = vmul.f32 %v5446, %v5739
        %v5774 = vmul.f32 %v5447, %v5741
        %v5775 = vmul.f32 %v5448, %v5743
        %v5776 = vadd.f32 %v5744, %v5760
        %v5777 = vadd.f32 %v5745, %v5761
        %v5778 = vadd.f32 %v5746, %v5762
        %v5779 = vadd.f32 %v5747, %v5763
        %v5780 = vadd.f32 %v5748, %v5764
        %v5781 = vadd.f32 %v5749, %v5765
        %v5782 = vadd.f32 %v5750, %v5766
        %v5783 = vadd.f32 %v5751, %v5767
        %v5784 = vadd.f32 %v5752, %v5768
        %v5785 = vadd.f32 %v5753, %v5769
        %v5786 = vadd.f32 %v5754, %v5770
        %v5787 = vadd.f32 %v5755, %v5771
        %v5788 = vadd.f32 %v5756, %v5772
        %v5789 = vadd.f32 %v5757, %v5773
        %v5790 = vadd.f32 %v5758, %v5774
        %v5791 = vadd.f32 %v5759, %v5775
        %5792 = vadd.xlane.f32.xlu0 %v5776
        %v5793 = vpop.xlane.xlu0 %5792
        %5794 = vadd.xlane.f32.xlu0 %v5777
        %v5795 = vpop.xlane.xlu0 %5794
        %5796 = vadd.xlane.f32.xlu0 %v5778
        %v5797 = vpop.xlane.xlu0 %5796
        %5798 = vadd.xlane.f32.xlu0 %v5779
        %v5799 = vpop.xlane.xlu0 %5798
        %5800 = vadd.xlane.f32.xlu0 %v5780
        %v5801 = vpop.xlane.xlu0 %5800
        %5802 = vadd.xlane.f32.xlu0 %v5781
        %v5803 = vpop.xlane.xlu0 %5802
        %5804 = vadd.xlane.f32.xlu0 %v5782
        %v5805 = vpop.xlane.xlu0 %5804
        %5806 = vadd.xlane.f32.xlu0 %v5783
        %v5807 = vpop.xlane.xlu0 %5806
        %5808 = vadd.xlane.f32.xlu0 %v5784
        %v5809 = vpop.xlane.xlu0 %5808
        %5810 = vadd.xlane.f32.xlu0 %v5785
        %v5811 = vpop.xlane.xlu0 %5810
        %5812 = vadd.xlane.f32.xlu0 %v5786
        %v5813 = vpop.xlane.xlu0 %5812
        %5814 = vadd.xlane.f32.xlu0 %v5787
        %v5815 = vpop.xlane.xlu0 %5814
        %5816 = vadd.xlane.f32.xlu0 %v5788
        %v5817 = vpop.xlane.xlu0 %5816
        %5818 = vadd.xlane.f32.xlu0 %v5789
        %v5819 = vpop.xlane.xlu0 %5818
        %5820 = vadd.xlane.f32.xlu0 %v5790
        %v5821 = vpop.xlane.xlu0 %5820
        %5822 = vadd.xlane.f32.xlu0 %v5791
        %v5823 = vpop.xlane.xlu0 %5822
        %v5824 = vadd.f32 %v5793, %v5809
        %v5825 = vadd.f32 %v5795, %v5811
        %v5826 = vadd.f32 %v5797, %v5813
        %v5827 = vadd.f32 %v5799, %v5815
        %v5828 = vadd.f32 %v5801, %v5817
        %v5829 = vadd.f32 %v5803, %v5819
        %v5830 = vadd.f32 %v5805, %v5821
        %v5831 = vadd.f32 %v5807, %v5823
        %v5832 = vadd.f32 %v5824, %v5828
        %v5833 = vadd.f32 %v5825, %v5829
        %v5834 = vadd.f32 %v5826, %v5830
        %v5835 = vadd.f32 %v5827, %v5831
        %v5836 = vadd.f32 %v5832, %v5834
        %v5837 = vadd.f32 %v5833, %v5835
        %v5838 = vadd.f32 %v5836, %v5837
        %v5839 = vadd.f32 %v5838, %v5580
        %5841 = vrot.lane.b32.xlu0 %v5710, 127
        %v5842 = vpop.permute.xlu0 %5841
        %v5844 = vmax.f32 %v5581, %v5842
        %5846 = vrot.lane.b32.xlu0 %v5839, 126
        %v5847 = vpop.permute.xlu0 %5846
        %v5849 = vmax.f32 %v5844, %v5847
        %v5850 = vsub.f32 %v5581, %v5849
        %v5851 = vmul.f32 %v5850, 1.442695
        %v5852 = vpow.pop %v5851
        %5854 = vrot.lane.b32.xlu0 %v5849, 1
        %v5855 = vpop.permute.xlu0 %5854
        %v5857 = vsub.f32 %v5710, %v5855
        %v5858 = vmul.f32 %v5857, 1.442695
        %v5859 = vpow.pop %v5858
        %5860 = vrot.lane.b32.xlu0 %v5849, 2
        %v5861 = vpop.permute.xlu0 %5860
        %v5863 = vsub.f32 %v5839, %v5861
        %v5864 = vmul.f32 %v5863, 1.442695
        %v5865 = vpow.pop %v5864
        %5867 = vrot.lane.b32.xlu0 %v5859, 127
        %v5868 = vpop.permute.xlu0 %5867
        %v5870 = vadd.f32 %v5852, %v5868
        %5872 = vrot.lane.b32.xlu0 %v5865, 126
        %v5873 = vpop.permute.xlu0 %5872
        %v5875 = vadd.f32 %v5870, %v5873
        %v5876 = vrcp.pop %v5875
        %v5877 = vmul.f32 %v5852, %v5876
        %5879 = vrot.lane.b32.xlu0 %v5877, 88
        %v5880 = vpop.permute.xlu0 %5879
        %vm5882 = vcmask 7168
        %5883 = vst.msk [vmem:[%s266] sm:$0xff] %vm5882, %v5880
        %5885 = vrot.lane.b32.xlu0 %v5875, 1
        %v5886 = vpop.permute.xlu0 %5885
        %v5888 = vrcp.pop %v5886
        %v5889 = vmul.f32 %v5859, %v5888
        %5891 = vrot.lane.b32.xlu0 %v5889, 88
        %v5892 = vpop.permute.xlu0 %5891
        %vm5894 = vcmask 15368
        %5895 = vst.msk [vmem:[%s266] sm:$0xff] %vm5894, %v5892
        %5896 = vrot.lane.b32.xlu0 %v5875, 2
        %v5897 = vpop.permute.xlu0 %5896
        %v5899 = vrcp.pop %v5897
        %v5900 = vmul.f32 %v5865, %v5899
        %5902 = vrot.lane.b32.xlu0 %v5900, 88
        %v5903 = vpop.permute.xlu0 %5902
        %vm5905 = vcmask 23568
        %5906 = vst.msk [vmem:[%s266] sm:$0xff] %vm5905, %v5903
        %p5907 = scmp.lt.s32.totalorder %s18, 3
        %s5908 = scalar_select %p5907, %s18, 3
        %s5909 = smul.addr %s5908, 8
        %s5910 = scalar_lea.vmem %s6, %s5909
        // Predicated region
        $region49: #{eegnet_forward.1} parent=43 // pred_check
          %p5911 = pneg %p167
        $region50: #{eegnet_forward.1} parent=43 // pred_check_branch
          %5913 = sbr.rel (%p5911) target = $region52
        $region51: #{eegnet_forward.1} parent=43 // pred_region
          _
        $region52: #{eegnet_forward.1} parent=43 // pred_fallthru
          _
      $region44: #{eegnet_forward.1} parent=5 // pred_fallthru
        _
      %p5914 = scmp.le.s32.totalorder 2, %s13
      // Predicated region
      $region53: #{eegnet_forward.1} parent=5 // pred_check
        %p5915 = pneg %p5914
      $region54: #{eegnet_forward.1} parent=5 // pred_check_branch
        %5917 = sbr.rel (%p5915) target = $region56
      $region55: #{eegnet_forward.1} parent=5 // pred_region
        %s5918 = ssub.s32 %s13, 2
        // Predicated region
        $region57: #{eegnet_forward.1} parent=55 // pred_check
          %p5919 = pneg %p173
        $region58: #{eegnet_forward.1} parent=55 // pred_check_branch
          %5921 = sbr.rel (%p5919) target = $region60
        $region59: #{eegnet_forward.1} parent=55 // pred_region
          %p5922 = scmp.lt.s32.totalorder %s19, 3
          %s5923 = scalar_select %p5922, %s19, 3
          %s5924 = smul.addr %s5923, 8
          %s5925 = scalar_lea.vmem %s6, %s5924
        $region60: #{eegnet_forward.1} parent=55 // pred_fallthru
          _
      $region56: #{eegnet_forward.1} parent=5 // pred_fallthru
        _
    $region6: #{eegnet_forward.1} parent=1 // loop_footer
      %s17 = sadd.s32 1, %s13
    $region7: #{eegnet_forward.1} parent=1 // loop_footer_branch
      %12 = sbr.rel target = $region3
    $region8: #{eegnet_forward.1} parent=1 // loop_exit
      _
    %5926 = vsyncpa [#allocation3], 1
    %s5927 = scalar_lea.sflag [#allocation3], 1
    %5928 = vsyncpa %s5927, 1

</llo_original>
